<compile_context>
chip_gen: v6e
topology: v6e:2x2x1
jax: 0.10.0
libtpu: 0.0.40
codegen_flags: <defaults>
</compile_context>

<pallas_src>
import jax
import jax.numpy as jnp
from jax import lax
from jax.experimental import pallas as pl
from jax.experimental.pallas import tpu as pltpu

LANE = 128     # TPU vreg lane width
SUBLANE = 8    # TPU vreg sublane width (f32)


def _round_up(n, m):
    return -(-n // m) * m


def mlp_policy_kernel(x_ref, w1_ref, b1_ref, w2_ref, b2_ref, w3_ref, b3_ref, o_ref):
    # Fused Linear->ReLU->Linear->ReLU->Linear on one batch tile.
    # MXU matmuls accumulate in f32; bias add + ReLU run in f32 on the VPU.
    w_dt = w1_ref.dtype
    # f32 weights -> exact (multi-pass) MXU matmul; bf16 weights -> native single pass.
    prec = lax.Precision.HIGHEST if w_dt == jnp.float32 else lax.Precision.DEFAULT

    x = x_ref[...].astype(w_dt)   # cast in-kernel: x streams from HBM at its input dtype

    h1 = jnp.dot(x, w1_ref[...], preferred_element_type=jnp.float32,
                 precision=prec) + b1_ref[...]
    h1 = jnp.maximum(h1, 0.0)

    h2 = jnp.dot(h1.astype(w_dt), w2_ref[...], preferred_element_type=jnp.float32,
                 precision=prec) + b2_ref[...]
    h2 = jnp.maximum(h2, 0.0)

    out = jnp.dot(h2.astype(w_dt), w3_ref[...], preferred_element_type=jnp.float32,
                  precision=prec) + b3_ref[...]
    o_ref[...] = out.astype(o_ref.dtype)


def _vmem_limit_bytes(tm, in_dim, hid, out_dim, w_itemsize):
    """Scoped-VMEM request derived from tile + resident-weight footprint (with headroom)."""
    lane = lambda d: _round_up(d, LANE)
    sub = lambda d: _round_up(d, SUBLANE)
    f32 = 4
    x_tiles = 2 * sub(tm) * lane(in_dim) * f32            # double-buffered x tile
    o_tiles = 2 * sub(tm) * lane(out_dim) * f32            # double-buffered out tile
    h_tmp = 2 * sub(tm) * lane(hid) * f32                  # h1 / h2 f32 intermediates
    weights = 2 * (sub(in_dim) * lane(hid)                 # conservative: 2 buffers
                   + sub(hid) * lane(hid)
                   + sub(hid) * lane(out_dim)) * w_itemsize
    biases = 2 * SUBLANE * (2 * lane(hid) + lane(out_dim)) * f32
    est = 2 * (x_tiles + o_tiles + h_tmp + weights + biases)   # 2x headroom
    return max(32 * 1024 * 1024, min(int(est), 64 * 1024 * 1024))


def prepare_params(params, *, use_bf16=False):
    """One-time parameter prep (dtype cast + bias reshape).

    Call once and reuse: casting/padding inside the per-step forward would re-read
    and re-write every weight byte per call.
    """
    w_dt = jnp.bfloat16 if use_bf16 else jnp.float32
    return {
        "w1": jnp.asarray(params["w1"], w_dt),
        "w2": jnp.asarray(params["w2"], w_dt),
        "w3": jnp.asarray(params["w3"], w_dt),
        # Biases stay f32: they are added after the f32-accumulated dot.
        "b1": jnp.asarray(params["b1"], jnp.float32).reshape(1, -1),
        "b2": jnp.asarray(params["b2"], jnp.float32).reshape(1, -1),
        "b3": jnp.asarray(params["b3"], jnp.float32).reshape(1, -1),
    }


def mlp_policy_forward(x, prepared, *, tm=4096, single_buffer_weights=True):
    """x: [B, input_dim] float32. prepared: output of prepare_params()."""
    w1, b1 = prepared["w1"], prepared["b1"]
    w2, b2 = prepared["w2"], prepared["b2"]
    w3, b3 = prepared["w3"], prepared["b3"]

    B, in_dim = x.shape
    hid = w1.shape[1]
    out_dim = w3.shape[1]

    # Batch tile: large (budget-driven) default, capped at ceil(B/2) so v7x's two
    # TensorCores both get grid steps for moderate batches. Small batches collapse
    # to one full-batch block (a block equal to the full dim is always legal).
    TM = min(tm, _round_up(pl.cdiv(B, 2), SUBLANE))
    if TM >= B:
        TM = B
    grid = (pl.cdiv(B, TM),)

    vmem_limit = _vmem_limit_bytes(TM, in_dim, hid, out_dim, w1.dtype.itemsize)

    bytes_accessed = (
        int(x.size) * x.dtype.itemsize
        + sum(int(a.size) * a.dtype.itemsize for a in (w1, b1, w2, b2, w3, b3))
        + B * out_dim * 4
    )
    cost = pl.CostEstimate(
        flops=2 * B * (in_dim * hid + hid * hid + hid * out_dim),
        transcendentals=0,
        bytes_accessed=int(bytes_accessed),
    )

    def call(single_buffer):
        def resident(shape):
            # Constant index_map -> weights fetched once, VMEM-resident across steps.
            if single_buffer:
                return pl.BlockSpec(shape, lambda i: (0, 0),
                                    pipeline_mode=pl.Buffered(buffer_count=1))
            return pl.BlockSpec(shape, lambda i: (0, 0))

        return pl.pallas_call(
            mlp_policy_kernel,
            out_shape=jax.ShapeDtypeStruct((B, out_dim), jnp.float32),
            grid=grid,
            in_specs=[
                pl.BlockSpec((TM, in_dim), lambda i: (i, 0)),   # x: batch-tiled, unpadded
                resident((in_dim, hid)), resident((1, hid)),
                resident((hid, hid)), resident((1, hid)),
                resident((hid, out_dim)), resident((1, out_dim)),
            ],
            out_specs=pl.BlockSpec((TM, out_dim), lambda i: (i, 0)),
            compiler_params=pltpu.CompilerParams(
                dimension_semantics=("parallel",),   # v7x: shard batch tiles across both TCs
                vmem_limit_bytes=vmem_limit,
            ),
            cost_estimate=cost,
        )(x, w1, b1, w2, b2, w3, b3)

    if single_buffer_weights:
        try:
            return call(True)
        except Exception:
            # pipeline_mode / pl.Buffered(1) unsupported on this jax build:
            # fall back to default double-buffered resident weights.
            pass
    return call(False)


def init_params(key, input_dim, hidden_dim, output_dim):
    """Deterministic PyTorch-Linear-style init (uniform(-1/sqrt(fan_in), 1/sqrt(fan_in)))."""
    ks = jax.random.split(key, 6)

    def linear(kw, kb, fan_in, fan_out):
        bound = 1.0 / jnp.sqrt(fan_in)
        w = jax.random.uniform(kw, (fan_in, fan_out), jnp.float32, -bound, bound)
        b = jax.random.uniform(kb, (1, fan_out), jnp.float32, -bound, bound)
        return w, b

    w1, b1 = linear(ks[0], ks[1], input_dim, hidden_dim)
    w2, b2 = linear(ks[2], ks[3], hidden_dim, hidden_dim)
    w3, b3 = linear(ks[4], ks[5], hidden_dim, output_dim)
    return {"w1": w1, "b1": b1, "w2": w2, "b2": b2, "w3": w3, "b3": b3}


def reference_forward(x, p):
    dot = lambda a, b: jnp.dot(a, b, precision=lax.Precision.HIGHEST)
    h1 = jnp.maximum(dot(x, p["w1"]) + p["b1"], 0.0)
    h2 = jnp.maximum(dot(h1, p["w2"]) + p["b2"], 0.0)
    return dot(h2, p["w3"]) + p["b3"]


if __name__ == "__main__":
    # Small shapes consistent with the module: batch=2, input=16, hidden=32, output=8.
    # (At these sizes the call is launch-latency bound by construction; the kernel is
    #  written to scale with B via the batch grid and VMEM-resident weights.)
    batch, input_dim, hidden_dim, output_dim = 2, 16, 32, 8

    key = jax.random.PRNGKey(0)
    kx, kp = jax.random.split(key)
    x = jax.random.normal(kx, (batch, input_dim), jnp.float32)
    params = init_params(kp, input_dim, hidden_dim, output_dim)
    ref = reference_forward(x, params)

    # f32 path: matches reference at tight tolerance.
    prep = prepare_params(params)                                  # one-time weight prep
    out = jax.block_until_ready(mlp_policy_forward(x, prep))
    assert out.shape == (batch, output_dim)
    assert jnp.allclose(out, ref, atol=1e-5, rtol=1e-5), "f32 path mismatch vs reference"

    # bf16 weight path (MXU-native on v5e/v6e/v7x; f32 accumulation) — looser tolerance.
    prep_bf16 = prepare_params(params, use_bf16=True)
    out_bf16 = jax.block_until_ready(mlp_policy_forward(x, prep_bf16))
    assert jnp.allclose(out_bf16, ref, atol=3e-2, rtol=3e-2), "bf16 path diverged"

    print("KERNEL_OK")
</pallas_src>

<mosaic_0001>
module attributes {stable_mosaic.version = 11 : i64} {
  func.func @mlp_policy_kernel(%arg0: i32, %arg1: memref<2x16xf32, #tpu.memory_space<vmem>>, %arg2: memref<16x32xf32, #tpu.memory_space<vmem>>, %arg3: memref<1x32xf32, #tpu.memory_space<vmem>>, %arg4: memref<32x32xf32, #tpu.memory_space<vmem>>, %arg5: memref<1x32xf32, #tpu.memory_space<vmem>>, %arg6: memref<32x8xf32, #tpu.memory_space<vmem>>, %arg7: memref<1x8xf32, #tpu.memory_space<vmem>>, %arg8: memref<2x8xf32, #tpu.memory_space<vmem>>) attributes {dimension_semantics = [#tpu.dimension_semantics<parallel>], iteration_bounds = array<i64: 1>, scalar_prefetch = 0 : i64, scratch_operands = 0 : i64, tpu.core_type = #tpu.core_type<tc>, window_params = [{transform_indices = @transform_0, window_bounds = array<i64: 2, 16>}, {pipeline_mode = #tpu.pipeline_mode<synchronous>, transform_indices = @transform_1, window_bounds = array<i64: 16, 32>}, {pipeline_mode = #tpu.pipeline_mode<synchronous>, transform_indices = @transform_2, window_bounds = array<i64: 1, 32>}, {pipeline_mode = #tpu.pipeline_mode<synchronous>, transform_indices = @transform_3, window_bounds = array<i64: 32, 32>}, {pipeline_mode = #tpu.pipeline_mode<synchronous>, transform_indices = @transform_4, window_bounds = array<i64: 1, 32>}, {pipeline_mode = #tpu.pipeline_mode<synchronous>, transform_indices = @transform_5, window_bounds = array<i64: 32, 8>}, {pipeline_mode = #tpu.pipeline_mode<synchronous>, transform_indices = @transform_6, window_bounds = array<i64: 1, 8>}, {transform_indices = @transform_7, window_bounds = array<i64: 2, 8>}]} {
    %c0 = arith.constant 0 : index
    %c0_0 = arith.constant 0 : index
    %0 = vector.load %arg1[%c0, %c0_0] : memref<2x16xf32, #tpu.memory_space<vmem>>, vector<2x16xf32>
    %c0_1 = arith.constant 0 : index
    %c0_2 = arith.constant 0 : index
    %1 = vector.load %arg2[%c0_1, %c0_2] : memref<16x32xf32, #tpu.memory_space<vmem>>, vector<16x32xf32>
    %cst = arith.constant dense<0.000000e+00> : vector<2x32xf32>
    %2 = tpu.matmul %0, %1, %cst {dimension_numbers = #tpu.dot_dimension_numbers<[1], [0], [0], [1], [0, 0, 1, 1], [], []>, precision = #tpu.contract_precision<fp32>} : vector<2x16xf32>, vector<16x32xf32>, vector<2x32xf32> -> vector<2x32xf32>
    %c0_3 = arith.constant 0 : index
    %c0_4 = arith.constant 0 : index
    %3 = vector.load %arg3[%c0_3, %c0_4] : memref<1x32xf32, #tpu.memory_space<vmem>>, vector<1x32xf32>
    %4 = vector.broadcast %3 : vector<1x32xf32> to vector<2x32xf32>
    %5 = arith.addf %2, %4 : vector<2x32xf32>
    %cst_5 = arith.constant 0.000000e+00 : f32
    %6 = vector.broadcast %cst_5 : f32 to vector<2x32xf32>
    %7 = arith.maximumf %5, %6 : vector<2x32xf32>
    %c0_6 = arith.constant 0 : index
    %c0_7 = arith.constant 0 : index
    %8 = vector.load %arg4[%c0_6, %c0_7] : memref<32x32xf32, #tpu.memory_space<vmem>>, vector<32x32xf32>
    %cst_8 = arith.constant dense<0.000000e+00> : vector<2x32xf32>
    %9 = tpu.matmul %7, %8, %cst_8 {dimension_numbers = #tpu.dot_dimension_numbers<[1], [0], [0], [1], [0, 0, 1, 1], [], []>, precision = #tpu.contract_precision<fp32>} : vector<2x32xf32>, vector<32x32xf32>, vector<2x32xf32> -> vector<2x32xf32>
    %c0_9 = arith.constant 0 : index
    %c0_10 = arith.constant 0 : index
    %10 = vector.load %arg5[%c0_9, %c0_10] : memref<1x32xf32, #tpu.memory_space<vmem>>, vector<1x32xf32>
    %11 = vector.broadcast %10 : vector<1x32xf32> to vector<2x32xf32>
    %12 = arith.addf %9, %11 : vector<2x32xf32>
    %cst_11 = arith.constant 0.000000e+00 : f32
    %13 = vector.broadcast %cst_11 : f32 to vector<2x32xf32>
    %14 = arith.maximumf %12, %13 : vector<2x32xf32>
    %c0_12 = arith.constant 0 : index
    %c0_13 = arith.constant 0 : index
    %15 = vector.load %arg6[%c0_12, %c0_13] : memref<32x8xf32, #tpu.memory_space<vmem>>, vector<32x8xf32>
    %cst_14 = arith.constant dense<0.000000e+00> : vector<2x8xf32>
    %16 = tpu.matmul %14, %15, %cst_14 {dimension_numbers = #tpu.dot_dimension_numbers<[1], [0], [0], [1], [0, 0, 1, 1], [], []>, precision = #tpu.contract_precision<fp32>} : vector<2x32xf32>, vector<32x8xf32>, vector<2x8xf32> -> vector<2x8xf32>
    %c0_15 = arith.constant 0 : index
    %c0_16 = arith.constant 0 : index
    %17 = vector.load %arg7[%c0_15, %c0_16] : memref<1x8xf32, #tpu.memory_space<vmem>>, vector<1x8xf32>
    %18 = vector.broadcast %17 : vector<1x8xf32> to vector<2x8xf32>
    %19 = arith.addf %16, %18 : vector<2x8xf32>
    %c0_17 = arith.constant 0 : index
    %c0_18 = arith.constant 0 : index
    %20 = vector.load %arg8[%c0_17, %c0_18] : memref<2x8xf32, #tpu.memory_space<vmem>>, vector<2x8xf32>
    tpu.vector_store %arg8[%c0_17, %c0_18], %19 {strides = array<i32>} : memref<2x8xf32, #tpu.memory_space<vmem>>, vector<2x8xf32>,
    return
  }
  func.func @transform_0(%arg0: i32) -> (i32, i32) {
    %c0_i32 = arith.constant 0 : i32
    %c0_i32_0 = arith.constant 0 : i32
    return %arg0, %c0_i32 : i32, i32
  }
  func.func @transform_1(%arg0: i32) -> (i32, i32) {
    %c0_i32 = arith.constant 0 : i32
    %c0_i32_0 = arith.constant 0 : i32
    %c0_i32_1 = arith.constant 0 : i32
    return %c0_i32, %c0_i32_0 : i32, i32
  }
  func.func @transform_2(%arg0: i32) -> (i32, i32) {
    %c0_i32 = arith.constant 0 : i32
    %c0_i32_0 = arith.constant 0 : i32
    %c0_i32_1 = arith.constant 0 : i32
    return %c0_i32, %c0_i32_0 : i32, i32
  }
  func.func @transform_3(%arg0: i32) -> (i32, i32) {
    %c0_i32 = arith.constant 0 : i32
    %c0_i32_0 = arith.constant 0 : i32
    %c0_i32_1 = arith.constant 0 : i32
    return %c0_i32, %c0_i32_0 : i32, i32
  }
  func.func @transform_4(%arg0: i32) -> (i32, i32) {
    %c0_i32 = arith.constant 0 : i32
    %c0_i32_0 = arith.constant 0 : i32
    %c0_i32_1 = arith.constant 0 : i32
    return %c0_i32, %c0_i32_0 : i32, i32
  }
  func.func @transform_5(%arg0: i32) -> (i32, i32) {
    %c0_i32 = arith.constant 0 : i32
    %c0_i32_0 = arith.constant 0 : i32
    %c0_i32_1 = arith.constant 0 : i32
    return %c0_i32, %c0_i32_0 : i32, i32
  }
  func.func @transform_6(%arg0: i32) -> (i32, i32) {
    %c0_i32 = arith.constant 0 : i32
    %c0_i32_0 = arith.constant 0 : i32
    %c0_i32_1 = arith.constant 0 : i32
    return %c0_i32, %c0_i32_0 : i32, i32
  }
  func.func @transform_7(%arg0: i32) -> (i32, i32) {
    %c0_i32 = arith.constant 0 : i32
    %c0_i32_0 = arith.constant 0 : i32
    return %arg0, %c0_i32 : i32, i32
  }
}

module attributes {stable_mosaic.version = 11 : i64} {
  func.func @mlp_policy_kernel(%arg0: i32, %arg1: memref<2x16xf32, #tpu.memory_space<vmem>>, %arg2: memref<16x32xf32, #tpu.memory_space<vmem>>, %arg3: memref<1x32xf32, #tpu.memory_space<vmem>>, %arg4: memref<32x32xf32, #tpu.memory_space<vmem>>, %arg5: memref<1x32xf32, #tpu.memory_space<vmem>>, %arg6: memref<32x8xf32, #tpu.memory_space<vmem>>, %arg7: memref<1x8xf32, #tpu.memory_space<vmem>>, %arg8: memref<2x8xf32, #tpu.memory_space<vmem>>) attributes {dimension_semantics = [#tpu.dimension_semantics<parallel>], iteration_bounds = array<i64: 1>, scalar_prefetch = 0 : i64, scratch_operands = 0 : i64, tpu.core_type = #tpu.core_type<tc>, window_params = [{transform_indices = @transform_0, window_bounds = array<i64: 2, 16>}, {pipeline_mode = #tpu.pipeline_mode<synchronous>, transform_indices = @transform_1, window_bounds = array<i64: 16, 32>}, {pipeline_mode = #tpu.pipeline_mode<synchronous>, transform_indices = @transform_2, window_bounds = array<i64: 1, 32>}, {pipeline_mode = #tpu.pipeline_mode<synchronous>, transform_indices = @transform_3, window_bounds = array<i64: 32, 32>}, {pipeline_mode = #tpu.pipeline_mode<synchronous>, transform_indices = @transform_4, window_bounds = array<i64: 1, 32>}, {pipeline_mode = #tpu.pipeline_mode<synchronous>, transform_indices = @transform_5, window_bounds = array<i64: 32, 8>}, {pipeline_mode = #tpu.pipeline_mode<synchronous>, transform_indices = @transform_6, window_bounds = array<i64: 1, 8>}, {transform_indices = @transform_7, window_bounds = array<i64: 2, 8>}]} {
    %c0 = arith.constant 0 : index
    %c0_0 = arith.constant 0 : index
    %0 = vector.load %arg1[%c0, %c0_0] : memref<2x16xf32, #tpu.memory_space<vmem>>, vector<2x16xf32>
    %c0_1 = arith.constant 0 : index
    %c0_2 = arith.constant 0 : index
    %1 = vector.load %arg2[%c0_1, %c0_2] : memref<16x32xf32, #tpu.memory_space<vmem>>, vector<16x32xf32>
    %cst = arith.constant dense<0.000000e+00> : vector<2x32xf32>
    %2 = tpu.matmul %0, %1, %cst {dimension_numbers = #tpu.dot_dimension_numbers<[1], [0], [0], [1], [0, 0, 1, 1], [], []>, precision = #tpu.contract_precision<fp32>} : vector<2x16xf32>, vector<16x32xf32>, vector<2x32xf32> -> vector<2x32xf32>
    %c0_3 = arith.constant 0 : index
    %c0_4 = arith.constant 0 : index
    %3 = vector.load %arg3[%c0_3, %c0_4] : memref<1x32xf32, #tpu.memory_space<vmem>>, vector<1x32xf32>
    %4 = vector.broadcast %3 : vector<1x32xf32> to vector<2x32xf32>
    %5 = arith.addf %2, %4 : vector<2x32xf32>
    %cst_5 = arith.constant 0.000000e+00 : f32
    %6 = vector.broadcast %cst_5 : f32 to vector<2x32xf32>
    %7 = arith.maximumf %5, %6 : vector<2x32xf32>
    %c0_6 = arith.constant 0 : index
    %c0_7 = arith.constant 0 : index
    %8 = vector.load %arg4[%c0_6, %c0_7] : memref<32x32xf32, #tpu.memory_space<vmem>>, vector<32x32xf32>
    %cst_8 = arith.constant dense<0.000000e+00> : vector<2x32xf32>
    %9 = tpu.matmul %7, %8, %cst_8 {dimension_numbers = #tpu.dot_dimension_numbers<[1], [0], [0], [1], [0, 0, 1, 1], [], []>, precision = #tpu.contract_precision<fp32>} : vector<2x32xf32>, vector<32x32xf32>, vector<2x32xf32> -> vector<2x32xf32>
    %c0_9 = arith.constant 0 : index
    %c0_10 = arith.constant 0 : index
    %10 = vector.load %arg5[%c0_9, %c0_10] : memref<1x32xf32, #tpu.memory_space<vmem>>, vector<1x32xf32>
    %11 = vector.broadcast %10 : vector<1x32xf32> to vector<2x32xf32>
    %12 = arith.addf %9, %11 : vector<2x32xf32>
    %cst_11 = arith.constant 0.000000e+00 : f32
    %13 = vector.broadcast %cst_11 : f32 to vector<2x32xf32>
    %14 = arith.maximumf %12, %13 : vector<2x32xf32>
    %c0_12 = arith.constant 0 : index
    %c0_13 = arith.constant 0 : index
    %15 = vector.load %arg6[%c0_12, %c0_13] : memref<32x8xf32, #tpu.memory_space<vmem>>, vector<32x8xf32>
    %cst_14 = arith.constant dense<0.000000e+00> : vector<2x8xf32>
    %16 = tpu.matmul %14, %15, %cst_14 {dimension_numbers = #tpu.dot_dimension_numbers<[1], [0], [0], [1], [0, 0, 1, 1], [], []>, precision = #tpu.contract_precision<fp32>} : vector<2x32xf32>, vector<32x8xf32>, vector<2x8xf32> -> vector<2x8xf32>
    %c0_15 = arith.constant 0 : index
    %c0_16 = arith.constant 0 : index
    %17 = vector.load %arg7[%c0_15, %c0_16] : memref<1x8xf32, #tpu.memory_space<vmem>>, vector<1x8xf32>
    %18 = vector.broadcast %17 : vector<1x8xf32> to vector<2x8xf32>
    %19 = arith.addf %16, %18 : vector<2x8xf32>
    %c0_17 = arith.constant 0 : index
    %c0_18 = arith.constant 0 : index
    %20 = vector.load %arg8[%c0_17, %c0_18] : memref<2x8xf32, #tpu.memory_space<vmem>>, vector<2x8xf32>
    tpu.vector_store %arg8[%c0_17, %c0_18], %19 {strides = array<i32>} : memref<2x8xf32, #tpu.memory_space<vmem>>, vector<2x8xf32>,
    return
  }
  func.func @transform_0(%arg0: i32) -> (i32, i32) {
    %c0_i32 = arith.constant 0 : i32
    %c0_i32_0 = arith.constant 0 : i32
    return %arg0, %c0_i32 : i32, i32
  }
  func.func @transform_1(%arg0: i32) -> (i32, i32) {
    %c0_i32 = arith.constant 0 : i32
    %c0_i32_0 = arith.constant 0 : i32
    %c0_i32_1 = arith.constant 0 : i32
    return %c0_i32, %c0_i32_0 : i32, i32
  }
  func.func @transform_2(%arg0: i32) -> (i32, i32) {
    %c0_i32 = arith.constant 0 : i32
    %c0_i32_0 = arith.constant 0 : i32
    %c0_i32_1 = arith.constant 0 : i32
    return %c0_i32, %c0_i32_0 : i32, i32
  }
  func.func @transform_3(%arg0: i32) -> (i32, i32) {
    %c0_i32 = arith.constant 0 : i32
    %c0_i32_0 = arith.constant 0 : i32
    %c0_i32_1 = arith.constant 0 : i32
    return %c0_i32, %c0_i32_0 : i32, i32
  }
  func.func @transform_4(%arg0: i32) -> (i32, i32) {
    %c0_i32 = arith.constant 0 : i32
    %c0_i32_0 = arith.constant 0 : i32
    %c0_i32_1 = arith.constant 0 : i32
    return %c0_i32, %c0_i32_0 : i32, i32
  }
  func.func @transform_5(%arg0: i32) -> (i32, i32) {
    %c0_i32 = arith.constant 0 : i32
    %c0_i32_0 = arith.constant 0 : i32
    %c0_i32_1 = arith.constant 0 : i32
    return %c0_i32, %c0_i32_0 : i32, i32
  }
  func.func @transform_6(%arg0: i32) -> (i32, i32) {
    %c0_i32 = arith.constant 0 : i32
    %c0_i32_0 = arith.constant 0 : i32
    %c0_i32_1 = arith.constant 0 : i32
    return %c0_i32, %c0_i32_0 : i32, i32
  }
  func.func @transform_7(%arg0: i32) -> (i32, i32) {
    %c0_i32 = arith.constant 0 : i32
    %c0_i32_0 = arith.constant 0 : i32
    return %arg0, %c0_i32 : i32, i32
  }
}

</mosaic_0001>

<llo_original>
// kernel: tpu_custom_call.1
$region0: #{tpu_custom_call.1}
  #allocation0 [shape = 'u32[]', space=smem, size = 0x4, offset = 0x4, fixed_abs, tag = 'smem constant byte address 0x4 - core index']
  #allocation1 [shape = 'u32[144,128]{1,0:T(1,128)}', space=vmem, size = 0x12000, scoped, tag = 'internal scratch']
  %s0 = inlined_call_operand.vmem [shape: f32[2,16], index: 0, kind: input, shape index: {}]
  %s1 = inlined_call_operand.hbm [shape: f32[16,32], index: 1, kind: input, shape index: {}]
  %s2 = inlined_call_operand.vmem [shape: f32[1,32], index: 2, kind: input, shape index: {}]
  %s3 = inlined_call_operand.vmem [shape: f32[32,32], index: 3, kind: input, shape index: {}]
  %s4 = inlined_call_operand.vmem [shape: f32[1,32], index: 4, kind: input, shape index: {}]
  %s5 = inlined_call_operand.vmem [shape: f32[32,8], index: 5, kind: input, shape index: {}]
  %s6 = inlined_call_operand.vmem [shape: f32[1,8], index: 6, kind: input, shape index: {}]
  %s7 = inlined_call_operand.hbm [shape: f32[2,8], index: 7, kind: output, shape index: {}]
  %s8 = sld [smem:[#allocation0]]
  $region42: #{tpu_custom_call.1} parent=0
    _
  %s10 = ssub.s32 1, %s8
  %s11 = scalar_select 0, %s10, %s8
  $region1: #{tpu_custom_call.1} parent=0
    #allocation2 [shape = 'u8[8192]{0}', space=vmem, size = 0x2000, scoped, tag = 'input window, operand 1, single buffered']
    #allocation3 [shape = 's32[1]{0}', space=sflag, size = 0x4, scoped, tag = 'scoped memory for tpu_custom_call.1']
    #allocation4 [shape = 's32[1]{0}', space=sflag, size = 0x4, scoped, tag = 'scoped memory for tpu_custom_call.1']
    #allocation5 [shape = 'u8[1024]{0}', space=vmem, size = 0x400, scoped, tag = 'output window, operand 0, single buffered']
    %12 = vsyncpa [#allocation3], 0
    %13 = vsyncpa [#allocation4], 0
    // Predicated region
    $region2: #{tpu_custom_call.1} parent=1 // pred_check
      _
    $region3: #{tpu_custom_call.1} parent=1 // pred_check_branch
      %15 = sbr.rel (0) target = $region5
    $region4: #{tpu_custom_call.1} parent=1 // pred_region
      _
    $region5: #{tpu_custom_call.1} parent=1 // pred_fallthru
      _
    // Predicated region
    $region6: #{tpu_custom_call.1} parent=1 // pred_check
      _
    $region7: #{tpu_custom_call.1} parent=1 // pred_check_branch
      %17 = sbr.rel (0) target = $region9
    $region8: #{tpu_custom_call.1} parent=1 // pred_region
      %s19 = ssub.s32 256, 256
      %20 = vsyncadd [#allocation3], %s19
      %s21 = sshll.u32 [#allocation2], 4
      %s22 = int_to_ptr.vmem [resolvable:$true] %s21
      %27 = dma.hbm_to_vmem [thread:$0]  %s1, 256, %s22, [#allocation3], 128, 128, 8
    $region9: #{tpu_custom_call.1} parent=1 // pred_fallthru
      _
    // Predicated region
    $region10: #{tpu_custom_call.1} parent=1 // pred_check
      _
    $region11: #{tpu_custom_call.1} parent=1 // pred_check_branch
      %29 = sbr.rel (0) target = $region13
    $region12: #{tpu_custom_call.1} parent=1 // pred_region
      _
    $region13: #{tpu_custom_call.1} parent=1 // pred_fallthru
      _
    // Predicated region
    $region14: #{tpu_custom_call.1} parent=1 // pred_check
      _
    $region15: #{tpu_custom_call.1} parent=1 // pred_check_branch
      %31 = sbr.rel (0) target = $region17
    $region16: #{tpu_custom_call.1} parent=1 // pred_region
      _
    $region17: #{tpu_custom_call.1} parent=1 // pred_fallthru
      _
    // Predicated region
    $region18: #{tpu_custom_call.1} parent=1 // pred_check
      _
    $region19: #{tpu_custom_call.1} parent=1 // pred_check_branch
      %33 = sbr.rel (0) target = $region21
    $region20: #{tpu_custom_call.1} parent=1 // pred_region
      _
    $region21: #{tpu_custom_call.1} parent=1 // pred_fallthru
      _
    // Predicated region
    $region22: #{tpu_custom_call.1} parent=1 // pred_check
      _
    $region23: #{tpu_custom_call.1} parent=1 // pred_check_branch
      %35 = sbr.rel (0) target = $region25
    $region24: #{tpu_custom_call.1} parent=1 // pred_region
      _
    $region25: #{tpu_custom_call.1} parent=1 // pred_fallthru
      _
    // Predicated region
    $region26: #{tpu_custom_call.1} parent=1 // pred_check
      _
    $region27: #{tpu_custom_call.1} parent=1 // pred_check_branch
      %37 = sbr.rel (0) target = $region29
    $region28: #{tpu_custom_call.1} parent=1 // pred_region
      _
    $region29: #{tpu_custom_call.1} parent=1 // pred_fallthru
      _
    // Predicated region
    $region30: #{tpu_custom_call.1} parent=1 // pred_check
      _
    $region31: #{tpu_custom_call.1} parent=1 // pred_check_branch
      %39 = sbr.rel (0) target = $region33
    $region32: #{tpu_custom_call.1} parent=1 // pred_region
      %40 = dma.done [#allocation3], 256
    $region33: #{tpu_custom_call.1} parent=1 // pred_fallthru
      _
    %v41 = vld [vmem:[%s0] sm:$0x3]
    %v42 = vld [vmem:[#allocation2] sm:$0xff]
    %v43 = vld [vmem:[#allocation2 + $0x8] sm:$0xff]
    %v44 = vld [vmem:[%s2] sm:$0x1]
    %v46 = vlaneseq
    %v47 = vshrl.u32 %v46, 7
    %v48 = vsub.s32 0, %v47
    %v49 = vrot.slane %v44, %v48
    %vm51 = vcmask 130048
    %v53 = vsel %vm51, %v41, 0
    %55 = vmatprep.subr.mxu0 0.0
    %56 = vmatpush1.msra.mxu0 0.0
    %57 = vmatprep.subr.mxu0 0.0
    %58 = vmatpush1.msra.mxu0 0.0
    %59 = vmatprep.subr.mxu0 0.0
    %60 = vmatpush1.msra.mxu0 0.0
    %61 = vmatprep.subr.mxu0 0.0
    %62 = vmatpush1.msra.mxu0 0.0
    %63 = vmatprep.subr.mxu0 0.0
    %64 = vmatpush1.msra.mxu0 0.0
    %65 = vmatprep.subr.mxu0 0.0
    %66 = vmatpush1.msra.mxu0 0.0
    %67 = vmatprep.subr.mxu0 0.0
    %68 = vmatpush1.msra.mxu0 0.0
    %69 = vmatprep.subr.mxu0 0.0
    %70 = vmatpush1.msra.mxu0 0.0
    %71 = vmatprep.subr.mxu0 0.0
    %72 = vmatpush1.msra.mxu0 0.0
    %73 = vmatprep.subr.mxu0 0.0
    %74 = vmatpush1.msra.mxu0 0.0
    %75 = vmatprep.subr.mxu0 0.0
    %76 = vmatpush1.msra.mxu0 0.0
    %77 = vmatprep.subr.mxu0 0.0
    %78 = vmatpush1.msra.mxu0 0.0
    %79 = vmatprep.subr.mxu0 0.0
    %80 = vmatpush1.msra.mxu0 0.0
    %81 = vmatprep.subr.mxu0 0.0
    %82 = vmatpush1.msra.mxu0 0.0
    %83 = vmatprep.subr.mxu0 0.0
    %v84 = vand.u32 %v43, 4294901760
    %85 = vmatpush1.msra.mxu0 %v84
    %86 = vmatprep.subr.mxu0 0.0
    %v87 = vand.u32 %v42, 4294901760
    %88 = vmatpush1.msra.mxu0 %v87
    %89 = vmatprep.subr.mxu0 0.0
    %90 = vmatpush2.msra.mxu0 0.0
    %91 = vmatprep.subr.mxu0 0.0
    %92 = vmatpush2.msra.mxu0 0.0
    %93 = vmatprep.subr.mxu0 0.0
    %94 = vmatpush2.msra.mxu0 0.0
    %95 = vmatprep.subr.mxu0 0.0
    %96 = vmatpush2.msra.mxu0 0.0
    %97 = vmatprep.subr.mxu0 0.0
    %98 = vmatpush2.msra.mxu0 0.0
    %99 = vmatprep.subr.mxu0 0.0
    %100 = vmatpush2.msra.mxu0 0.0
    %101 = vmatprep.subr.mxu0 0.0
    %102 = vmatpush2.msra.mxu0 0.0
    %103 = vmatprep.subr.mxu0 0.0
    %104 = vmatpush2.msra.mxu0 0.0
    %105 = vmatprep.subr.mxu0 0.0
    %106 = vmatpush2.msra.mxu0 0.0
    %107 = vmatprep.subr.mxu0 0.0
    %108 = vmatpush2.msra.mxu0 0.0
    %109 = vmatprep.subr.mxu0 0.0
    %110 = vmatpush2.msra.mxu0 0.0
    %111 = vmatprep.subr.mxu0 0.0
    %112 = vmatpush2.msra.mxu0 0.0
    %113 = vmatprep.subr.mxu0 0.0
    %114 = vmatpush2.msra.mxu0 0.0
    %115 = vmatprep.subr.mxu0 0.0
    %116 = vmatpush2.msra.mxu0 0.0
    %117 = vmatprep.subr.mxu0 0.0
    %118 = vmatpush2.msra.mxu0 0.0
    %119 = vmatprep.subr.mxu0 0.0
    %120 = vmatpush2.msra.mxu0 0.0
    %121 = vmatprep.mubr.f32.mxu0 0.0
    %v122 = vand.u32 %v53, 4294901760
    %v123 = vsub.f32 %v53, %v122
    %v124 = vand.u32 %v123, 4294901760
    %v125 = vsub.f32 %v123, %v124
    %v126 = vand.u32 %v125, 4294901760
    %127 = vmatmul.mubr.f32.gmra.mxu0 %v126
    %v128 = vpop.f32.mrf.mxu0
    %v129 = vadd.f32 %v49, %v128
    %v130 = vpop.f32.mrf.mxu0
    %131 = vdwg.mxu0
    %132 = vmatprep.subr.mxu0 0.0
    %133 = vmatpush1.msra.mxu0 0.0
    %134 = vmatprep.subr.mxu0 0.0
    %135 = vmatpush1.msra.mxu0 0.0
    %136 = vmatprep.subr.mxu0 0.0
    %137 = vmatpush1.msra.mxu0 0.0
    %138 = vmatprep.subr.mxu0 0.0
    %139 = vmatpush1.msra.mxu0 0.0
    %140 = vmatprep.subr.mxu0 0.0
    %141 = vmatpush1.msra.mxu0 0.0
    %142 = vmatprep.subr.mxu0 0.0
    %143 = vmatpush1.msra.mxu0 0.0
    %144 = vmatprep.subr.mxu0 0.0
    %145 = vmatpush1.msra.mxu0 0.0
    %146 = vmatprep.subr.mxu0 0.0
    %147 = vmatpush1.msra.mxu0 0.0
    %148 = vmatprep.subr.mxu0 0.0
    %149 = vmatpush1.msra.mxu0 0.0
    %150 = vmatprep.subr.mxu0 0.0
    %151 = vmatpush1.msra.mxu0 0.0
    %152 = vmatprep.subr.mxu0 0.0
    %153 = vmatpush1.msra.mxu0 0.0
    %154 = vmatprep.subr.mxu0 0.0
    %155 = vmatpush1.msra.mxu0 0.0
    %156 = vmatprep.subr.mxu0 0.0
    %157 = vmatpush1.msra.mxu0 0.0
    %158 = vmatprep.subr.mxu0 0.0
    %159 = vmatpush1.msra.mxu0 0.0
    %160 = vmatprep.subr.mxu0 0.0
    %v161 = vand.u32 %v43, 4294901760
    %v162 = vsub.f32 %v43, %v161
    %v163 = vand.u32 %v162, 4294901760
    %v164 = vsub.f32 %v162, %v163
    %v165 = vand.u32 %v164, 4294901760
    %166 = vmatpush1.msra.mxu0 %v165
    %167 = vmatprep.subr.mxu0 0.0
    %v168 = vand.u32 %v42, 4294901760
    %v169 = vsub.f32 %v42, %v168
    %v170 = vand.u32 %v169, 4294901760
    %v171 = vsub.f32 %v169, %v170
    %v172 = vand.u32 %v171, 4294901760
    %173 = vmatpush1.msra.mxu0 %v172
    %174 = vmatprep.subr.mxu0 0.0
    %175 = vmatpush2.msra.mxu0 0.0
    %176 = vmatprep.subr.mxu0 0.0
    %177 = vmatpush2.msra.mxu0 0.0
    %178 = vmatprep.subr.mxu0 0.0
    %179 = vmatpush2.msra.mxu0 0.0
    %180 = vmatprep.subr.mxu0 0.0
    %181 = vmatpush2.msra.mxu0 0.0
    %182 = vmatprep.subr.mxu0 0.0
    %183 = vmatpush2.msra.mxu0 0.0
    %184 = vmatprep.subr.mxu0 0.0
    %185 = vmatpush2.msra.mxu0 0.0
    %186 = vmatprep.subr.mxu0 0.0
    %187 = vmatpush2.msra.mxu0 0.0
    %188 = vmatprep.subr.mxu0 0.0
    %189 = vmatpush2.msra.mxu0 0.0
    %190 = vmatprep.subr.mxu0 0.0
    %191 = vmatpush2.msra.mxu0 0.0
    %192 = vmatprep.subr.mxu0 0.0
    %193 = vmatpush2.msra.mxu0 0.0
    %194 = vmatprep.subr.mxu0 0.0
    %195 = vmatpush2.msra.mxu0 0.0
    %196 = vmatprep.subr.mxu0 0.0
    %197 = vmatpush2.msra.mxu0 0.0
    %198 = vmatprep.subr.mxu0 0.0
    %199 = vmatpush2.msra.mxu0 0.0
    %200 = vmatprep.subr.mxu0 0.0
    %201 = vmatpush2.msra.mxu0 0.0
    %202 = vmatprep.subr.mxu0 0.0
    %203 = vmatpush2.msra.mxu0 0.0
    %204 = vmatprep.subr.mxu0 0.0
    %205 = vmatpush2.msra.mxu0 0.0
    %206 = vmatprep.mubr.f32.mxu0 0.0
    %v207 = vand.u32 %v53, 4294901760
    %208 = vmatmul.mubr.f32.gmra.mxu0 %v207
    %v209 = vpop.f32.mrf.mxu0
    %v210 = vadd.f32 %v129, %v209
    %v211 = vpop.f32.mrf.mxu0
    %212 = vdwg.mxu0
    %213 = vmatprep.subr.mxu0 0.0
    %214 = vmatpush1.msra.mxu0 0.0
    %215 = vmatprep.subr.mxu0 0.0
    %216 = vmatpush1.msra.mxu0 0.0
    %217 = vmatprep.subr.mxu0 0.0
    %218 = vmatpush1.msra.mxu0 0.0
    %219 = vmatprep.subr.mxu0 0.0
    %220 = vmatpush1.msra.mxu0 0.0
    %221 = vmatprep.subr.mxu0 0.0
    %222 = vmatpush1.msra.mxu0 0.0
    %223 = vmatprep.subr.mxu0 0.0
    %224 = vmatpush1.msra.mxu0 0.0
    %225 = vmatprep.subr.mxu0 0.0
    %226 = vmatpush1.msra.mxu0 0.0
    %227 = vmatprep.subr.mxu0 0.0
    %228 = vmatpush1.msra.mxu0 0.0
    %229 = vmatprep.subr.mxu0 0.0
    %230 = vmatpush1.msra.mxu0 0.0
    %231 = vmatprep.subr.mxu0 0.0
    %232 = vmatpush1.msra.mxu0 0.0
    %233 = vmatprep.subr.mxu0 0.0
    %234 = vmatpush1.msra.mxu0 0.0
    %235 = vmatprep.subr.mxu0 0.0
    %236 = vmatpush1.msra.mxu0 0.0
    %237 = vmatprep.subr.mxu0 0.0
    %238 = vmatpush1.msra.mxu0 0.0
    %239 = vmatprep.subr.mxu0 0.0
    %240 = vmatpush1.msra.mxu0 0.0
    %241 = vmatprep.subr.mxu0 0.0
    %v242 = vand.u32 %v43, 4294901760
    %v243 = vsub.f32 %v43, %v242
    %244 = vmatpush1.msra.mxu0 %v243
    %245 = vmatprep.subr.mxu0 0.0
    %v246 = vand.u32 %v42, 4294901760
    %v247 = vsub.f32 %v42, %v246
    %248 = vmatpush1.msra.mxu0 %v247
    %249 = vmatprep.subr.mxu0 0.0
    %250 = vmatpush2.msra.mxu0 0.0
    %251 = vmatprep.subr.mxu0 0.0
    %252 = vmatpush2.msra.mxu0 0.0
    %253 = vmatprep.subr.mxu0 0.0
    %254 = vmatpush2.msra.mxu0 0.0
    %255 = vmatprep.subr.mxu0 0.0
    %256 = vmatpush2.msra.mxu0 0.0
    %257 = vmatprep.subr.mxu0 0.0
    %258 = vmatpush2.msra.mxu0 0.0
    %259 = vmatprep.subr.mxu0 0.0
    %260 = vmatpush2.msra.mxu0 0.0
    %261 = vmatprep.subr.mxu0 0.0
    %262 = vmatpush2.msra.mxu0 0.0
    %263 = vmatprep.subr.mxu0 0.0
    %264 = vmatpush2.msra.mxu0 0.0
    %265 = vmatprep.subr.mxu0 0.0
    %266 = vmatpush2.msra.mxu0 0.0
    %267 = vmatprep.subr.mxu0 0.0
    %268 = vmatpush2.msra.mxu0 0.0
    %269 = vmatprep.subr.mxu0 0.0
    %270 = vmatpush2.msra.mxu0 0.0
    %271 = vmatprep.subr.mxu0 0.0
    %272 = vmatpush2.msra.mxu0 0.0
    %273 = vmatprep.subr.mxu0 0.0
    %274 = vmatpush2.msra.mxu0 0.0
    %275 = vmatprep.subr.mxu0 0.0
    %276 = vmatpush2.msra.mxu0 0.0
    %277 = vmatprep.subr.mxu0 0.0
    %278 = vmatpush2.msra.mxu0 0.0
    %279 = vmatprep.subr.mxu0 0.0
    %280 = vmatpush2.msra.mxu0 0.0
    %281 = vmatprep.mubr.f32.mxu0 0.0
    %v282 = vand.u32 %v53, 4294901760
    %v283 = vsub.f32 %v53, %v282
    %284 = vmatmul.mubr.f32.gmra.mxu0 %v283
    %v285 = vpop.f32.mrf.mxu0
    %v286 = vadd.f32 %v210, %v285
    %v287 = vpop.f32.mrf.mxu0
    %288 = vdwg.mxu0
    %289 = vmatprep.subr.mxu0 0.0
    %290 = vmatpush1.msra.mxu0 0.0
    %291 = vmatprep.subr.mxu0 0.0
    %292 = vmatpush1.msra.mxu0 0.0
    %293 = vmatprep.subr.mxu0 0.0
    %294 = vmatpush1.msra.mxu0 0.0
    %295 = vmatprep.subr.mxu0 0.0
    %296 = vmatpush1.msra.mxu0 0.0
    %297 = vmatprep.subr.mxu0 0.0
    %298 = vmatpush1.msra.mxu0 0.0
    %299 = vmatprep.subr.mxu0 0.0
    %300 = vmatpush1.msra.mxu0 0.0
    %301 = vmatprep.subr.mxu0 0.0
    %302 = vmatpush1.msra.mxu0 0.0
    %303 = vmatprep.subr.mxu0 0.0
    %304 = vmatpush1.msra.mxu0 0.0
    %305 = vmatprep.subr.mxu0 0.0
    %306 = vmatpush1.msra.mxu0 0.0
    %307 = vmatprep.subr.mxu0 0.0
    %308 = vmatpush1.msra.mxu0 0.0
    %309 = vmatprep.subr.mxu0 0.0
    %310 = vmatpush1.msra.mxu0 0.0
    %311 = vmatprep.subr.mxu0 0.0
    %312 = vmatpush1.msra.mxu0 0.0
    %313 = vmatprep.subr.mxu0 0.0
    %314 = vmatpush1.msra.mxu0 0.0
    %315 = vmatprep.subr.mxu0 0.0
    %316 = vmatpush1.msra.mxu0 0.0
    %317 = vmatprep.subr.mxu0 0.0
    %v318 = vand.u32 %v43, 4294901760
    %319 = vmatpush1.msra.mxu0 %v318
    %320 = vmatprep.subr.mxu0 0.0
    %v321 = vand.u32 %v42, 4294901760
    %322 = vmatpush1.msra.mxu0 %v321
    %323 = vmatprep.subr.mxu0 0.0
    %324 = vmatpush2.msra.mxu0 0.0
    %325 = vmatprep.subr.mxu0 0.0
    %326 = vmatpush2.msra.mxu0 0.0
    %327 = vmatprep.subr.mxu0 0.0
    %328 = vmatpush2.msra.mxu0 0.0
    %329 = vmatprep.subr.mxu0 0.0
    %330 = vmatpush2.msra.mxu0 0.0
    %331 = vmatprep.subr.mxu0 0.0
    %332 = vmatpush2.msra.mxu0 0.0
    %333 = vmatprep.subr.mxu0 0.0
    %334 = vmatpush2.msra.mxu0 0.0
    %335 = vmatprep.subr.mxu0 0.0
    %336 = vmatpush2.msra.mxu0 0.0
    %337 = vmatprep.subr.mxu0 0.0
    %338 = vmatpush2.msra.mxu0 0.0
    %339 = vmatprep.subr.mxu0 0.0
    %340 = vmatpush2.msra.mxu0 0.0
    %341 = vmatprep.subr.mxu0 0.0
    %342 = vmatpush2.msra.mxu0 0.0
    %343 = vmatprep.subr.mxu0 0.0
    %344 = vmatpush2.msra.mxu0 0.0
    %345 = vmatprep.subr.mxu0 0.0
    %346 = vmatpush2.msra.mxu0 0.0
    %347 = vmatprep.subr.mxu0 0.0
    %348 = vmatpush2.msra.mxu0 0.0
    %349 = vmatprep.subr.mxu0 0.0
    %350 = vmatpush2.msra.mxu0 0.0
    %351 = vmatprep.subr.mxu0 0.0
    %352 = vmatpush2.msra.mxu0 0.0
    %353 = vmatprep.subr.mxu0 0.0
    %354 = vmatpush2.msra.mxu0 0.0
    %355 = vmatprep.mubr.f32.mxu0 0.0
    %v356 = vand.u32 %v53, 4294901760
    %v357 = vsub.f32 %v53, %v356
    %v358 = vand.u32 %v357, 4294901760
    %359 = vmatmul.mubr.f32.gmra.mxu0 %v358
    %v360 = vpop.f32.mrf.mxu0
    %v361 = vadd.f32 %v286, %v360
    %v362 = vpop.f32.mrf.mxu0
    %363 = vdwg.mxu0
    %364 = vmatprep.subr.mxu0 0.0
    %365 = vmatpush1.msra.mxu0 0.0
    %366 = vmatprep.subr.mxu0 0.0
    %367 = vmatpush1.msra.mxu0 0.0
    %368 = vmatprep.subr.mxu0 0.0
    %369 = vmatpush1.msra.mxu0 0.0
    %370 = vmatprep.subr.mxu0 0.0
    %371 = vmatpush1.msra.mxu0 0.0
    %372 = vmatprep.subr.mxu0 0.0
    %373 = vmatpush1.msra.mxu0 0.0
    %374 = vmatprep.subr.mxu0 0.0
    %375 = vmatpush1.msra.mxu0 0.0
    %376 = vmatprep.subr.mxu0 0.0
    %377 = vmatpush1.msra.mxu0 0.0
    %378 = vmatprep.subr.mxu0 0.0
    %379 = vmatpush1.msra.mxu0 0.0
    %380 = vmatprep.subr.mxu0 0.0
    %381 = vmatpush1.msra.mxu0 0.0
    %382 = vmatprep.subr.mxu0 0.0
    %383 = vmatpush1.msra.mxu0 0.0
    %384 = vmatprep.subr.mxu0 0.0
    %385 = vmatpush1.msra.mxu0 0.0
    %386 = vmatprep.subr.mxu0 0.0
    %387 = vmatpush1.msra.mxu0 0.0
    %388 = vmatprep.subr.mxu0 0.0
    %389 = vmatpush1.msra.mxu0 0.0
    %390 = vmatprep.subr.mxu0 0.0
    %391 = vmatpush1.msra.mxu0 0.0
    %392 = vmatprep.subr.mxu0 0.0
    %v393 = vand.u32 %v43, 4294901760
    %v394 = vsub.f32 %v43, %v393
    %v395 = vand.u32 %v394, 4294901760
    %396 = vmatpush1.msra.mxu0 %v395
    %397 = vmatprep.subr.mxu0 0.0
    %v398 = vand.u32 %v42, 4294901760
    %v399 = vsub.f32 %v42, %v398
    %v400 = vand.u32 %v399, 4294901760
    %401 = vmatpush1.msra.mxu0 %v400
    %402 = vmatprep.subr.mxu0 0.0
    %403 = vmatpush2.msra.mxu0 0.0
    %404 = vmatprep.subr.mxu0 0.0
    %405 = vmatpush2.msra.mxu0 0.0
    %406 = vmatprep.subr.mxu0 0.0
    %407 = vmatpush2.msra.mxu0 0.0
    %408 = vmatprep.subr.mxu0 0.0
    %409 = vmatpush2.msra.mxu0 0.0
    %410 = vmatprep.subr.mxu0 0.0
    %411 = vmatpush2.msra.mxu0 0.0
    %412 = vmatprep.subr.mxu0 0.0
    %413 = vmatpush2.msra.mxu0 0.0
    %414 = vmatprep.subr.mxu0 0.0
    %415 = vmatpush2.msra.mxu0 0.0
    %416 = vmatprep.subr.mxu0 0.0
    %417 = vmatpush2.msra.mxu0 0.0
    %418 = vmatprep.subr.mxu0 0.0
    %419 = vmatpush2.msra.mxu0 0.0
    %420 = vmatprep.subr.mxu0 0.0
    %421 = vmatpush2.msra.mxu0 0.0
    %422 = vmatprep.subr.mxu0 0.0
    %423 = vmatpush2.msra.mxu0 0.0
    %424 = vmatprep.subr.mxu0 0.0
    %425 = vmatpush2.msra.mxu0 0.0
    %426 = vmatprep.subr.mxu0 0.0
    %427 = vmatpush2.msra.mxu0 0.0
    %428 = vmatprep.subr.mxu0 0.0
    %429 = vmatpush2.msra.mxu0 0.0
    %430 = vmatprep.subr.mxu0 0.0
    %431 = vmatpush2.msra.mxu0 0.0
    %432 = vmatprep.subr.mxu0 0.0
    %433 = vmatpush2.msra.mxu0 0.0
    %434 = vmatprep.mubr.f32.mxu0 0.0
    %v435 = vand.u32 %v53, 4294901760
    %436 = vmatmul.mubr.f32.gmra.mxu0 %v435
    %v437 = vpop.f32.mrf.mxu0
    %v438 = vadd.f32 %v361, %v437
    %v439 = vpop.f32.mrf.mxu0
    %440 = vdwg.mxu0
    %441 = vmatprep.subr.mxu0 0.0
    %442 = vmatpush1.msra.mxu0 0.0
    %443 = vmatprep.subr.mxu0 0.0
    %444 = vmatpush1.msra.mxu0 0.0
    %445 = vmatprep.subr.mxu0 0.0
    %446 = vmatpush1.msra.mxu0 0.0
    %447 = vmatprep.subr.mxu0 0.0
    %448 = vmatpush1.msra.mxu0 0.0
    %449 = vmatprep.subr.mxu0 0.0
    %450 = vmatpush1.msra.mxu0 0.0
    %451 = vmatprep.subr.mxu0 0.0
    %452 = vmatpush1.msra.mxu0 0.0
    %453 = vmatprep.subr.mxu0 0.0
    %454 = vmatpush1.msra.mxu0 0.0
    %455 = vmatprep.subr.mxu0 0.0
    %456 = vmatpush1.msra.mxu0 0.0
    %457 = vmatprep.subr.mxu0 0.0
    %458 = vmatpush1.msra.mxu0 0.0
    %459 = vmatprep.subr.mxu0 0.0
    %460 = vmatpush1.msra.mxu0 0.0
    %461 = vmatprep.subr.mxu0 0.0
    %462 = vmatpush1.msra.mxu0 0.0
    %463 = vmatprep.subr.mxu0 0.0
    %464 = vmatpush1.msra.mxu0 0.0
    %465 = vmatprep.subr.mxu0 0.0
    %466 = vmatpush1.msra.mxu0 0.0
    %467 = vmatprep.subr.mxu0 0.0
    %468 = vmatpush1.msra.mxu0 0.0
    %469 = vmatprep.subr.mxu0 0.0
    %v470 = vand.u32 %v43, 4294901760
    %471 = vmatpush1.msra.mxu0 %v470
    %472 = vmatprep.subr.mxu0 0.0
    %v473 = vand.u32 %v42, 4294901760
    %474 = vmatpush1.msra.mxu0 %v473
    %475 = vmatprep.subr.mxu0 0.0
    %476 = vmatpush2.msra.mxu0 0.0
    %477 = vmatprep.subr.mxu0 0.0
    %478 = vmatpush2.msra.mxu0 0.0
    %479 = vmatprep.subr.mxu0 0.0
    %480 = vmatpush2.msra.mxu0 0.0
    %481 = vmatprep.subr.mxu0 0.0
    %482 = vmatpush2.msra.mxu0 0.0
    %483 = vmatprep.subr.mxu0 0.0
    %484 = vmatpush2.msra.mxu0 0.0
    %485 = vmatprep.subr.mxu0 0.0
    %486 = vmatpush2.msra.mxu0 0.0
    %487 = vmatprep.subr.mxu0 0.0
    %488 = vmatpush2.msra.mxu0 0.0
    %489 = vmatprep.subr.mxu0 0.0
    %490 = vmatpush2.msra.mxu0 0.0
    %491 = vmatprep.subr.mxu0 0.0
    %492 = vmatpush2.msra.mxu0 0.0
    %493 = vmatprep.subr.mxu0 0.0
    %494 = vmatpush2.msra.mxu0 0.0
    %495 = vmatprep.subr.mxu0 0.0
    %496 = vmatpush2.msra.mxu0 0.0
    %497 = vmatprep.subr.mxu0 0.0
    %498 = vmatpush2.msra.mxu0 0.0
    %499 = vmatprep.subr.mxu0 0.0
    %500 = vmatpush2.msra.mxu0 0.0
    %501 = vmatprep.subr.mxu0 0.0
    %502 = vmatpush2.msra.mxu0 0.0
    %503 = vmatprep.subr.mxu0 0.0
    %504 = vmatpush2.msra.mxu0 0.0
    %505 = vmatprep.subr.mxu0 0.0
    %506 = vmatpush2.msra.mxu0 0.0
    %507 = vmatprep.mubr.f32.mxu0 0.0
    %v508 = vand.u32 %v53, 4294901760
    %509 = vmatmul.mubr.f32.gmra.mxu0 %v508
    %v510 = vpop.f32.mrf.mxu0
    %v511 = vadd.f32 %v438, %v510
    %v512 = vpop.f32.mrf.mxu0
    %513 = vdwg.mxu0
    %v514 = vmax.f32 %v511, 0.0
    %v515 = vld [vmem:[%s3] sm:$0xff]
    %v516 = vld [vmem:[%s3 + $0x8] sm:$0xff]
    %v517 = vld [vmem:[%s3 + $0x10] sm:$0xff]
    %v518 = vld [vmem:[%s3 + $0x18] sm:$0xff]
    %v519 = vld [vmem:[%s4] sm:$0x1]
    %v521 = vlaneseq
    %v522 = vshrl.u32 %v521, 7
    %v523 = vsub.s32 0, %v522
    %v524 = vrot.slane %v519, %v523
    %vm526 = vcmask 261120
    %v528 = vsel %vm526, %v514, 0
    %530 = vmatprep.subr.mxu0 0.0
    %531 = vmatpush1.msra.mxu0 0.0
    %532 = vmatprep.subr.mxu0 0.0
    %533 = vmatpush1.msra.mxu0 0.0
    %534 = vmatprep.subr.mxu0 0.0
    %535 = vmatpush1.msra.mxu0 0.0
    %536 = vmatprep.subr.mxu0 0.0
    %537 = vmatpush1.msra.mxu0 0.0
    %538 = vmatprep.subr.mxu0 0.0
    %539 = vmatpush1.msra.mxu0 0.0
    %540 = vmatprep.subr.mxu0 0.0
    %541 = vmatpush1.msra.mxu0 0.0
    %542 = vmatprep.subr.mxu0 0.0
    %543 = vmatpush1.msra.mxu0 0.0
    %544 = vmatprep.subr.mxu0 0.0
    %545 = vmatpush1.msra.mxu0 0.0
    %546 = vmatprep.subr.mxu0 0.0
    %547 = vmatpush1.msra.mxu0 0.0
    %548 = vmatprep.subr.mxu0 0.0
    %549 = vmatpush1.msra.mxu0 0.0
    %550 = vmatprep.subr.mxu0 0.0
    %551 = vmatpush1.msra.mxu0 0.0
    %552 = vmatprep.subr.mxu0 0.0
    %553 = vmatpush1.msra.mxu0 0.0
    %554 = vmatprep.subr.mxu0 0.0
    %v555 = vand.u32 %v518, 4294901760
    %556 = vmatpush1.msra.mxu0 %v555
    %557 = vmatprep.subr.mxu0 0.0
    %v558 = vand.u32 %v517, 4294901760
    %559 = vmatpush1.msra.mxu0 %v558
    %560 = vmatprep.subr.mxu0 0.0
    %v561 = vand.u32 %v516, 4294901760
    %562 = vmatpush1.msra.mxu0 %v561
    %563 = vmatprep.subr.mxu0 0.0
    %v564 = vand.u32 %v515, 4294901760
    %565 = vmatpush1.msra.mxu0 %v564
    %566 = vmatprep.subr.mxu0 0.0
    %567 = vmatpush2.msra.mxu0 0.0
    %568 = vmatprep.subr.mxu0 0.0
    %569 = vmatpush2.msra.mxu0 0.0
    %570 = vmatprep.subr.mxu0 0.0
    %571 = vmatpush2.msra.mxu0 0.0
    %572 = vmatprep.subr.mxu0 0.0
    %573 = vmatpush2.msra.mxu0 0.0
    %574 = vmatprep.subr.mxu0 0.0
    %575 = vmatpush2.msra.mxu0 0.0
    %576 = vmatprep.subr.mxu0 0.0
    %577 = vmatpush2.msra.mxu0 0.0
    %578 = vmatprep.subr.mxu0 0.0
    %579 = vmatpush2.msra.mxu0 0.0
    %580 = vmatprep.subr.mxu0 0.0
    %581 = vmatpush2.msra.mxu0 0.0
    %582 = vmatprep.subr.mxu0 0.0
    %583 = vmatpush2.msra.mxu0 0.0
    %584 = vmatprep.subr.mxu0 0.0
    %585 = vmatpush2.msra.mxu0 0.0
    %586 = vmatprep.subr.mxu0 0.0
    %587 = vmatpush2.msra.mxu0 0.0
    %588 = vmatprep.subr.mxu0 0.0
    %589 = vmatpush2.msra.mxu0 0.0
    %590 = vmatprep.subr.mxu0 0.0
    %591 = vmatpush2.msra.mxu0 0.0
    %592 = vmatprep.subr.mxu0 0.0
    %593 = vmatpush2.msra.mxu0 0.0
    %594 = vmatprep.subr.mxu0 0.0
    %595 = vmatpush2.msra.mxu0 0.0
    %596 = vmatprep.subr.mxu0 0.0
    %597 = vmatpush2.msra.mxu0 0.0
    %598 = vmatprep.mubr.f32.mxu0 0.0
    %v599 = vand.u32 %v528, 4294901760
    %v600 = vsub.f32 %v528, %v599
    %v601 = vand.u32 %v600, 4294901760
    %v602 = vsub.f32 %v600, %v601
    %v603 = vand.u32 %v602, 4294901760
    %604 = vmatmul.mubr.f32.gmra.mxu0 %v603
    %v605 = vpop.f32.mrf.mxu0
    %v606 = vadd.f32 %v524, %v605
    %v607 = vpop.f32.mrf.mxu0
    %608 = vdwg.mxu0
    %609 = vmatprep.subr.mxu0 0.0
    %610 = vmatpush1.msra.mxu0 0.0
    %611 = vmatprep.subr.mxu0 0.0
    %612 = vmatpush1.msra.mxu0 0.0
    %613 = vmatprep.subr.mxu0 0.0
    %614 = vmatpush1.msra.mxu0 0.0
    %615 = vmatprep.subr.mxu0 0.0
    %616 = vmatpush1.msra.mxu0 0.0
    %617 = vmatprep.subr.mxu0 0.0
    %618 = vmatpush1.msra.mxu0 0.0
    %619 = vmatprep.subr.mxu0 0.0
    %620 = vmatpush1.msra.mxu0 0.0
    %621 = vmatprep.subr.mxu0 0.0
    %622 = vmatpush1.msra.mxu0 0.0
    %623 = vmatprep.subr.mxu0 0.0
    %624 = vmatpush1.msra.mxu0 0.0
    %625 = vmatprep.subr.mxu0 0.0
    %626 = vmatpush1.msra.mxu0 0.0
    %627 = vmatprep.subr.mxu0 0.0
    %628 = vmatpush1.msra.mxu0 0.0
    %629 = vmatprep.subr.mxu0 0.0
    %630 = vmatpush1.msra.mxu0 0.0
    %631 = vmatprep.subr.mxu0 0.0
    %632 = vmatpush1.msra.mxu0 0.0
    %633 = vmatprep.subr.mxu0 0.0
    %v634 = vand.u32 %v518, 4294901760
    %v635 = vsub.f32 %v518, %v634
    %v636 = vand.u32 %v635, 4294901760
    %v637 = vsub.f32 %v635, %v636
    %v638 = vand.u32 %v637, 4294901760
    %639 = vmatpush1.msra.mxu0 %v638
    %640 = vmatprep.subr.mxu0 0.0
    %v641 = vand.u32 %v517, 4294901760
    %v642 = vsub.f32 %v517, %v641
    %v643 = vand.u32 %v642, 4294901760
    %v644 = vsub.f32 %v642, %v643
    %v645 = vand.u32 %v644, 4294901760
    %646 = vmatpush1.msra.mxu0 %v645
    %647 = vmatprep.subr.mxu0 0.0
    %v648 = vand.u32 %v516, 4294901760
    %v649 = vsub.f32 %v516, %v648
    %v650 = vand.u32 %v649, 4294901760
    %v651 = vsub.f32 %v649, %v650
    %v652 = vand.u32 %v651, 4294901760
    %653 = vmatpush1.msra.mxu0 %v652
    %654 = vmatprep.subr.mxu0 0.0
    %v655 = vand.u32 %v515, 4294901760
    %v656 = vsub.f32 %v515, %v655
    %v657 = vand.u32 %v656, 4294901760
    %v658 = vsub.f32 %v656, %v657
    %v659 = vand.u32 %v658, 4294901760
    %660 = vmatpush1.msra.mxu0 %v659
    %661 = vmatprep.subr.mxu0 0.0
    %662 = vmatpush2.msra.mxu0 0.0
    %663 = vmatprep.subr.mxu0 0.0
    %664 = vmatpush2.msra.mxu0 0.0
    %665 = vmatprep.subr.mxu0 0.0
    %666 = vmatpush2.msra.mxu0 0.0
    %667 = vmatprep.subr.mxu0 0.0
    %668 = vmatpush2.msra.mxu0 0.0
    %669 = vmatprep.subr.mxu0 0.0
    %670 = vmatpush2.msra.mxu0 0.0
    %671 = vmatprep.subr.mxu0 0.0
    %672 = vmatpush2.msra.mxu0 0.0
    %673 = vmatprep.subr.mxu0 0.0
    %674 = vmatpush2.msra.mxu0 0.0
    %675 = vmatprep.subr.mxu0 0.0
    %676 = vmatpush2.msra.mxu0 0.0
    %677 = vmatprep.subr.mxu0 0.0
    %678 = vmatpush2.msra.mxu0 0.0
    %679 = vmatprep.subr.mxu0 0.0
    %680 = vmatpush2.msra.mxu0 0.0
    %681 = vmatprep.subr.mxu0 0.0
    %682 = vmatpush2.msra.mxu0 0.0
    %683 = vmatprep.subr.mxu0 0.0
    %684 = vmatpush2.msra.mxu0 0.0
    %685 = vmatprep.subr.mxu0 0.0
    %686 = vmatpush2.msra.mxu0 0.0
    %687 = vmatprep.subr.mxu0 0.0
    %688 = vmatpush2.msra.mxu0 0.0
    %689 = vmatprep.subr.mxu0 0.0
    %690 = vmatpush2.msra.mxu0 0.0
    %691 = vmatprep.subr.mxu0 0.0
    %692 = vmatpush2.msra.mxu0 0.0
    %693 = vmatprep.mubr.f32.mxu0 0.0
    %v694 = vand.u32 %v528, 4294901760
    %695 = vmatmul.mubr.f32.gmra.mxu0 %v694
    %v696 = vpop.f32.mrf.mxu0
    %v697 = vadd.f32 %v606, %v696
    %v698 = vpop.f32.mrf.mxu0
    %699 = vdwg.mxu0
    %700 = vmatprep.subr.mxu0 0.0
    %701 = vmatpush1.msra.mxu0 0.0
    %702 = vmatprep.subr.mxu0 0.0
    %703 = vmatpush1.msra.mxu0 0.0
    %704 = vmatprep.subr.mxu0 0.0
    %705 = vmatpush1.msra.mxu0 0.0
    %706 = vmatprep.subr.mxu0 0.0
    %707 = vmatpush1.msra.mxu0 0.0
    %708 = vmatprep.subr.mxu0 0.0
    %709 = vmatpush1.msra.mxu0 0.0
    %710 = vmatprep.subr.mxu0 0.0
    %711 = vmatpush1.msra.mxu0 0.0
    %712 = vmatprep.subr.mxu0 0.0
    %713 = vmatpush1.msra.mxu0 0.0
    %714 = vmatprep.subr.mxu0 0.0
    %715 = vmatpush1.msra.mxu0 0.0
    %716 = vmatprep.subr.mxu0 0.0
    %717 = vmatpush1.msra.mxu0 0.0
    %718 = vmatprep.subr.mxu0 0.0
    %719 = vmatpush1.msra.mxu0 0.0
    %720 = vmatprep.subr.mxu0 0.0
    %721 = vmatpush1.msra.mxu0 0.0
    %722 = vmatprep.subr.mxu0 0.0
    %723 = vmatpush1.msra.mxu0 0.0
    %724 = vmatprep.subr.mxu0 0.0
    %v725 = vand.u32 %v518, 4294901760
    %v726 = vsub.f32 %v518, %v725
    %727 = vmatpush1.msra.mxu0 %v726
    %728 = vmatprep.subr.mxu0 0.0
    %v729 = vand.u32 %v517, 4294901760
    %v730 = vsub.f32 %v517, %v729
    %731 = vmatpush1.msra.mxu0 %v730
    %732 = vmatprep.subr.mxu0 0.0
    %v733 = vand.u32 %v516, 4294901760
    %v734 = vsub.f32 %v516, %v733
    %735 = vmatpush1.msra.mxu0 %v734
    %736 = vmatprep.subr.mxu0 0.0
    %v737 = vand.u32 %v515, 4294901760
    %v738 = vsub.f32 %v515, %v737
    %739 = vmatpush1.msra.mxu0 %v738
    %740 = vmatprep.subr.mxu0 0.0
    %741 = vmatpush2.msra.mxu0 0.0
    %742 = vmatprep.subr.mxu0 0.0
    %743 = vmatpush2.msra.mxu0 0.0
    %744 = vmatprep.subr.mxu0 0.0
    %745 = vmatpush2.msra.mxu0 0.0
    %746 = vmatprep.subr.mxu0 0.0
    %747 = vmatpush2.msra.mxu0 0.0
    %748 = vmatprep.subr.mxu0 0.0
    %749 = vmatpush2.msra.mxu0 0.0
    %750 = vmatprep.subr.mxu0 0.0
    %751 = vmatpush2.msra.mxu0 0.0
    %752 = vmatprep.subr.mxu0 0.0
    %753 = vmatpush2.msra.mxu0 0.0
    %754 = vmatprep.subr.mxu0 0.0
    %755 = vmatpush2.msra.mxu0 0.0
    %756 = vmatprep.subr.mxu0 0.0
    %757 = vmatpush2.msra.mxu0 0.0
    %758 = vmatprep.subr.mxu0 0.0
    %759 = vmatpush2.msra.mxu0 0.0
    %760 = vmatprep.subr.mxu0 0.0
    %761 = vmatpush2.msra.mxu0 0.0
    %762 = vmatprep.subr.mxu0 0.0
    %763 = vmatpush2.msra.mxu0 0.0
    %764 = vmatprep.subr.mxu0 0.0
    %765 = vmatpush2.msra.mxu0 0.0
    %766 = vmatprep.subr.mxu0 0.0
    %767 = vmatpush2.msra.mxu0 0.0
    %768 = vmatprep.subr.mxu0 0.0
    %769 = vmatpush2.msra.mxu0 0.0
    %770 = vmatprep.subr.mxu0 0.0
    %771 = vmatpush2.msra.mxu0 0.0
    %772 = vmatprep.mubr.f32.mxu0 0.0
    %v773 = vand.u32 %v528, 4294901760
    %v774 = vsub.f32 %v528, %v773
    %775 = vmatmul.mubr.f32.gmra.mxu0 %v774
    %v776 = vpop.f32.mrf.mxu0
    %v777 = vadd.f32 %v697, %v776
    %v778 = vpop.f32.mrf.mxu0
    %779 = vdwg.mxu0
    %780 = vmatprep.subr.mxu0 0.0
    %781 = vmatpush1.msra.mxu0 0.0
    %782 = vmatprep.subr.mxu0 0.0
    %783 = vmatpush1.msra.mxu0 0.0
    %784 = vmatprep.subr.mxu0 0.0
    %785 = vmatpush1.msra.mxu0 0.0
    %786 = vmatprep.subr.mxu0 0.0
    %787 = vmatpush1.msra.mxu0 0.0
    %788 = vmatprep.subr.mxu0 0.0
    %789 = vmatpush1.msra.mxu0 0.0
    %790 = vmatprep.subr.mxu0 0.0
    %791 = vmatpush1.msra.mxu0 0.0
    %792 = vmatprep.subr.mxu0 0.0
    %793 = vmatpush1.msra.mxu0 0.0
    %794 = vmatprep.subr.mxu0 0.0
    %795 = vmatpush1.msra.mxu0 0.0
    %796 = vmatprep.subr.mxu0 0.0
    %797 = vmatpush1.msra.mxu0 0.0
    %798 = vmatprep.subr.mxu0 0.0
    %799 = vmatpush1.msra.mxu0 0.0
    %800 = vmatprep.subr.mxu0 0.0
    %801 = vmatpush1.msra.mxu0 0.0
    %802 = vmatprep.subr.mxu0 0.0
    %803 = vmatpush1.msra.mxu0 0.0
    %804 = vmatprep.subr.mxu0 0.0
    %v805 = vand.u32 %v518, 4294901760
    %806 = vmatpush1.msra.mxu0 %v805
    %807 = vmatprep.subr.mxu0 0.0
    %v808 = vand.u32 %v517, 4294901760
    %809 = vmatpush1.msra.mxu0 %v808
    %810 = vmatprep.subr.mxu0 0.0
    %v811 = vand.u32 %v516, 4294901760
    %812 = vmatpush1.msra.mxu0 %v811
    %813 = vmatprep.subr.mxu0 0.0
    %v814 = vand.u32 %v515, 4294901760
    %815 = vmatpush1.msra.mxu0 %v814
    %816 = vmatprep.subr.mxu0 0.0
    %817 = vmatpush2.msra.mxu0 0.0
    %818 = vmatprep.subr.mxu0 0.0
    %819 = vmatpush2.msra.mxu0 0.0
    %820 = vmatprep.subr.mxu0 0.0
    %821 = vmatpush2.msra.mxu0 0.0
    %822 = vmatprep.subr.mxu0 0.0
    %823 = vmatpush2.msra.mxu0 0.0
    %824 = vmatprep.subr.mxu0 0.0
    %825 = vmatpush2.msra.mxu0 0.0
    %826 = vmatprep.subr.mxu0 0.0
    %827 = vmatpush2.msra.mxu0 0.0
    %828 = vmatprep.subr.mxu0 0.0
    %829 = vmatpush2.msra.mxu0 0.0
    %830 = vmatprep.subr.mxu0 0.0
    %831 = vmatpush2.msra.mxu0 0.0
    %832 = vmatprep.subr.mxu0 0.0
    %833 = vmatpush2.msra.mxu0 0.0
    %834 = vmatprep.subr.mxu0 0.0
    %835 = vmatpush2.msra.mxu0 0.0
    %836 = vmatprep.subr.mxu0 0.0
    %837 = vmatpush2.msra.mxu0 0.0
    %838 = vmatprep.subr.mxu0 0.0
    %839 = vmatpush2.msra.mxu0 0.0
    %840 = vmatprep.subr.mxu0 0.0
    %841 = vmatpush2.msra.mxu0 0.0
    %842 = vmatprep.subr.mxu0 0.0
    %843 = vmatpush2.msra.mxu0 0.0
    %844 = vmatprep.subr.mxu0 0.0
    %845 = vmatpush2.msra.mxu0 0.0
    %846 = vmatprep.subr.mxu0 0.0
    %847 = vmatpush2.msra.mxu0 0.0
    %848 = vmatprep.mubr.f32.mxu0 0.0
    %v849 = vand.u32 %v528, 4294901760
    %v850 = vsub.f32 %v528, %v849
    %v851 = vand.u32 %v850, 4294901760
    %852 = vmatmul.mubr.f32.gmra.mxu0 %v851
    %v853 = vpop.f32.mrf.mxu0
    %v854 = vadd.f32 %v777, %v853
    %v855 = vpop.f32.mrf.mxu0
    %856 = vdwg.mxu0
    %857 = vmatprep.subr.mxu0 0.0
    %858 = vmatpush1.msra.mxu0 0.0
    %859 = vmatprep.subr.mxu0 0.0
    %860 = vmatpush1.msra.mxu0 0.0
    %861 = vmatprep.subr.mxu0 0.0
    %862 = vmatpush1.msra.mxu0 0.0
    %863 = vmatprep.subr.mxu0 0.0
    %864 = vmatpush1.msra.mxu0 0.0
    %865 = vmatprep.subr.mxu0 0.0
    %866 = vmatpush1.msra.mxu0 0.0
    %867 = vmatprep.subr.mxu0 0.0
    %868 = vmatpush1.msra.mxu0 0.0
    %869 = vmatprep.subr.mxu0 0.0
    %870 = vmatpush1.msra.mxu0 0.0
    %871 = vmatprep.subr.mxu0 0.0
    %872 = vmatpush1.msra.mxu0 0.0
    %873 = vmatprep.subr.mxu0 0.0
    %874 = vmatpush1.msra.mxu0 0.0
    %875 = vmatprep.subr.mxu0 0.0
    %876 = vmatpush1.msra.mxu0 0.0
    %877 = vmatprep.subr.mxu0 0.0
    %878 = vmatpush1.msra.mxu0 0.0
    %879 = vmatprep.subr.mxu0 0.0
    %880 = vmatpush1.msra.mxu0 0.0
    %881 = vmatprep.subr.mxu0 0.0
    %v882 = vand.u32 %v518, 4294901760
    %v883 = vsub.f32 %v518, %v882
    %v884 = vand.u32 %v883, 4294901760
    %885 = vmatpush1.msra.mxu0 %v884
    %886 = vmatprep.subr.mxu0 0.0
    %v887 = vand.u32 %v517, 4294901760
    %v888 = vsub.f32 %v517, %v887
    %v889 = vand.u32 %v888, 4294901760
    %890 = vmatpush1.msra.mxu0 %v889
    %891 = vmatprep.subr.mxu0 0.0
    %v892 = vand.u32 %v516, 4294901760
    %v893 = vsub.f32 %v516, %v892
    %v894 = vand.u32 %v893, 4294901760
    %895 = vmatpush1.msra.mxu0 %v894
    %896 = vmatprep.subr.mxu0 0.0
    %v897 = vand.u32 %v515, 4294901760
    %v898 = vsub.f32 %v515, %v897
    %v899 = vand.u32 %v898, 4294901760
    %900 = vmatpush1.msra.mxu0 %v899
    %901 = vmatprep.subr.mxu0 0.0
    %902 = vmatpush2.msra.mxu0 0.0
    %903 = vmatprep.subr.mxu0 0.0
    %904 = vmatpush2.msra.mxu0 0.0
    %905 = vmatprep.subr.mxu0 0.0
    %906 = vmatpush2.msra.mxu0 0.0
    %907 = vmatprep.subr.mxu0 0.0
    %908 = vmatpush2.msra.mxu0 0.0
    %909 = vmatprep.subr.mxu0 0.0
    %910 = vmatpush2.msra.mxu0 0.0
    %911 = vmatprep.subr.mxu0 0.0
    %912 = vmatpush2.msra.mxu0 0.0
    %913 = vmatprep.subr.mxu0 0.0
    %914 = vmatpush2.msra.mxu0 0.0
    %915 = vmatprep.subr.mxu0 0.0
    %916 = vmatpush2.msra.mxu0 0.0
    %917 = vmatprep.subr.mxu0 0.0
    %918 = vmatpush2.msra.mxu0 0.0
    %919 = vmatprep.subr.mxu0 0.0
    %920 = vmatpush2.msra.mxu0 0.0
    %921 = vmatprep.subr.mxu0 0.0
    %922 = vmatpush2.msra.mxu0 0.0
    %923 = vmatprep.subr.mxu0 0.0
    %924 = vmatpush2.msra.mxu0 0.0
    %925 = vmatprep.subr.mxu0 0.0
    %926 = vmatpush2.msra.mxu0 0.0
    %927 = vmatprep.subr.mxu0 0.0
    %928 = vmatpush2.msra.mxu0 0.0
    %929 = vmatprep.subr.mxu0 0.0
    %930 = vmatpush2.msra.mxu0 0.0
    %931 = vmatprep.subr.mxu0 0.0
    %932 = vmatpush2.msra.mxu0 0.0
    %933 = vmatprep.mubr.f32.mxu0 0.0
    %v934 = vand.u32 %v528, 4294901760
    %935 = vmatmul.mubr.f32.gmra.mxu0 %v934
    %v936 = vpop.f32.mrf.mxu0
    %v937 = vadd.f32 %v854, %v936
    %v938 = vpop.f32.mrf.mxu0
    %939 = vdwg.mxu0
    %940 = vmatprep.subr.mxu0 0.0
    %941 = vmatpush1.msra.mxu0 0.0
    %942 = vmatprep.subr.mxu0 0.0
    %943 = vmatpush1.msra.mxu0 0.0
    %944 = vmatprep.subr.mxu0 0.0
    %945 = vmatpush1.msra.mxu0 0.0
    %946 = vmatprep.subr.mxu0 0.0
    %947 = vmatpush1.msra.mxu0 0.0
    %948 = vmatprep.subr.mxu0 0.0
    %949 = vmatpush1.msra.mxu0 0.0
    %950 = vmatprep.subr.mxu0 0.0
    %951 = vmatpush1.msra.mxu0 0.0
    %952 = vmatprep.subr.mxu0 0.0
    %953 = vmatpush1.msra.mxu0 0.0
    %954 = vmatprep.subr.mxu0 0.0
    %955 = vmatpush1.msra.mxu0 0.0
    %956 = vmatprep.subr.mxu0 0.0
    %957 = vmatpush1.msra.mxu0 0.0
    %958 = vmatprep.subr.mxu0 0.0
    %959 = vmatpush1.msra.mxu0 0.0
    %960 = vmatprep.subr.mxu0 0.0
    %961 = vmatpush1.msra.mxu0 0.0
    %962 = vmatprep.subr.mxu0 0.0
    %963 = vmatpush1.msra.mxu0 0.0
    %964 = vmatprep.subr.mxu0 0.0
    %v965 = vand.u32 %v518, 4294901760
    %966 = vmatpush1.msra.mxu0 %v965
    %967 = vmatprep.subr.mxu0 0.0
    %v968 = vand.u32 %v517, 4294901760
    %969 = vmatpush1.msra.mxu0 %v968
    %970 = vmatprep.subr.mxu0 0.0
    %v971 = vand.u32 %v516, 4294901760
    %972 = vmatpush1.msra.mxu0 %v971
    %973 = vmatprep.subr.mxu0 0.0
    %v974 = vand.u32 %v515, 4294901760
    %975 = vmatpush1.msra.mxu0 %v974
    %976 = vmatprep.subr.mxu0 0.0
    %977 = vmatpush2.msra.mxu0 0.0
    %978 = vmatprep.subr.mxu0 0.0
    %979 = vmatpush2.msra.mxu0 0.0
    %980 = vmatprep.subr.mxu0 0.0
    %981 = vmatpush2.msra.mxu0 0.0
    %982 = vmatprep.subr.mxu0 0.0
    %983 = vmatpush2.msra.mxu0 0.0
    %984 = vmatprep.subr.mxu0 0.0
    %985 = vmatpush2.msra.mxu0 0.0
    %986 = vmatprep.subr.mxu0 0.0
    %987 = vmatpush2.msra.mxu0 0.0
    %988 = vmatprep.subr.mxu0 0.0
    %989 = vmatpush2.msra.mxu0 0.0
    %990 = vmatprep.subr.mxu0 0.0
    %991 = vmatpush2.msra.mxu0 0.0
    %992 = vmatprep.subr.mxu0 0.0
    %993 = vmatpush2.msra.mxu0 0.0
    %994 = vmatprep.subr.mxu0 0.0
    %995 = vmatpush2.msra.mxu0 0.0
    %996 = vmatprep.subr.mxu0 0.0
    %997 = vmatpush2.msra.mxu0 0.0
    %998 = vmatprep.subr.mxu0 0.0
    %999 = vmatpush2.msra.mxu0 0.0
    %1000 = vmatprep.subr.mxu0 0.0
    %1001 = vmatpush2.msra.mxu0 0.0
    %1002 = vmatprep.subr.mxu0 0.0
    %1003 = vmatpush2.msra.mxu0 0.0
    %1004 = vmatprep.subr.mxu0 0.0
    %1005 = vmatpush2.msra.mxu0 0.0
    %1006 = vmatprep.subr.mxu0 0.0
    %1007 = vmatpush2.msra.mxu0 0.0
    %1008 = vmatprep.mubr.f32.mxu0 0.0
    %v1009 = vand.u32 %v528, 4294901760
    %1010 = vmatmul.mubr.f32.gmra.mxu0 %v1009
    %v1011 = vpop.f32.mrf.mxu0
    %v1012 = vadd.f32 %v937, %v1011
    %v1013 = vpop.f32.mrf.mxu0
    %1014 = vdwg.mxu0
    %v1015 = vmax.f32 %v1012, 0.0
    %v1016 = vld [vmem:[%s5] sm:$0xff]
    %v1017 = vld [vmem:[%s5 + $0x8] sm:$0xff]
    %v1018 = vld [vmem:[%s5 + $0x10] sm:$0xff]
    %v1019 = vld [vmem:[%s5 + $0x18] sm:$0xff]
    %v1020 = vld [vmem:[%s6] sm:$0x1]
    %v1022 = vlaneseq
    %v1023 = vshrl.u32 %v1022, 7
    %v1024 = vsub.s32 0, %v1023
    %v1025 = vrot.slane %v1020, %v1024
    %v1028 = vsel %vm526, %v1015, 0
    %1030 = vmatprep.subr.mxu0 0.0
    %1031 = vmatpush1.msra.mxu0 0.0
    %1032 = vmatprep.subr.mxu0 0.0
    %1033 = vmatpush1.msra.mxu0 0.0
    %1034 = vmatprep.subr.mxu0 0.0
    %1035 = vmatpush1.msra.mxu0 0.0
    %1036 = vmatprep.subr.mxu0 0.0
    %1037 = vmatpush1.msra.mxu0 0.0
    %1038 = vmatprep.subr.mxu0 0.0
    %1039 = vmatpush1.msra.mxu0 0.0
    %1040 = vmatprep.subr.mxu0 0.0
    %1041 = vmatpush1.msra.mxu0 0.0
    %1042 = vmatprep.subr.mxu0 0.0
    %1043 = vmatpush1.msra.mxu0 0.0
    %1044 = vmatprep.subr.mxu0 0.0
    %1045 = vmatpush1.msra.mxu0 0.0
    %1046 = vmatprep.subr.mxu0 0.0
    %1047 = vmatpush1.msra.mxu0 0.0
    %1048 = vmatprep.subr.mxu0 0.0
    %1049 = vmatpush1.msra.mxu0 0.0
    %1050 = vmatprep.subr.mxu0 0.0
    %1051 = vmatpush1.msra.mxu0 0.0
    %1052 = vmatprep.subr.mxu0 0.0
    %1053 = vmatpush1.msra.mxu0 0.0
    %1054 = vmatprep.subr.mxu0 0.0
    %v1055 = vand.u32 %v1019, 4294901760
    %1056 = vmatpush1.msra.mxu0 %v1055
    %1057 = vmatprep.subr.mxu0 0.0
    %v1058 = vand.u32 %v1018, 4294901760
    %1059 = vmatpush1.msra.mxu0 %v1058
    %1060 = vmatprep.subr.mxu0 0.0
    %v1061 = vand.u32 %v1017, 4294901760
    %1062 = vmatpush1.msra.mxu0 %v1061
    %1063 = vmatprep.subr.mxu0 0.0
    %v1064 = vand.u32 %v1016, 4294901760
    %1065 = vmatpush1.msra.mxu0 %v1064
    %1066 = vmatprep.subr.mxu0 0.0
    %1067 = vmatpush2.msra.mxu0 0.0
    %1068 = vmatprep.subr.mxu0 0.0
    %1069 = vmatpush2.msra.mxu0 0.0
    %1070 = vmatprep.subr.mxu0 0.0
    %1071 = vmatpush2.msra.mxu0 0.0
    %1072 = vmatprep.subr.mxu0 0.0
    %1073 = vmatpush2.msra.mxu0 0.0
    %1074 = vmatprep.subr.mxu0 0.0
    %1075 = vmatpush2.msra.mxu0 0.0
    %1076 = vmatprep.subr.mxu0 0.0
    %1077 = vmatpush2.msra.mxu0 0.0
    %1078 = vmatprep.subr.mxu0 0.0
    %1079 = vmatpush2.msra.mxu0 0.0
    %1080 = vmatprep.subr.mxu0 0.0
    %1081 = vmatpush2.msra.mxu0 0.0
    %1082 = vmatprep.subr.mxu0 0.0
    %1083 = vmatpush2.msra.mxu0 0.0
    %1084 = vmatprep.subr.mxu0 0.0
    %1085 = vmatpush2.msra.mxu0 0.0
    %1086 = vmatprep.subr.mxu0 0.0
    %1087 = vmatpush2.msra.mxu0 0.0
    %1088 = vmatprep.subr.mxu0 0.0
    %1089 = vmatpush2.msra.mxu0 0.0
    %1090 = vmatprep.subr.mxu0 0.0
    %1091 = vmatpush2.msra.mxu0 0.0
    %1092 = vmatprep.subr.mxu0 0.0
    %1093 = vmatpush2.msra.mxu0 0.0
    %1094 = vmatprep.subr.mxu0 0.0
    %1095 = vmatpush2.msra.mxu0 0.0
    %1096 = vmatprep.subr.mxu0 0.0
    %1097 = vmatpush2.msra.mxu0 0.0
    %1098 = vmatprep.mubr.f32.mxu0 0.0
    %v1099 = vand.u32 %v1028, 4294901760
    %v1100 = vsub.f32 %v1028, %v1099
    %v1101 = vand.u32 %v1100, 4294901760
    %v1102 = vsub.f32 %v1100, %v1101
    %v1103 = vand.u32 %v1102, 4294901760
    %1104 = vmatmul.mubr.f32.gmra.mxu0 %v1103
    %v1105 = vpop.f32.mrf.mxu0
    %v1106 = vadd.f32 %v1025, %v1105
    %v1107 = vpop.f32.mrf.mxu0
    %1108 = vdwg.mxu0
    %1109 = vmatprep.subr.mxu0 0.0
    %1110 = vmatpush1.msra.mxu0 0.0
    %1111 = vmatprep.subr.mxu0 0.0
    %1112 = vmatpush1.msra.mxu0 0.0
    %1113 = vmatprep.subr.mxu0 0.0
    %1114 = vmatpush1.msra.mxu0 0.0
    %1115 = vmatprep.subr.mxu0 0.0
    %1116 = vmatpush1.msra.mxu0 0.0
    %1117 = vmatprep.subr.mxu0 0.0
    %1118 = vmatpush1.msra.mxu0 0.0
    %1119 = vmatprep.subr.mxu0 0.0
    %1120 = vmatpush1.msra.mxu0 0.0
    %1121 = vmatprep.subr.mxu0 0.0
    %1122 = vmatpush1.msra.mxu0 0.0
    %1123 = vmatprep.subr.mxu0 0.0
    %1124 = vmatpush1.msra.mxu0 0.0
    %1125 = vmatprep.subr.mxu0 0.0
    %1126 = vmatpush1.msra.mxu0 0.0
    %1127 = vmatprep.subr.mxu0 0.0
    %1128 = vmatpush1.msra.mxu0 0.0
    %1129 = vmatprep.subr.mxu0 0.0
    %1130 = vmatpush1.msra.mxu0 0.0
    %1131 = vmatprep.subr.mxu0 0.0
    %1132 = vmatpush1.msra.mxu0 0.0
    %1133 = vmatprep.subr.mxu0 0.0
    %v1134 = vand.u32 %v1019, 4294901760
    %v1135 = vsub.f32 %v1019, %v1134
    %v1136 = vand.u32 %v1135, 4294901760
    %v1137 = vsub.f32 %v1135, %v1136
    %v1138 = vand.u32 %v1137, 4294901760
    %1139 = vmatpush1.msra.mxu0 %v1138
    %1140 = vmatprep.subr.mxu0 0.0
    %v1141 = vand.u32 %v1018, 4294901760
    %v1142 = vsub.f32 %v1018, %v1141
    %v1143 = vand.u32 %v1142, 4294901760
    %v1144 = vsub.f32 %v1142, %v1143
    %v1145 = vand.u32 %v1144, 4294901760
    %1146 = vmatpush1.msra.mxu0 %v1145
    %1147 = vmatprep.subr.mxu0 0.0
    %v1148 = vand.u32 %v1017, 4294901760
    %v1149 = vsub.f32 %v1017, %v1148
    %v1150 = vand.u32 %v1149, 4294901760
    %v1151 = vsub.f32 %v1149, %v1150
    %v1152 = vand.u32 %v1151, 4294901760
    %1153 = vmatpush1.msra.mxu0 %v1152
    %1154 = vmatprep.subr.mxu0 0.0
    %v1155 = vand.u32 %v1016, 4294901760
    %v1156 = vsub.f32 %v1016, %v1155
    %v1157 = vand.u32 %v1156, 4294901760
    %v1158 = vsub.f32 %v1156, %v1157
    %v1159 = vand.u32 %v1158, 4294901760
    %1160 = vmatpush1.msra.mxu0 %v1159
    %1161 = vmatprep.subr.mxu0 0.0
    %1162 = vmatpush2.msra.mxu0 0.0
    %1163 = vmatprep.subr.mxu0 0.0
    %1164 = vmatpush2.msra.mxu0 0.0
    %1165 = vmatprep.subr.mxu0 0.0
    %1166 = vmatpush2.msra.mxu0 0.0
    %1167 = vmatprep.subr.mxu0 0.0
    %1168 = vmatpush2.msra.mxu0 0.0
    %1169 = vmatprep.subr.mxu0 0.0
    %1170 = vmatpush2.msra.mxu0 0.0
    %1171 = vmatprep.subr.mxu0 0.0
    %1172 = vmatpush2.msra.mxu0 0.0
    %1173 = vmatprep.subr.mxu0 0.0
    %1174 = vmatpush2.msra.mxu0 0.0
    %1175 = vmatprep.subr.mxu0 0.0
    %1176 = vmatpush2.msra.mxu0 0.0
    %1177 = vmatprep.subr.mxu0 0.0
    %1178 = vmatpush2.msra.mxu0 0.0
    %1179 = vmatprep.subr.mxu0 0.0
    %1180 = vmatpush2.msra.mxu0 0.0
    %1181 = vmatprep.subr.mxu0 0.0
    %1182 = vmatpush2.msra.mxu0 0.0
    %1183 = vmatprep.subr.mxu0 0.0
    %1184 = vmatpush2.msra.mxu0 0.0
    %1185 = vmatprep.subr.mxu0 0.0
    %1186 = vmatpush2.msra.mxu0 0.0
    %1187 = vmatprep.subr.mxu0 0.0
    %1188 = vmatpush2.msra.mxu0 0.0
    %1189 = vmatprep.subr.mxu0 0.0
    %1190 = vmatpush2.msra.mxu0 0.0
    %1191 = vmatprep.subr.mxu0 0.0
    %1192 = vmatpush2.msra.mxu0 0.0
    %1193 = vmatprep.mubr.f32.mxu0 0.0
    %v1194 = vand.u32 %v1028, 4294901760
    %1195 = vmatmul.mubr.f32.gmra.mxu0 %v1194
    %v1196 = vpop.f32.mrf.mxu0
    %v1197 = vadd.f32 %v1106, %v1196
    %v1198 = vpop.f32.mrf.mxu0
    %1199 = vdwg.mxu0
    %1200 = vmatprep.subr.mxu0 0.0
    %1201 = vmatpush1.msra.mxu0 0.0
    %1202 = vmatprep.subr.mxu0 0.0
    %1203 = vmatpush1.msra.mxu0 0.0
    %1204 = vmatprep.subr.mxu0 0.0
    %1205 = vmatpush1.msra.mxu0 0.0
    %1206 = vmatprep.subr.mxu0 0.0
    %1207 = vmatpush1.msra.mxu0 0.0
    %1208 = vmatprep.subr.mxu0 0.0
    %1209 = vmatpush1.msra.mxu0 0.0
    %1210 = vmatprep.subr.mxu0 0.0
    %1211 = vmatpush1.msra.mxu0 0.0
    %1212 = vmatprep.subr.mxu0 0.0
    %1213 = vmatpush1.msra.mxu0 0.0
    %1214 = vmatprep.subr.mxu0 0.0
    %1215 = vmatpush1.msra.mxu0 0.0
    %1216 = vmatprep.subr.mxu0 0.0
    %1217 = vmatpush1.msra.mxu0 0.0
    %1218 = vmatprep.subr.mxu0 0.0
    %1219 = vmatpush1.msra.mxu0 0.0
    %1220 = vmatprep.subr.mxu0 0.0
    %1221 = vmatpush1.msra.mxu0 0.0
    %1222 = vmatprep.subr.mxu0 0.0
    %1223 = vmatpush1.msra.mxu0 0.0
    %1224 = vmatprep.subr.mxu0 0.0
    %v1225 = vand.u32 %v1019, 4294901760
    %v1226 = vsub.f32 %v1019, %v1225
    %1227 = vmatpush1.msra.mxu0 %v1226
    %1228 = vmatprep.subr.mxu0 0.0
    %v1229 = vand.u32 %v1018, 4294901760
    %v1230 = vsub.f32 %v1018, %v1229
    %1231 = vmatpush1.msra.mxu0 %v1230
    %1232 = vmatprep.subr.mxu0 0.0
    %v1233 = vand.u32 %v1017, 4294901760
    %v1234 = vsub.f32 %v1017, %v1233
    %1235 = vmatpush1.msra.mxu0 %v1234
    %1236 = vmatprep.subr.mxu0 0.0
    %v1237 = vand.u32 %v1016, 4294901760
    %v1238 = vsub.f32 %v1016, %v1237
    %1239 = vmatpush1.msra.mxu0 %v1238
    %1240 = vmatprep.subr.mxu0 0.0
    %1241 = vmatpush2.msra.mxu0 0.0
    %1242 = vmatprep.subr.mxu0 0.0
    %1243 = vmatpush2.msra.mxu0 0.0
    %1244 = vmatprep.subr.mxu0 0.0
    %1245 = vmatpush2.msra.mxu0 0.0
    %1246 = vmatprep.subr.mxu0 0.0
    %1247 = vmatpush2.msra.mxu0 0.0
    %1248 = vmatprep.subr.mxu0 0.0
    %1249 = vmatpush2.msra.mxu0 0.0
    %1250 = vmatprep.subr.mxu0 0.0
    %1251 = vmatpush2.msra.mxu0 0.0
    %1252 = vmatprep.subr.mxu0 0.0
    %1253 = vmatpush2.msra.mxu0 0.0
    %1254 = vmatprep.subr.mxu0 0.0
    %1255 = vmatpush2.msra.mxu0 0.0
    %1256 = vmatprep.subr.mxu0 0.0
    %1257 = vmatpush2.msra.mxu0 0.0
    %1258 = vmatprep.subr.mxu0 0.0
    %1259 = vmatpush2.msra.mxu0 0.0
    %1260 = vmatprep.subr.mxu0 0.0
    %1261 = vmatpush2.msra.mxu0 0.0
    %1262 = vmatprep.subr.mxu0 0.0
    %1263 = vmatpush2.msra.mxu0 0.0
    %1264 = vmatprep.subr.mxu0 0.0
    %1265 = vmatpush2.msra.mxu0 0.0
    %1266 = vmatprep.subr.mxu0 0.0
    %1267 = vmatpush2.msra.mxu0 0.0
    %1268 = vmatprep.subr.mxu0 0.0
    %1269 = vmatpush2.msra.mxu0 0.0
    %1270 = vmatprep.subr.mxu0 0.0
    %1271 = vmatpush2.msra.mxu0 0.0
    %1272 = vmatprep.mubr.f32.mxu0 0.0
    %v1273 = vand.u32 %v1028, 4294901760
    %v1274 = vsub.f32 %v1028, %v1273
    %1275 = vmatmul.mubr.f32.gmra.mxu0 %v1274
    %v1276 = vpop.f32.mrf.mxu0
    %v1277 = vadd.f32 %v1197, %v1276
    %v1278 = vpop.f32.mrf.mxu0
    %1279 = vdwg.mxu0
    %1280 = vmatprep.subr.mxu0 0.0
    %1281 = vmatpush1.msra.mxu0 0.0
    %1282 = vmatprep.subr.mxu0 0.0
    %1283 = vmatpush1.msra.mxu0 0.0
    %1284 = vmatprep.subr.mxu0 0.0
    %1285 = vmatpush1.msra.mxu0 0.0
    %1286 = vmatprep.subr.mxu0 0.0
    %1287 = vmatpush1.msra.mxu0 0.0
    %1288 = vmatprep.subr.mxu0 0.0
    %1289 = vmatpush1.msra.mxu0 0.0
    %1290 = vmatprep.subr.mxu0 0.0
    %1291 = vmatpush1.msra.mxu0 0.0
    %1292 = vmatprep.subr.mxu0 0.0
    %1293 = vmatpush1.msra.mxu0 0.0
    %1294 = vmatprep.subr.mxu0 0.0
    %1295 = vmatpush1.msra.mxu0 0.0
    %1296 = vmatprep.subr.mxu0 0.0
    %1297 = vmatpush1.msra.mxu0 0.0
    %1298 = vmatprep.subr.mxu0 0.0
    %1299 = vmatpush1.msra.mxu0 0.0
    %1300 = vmatprep.subr.mxu0 0.0
    %1301 = vmatpush1.msra.mxu0 0.0
    %1302 = vmatprep.subr.mxu0 0.0
    %1303 = vmatpush1.msra.mxu0 0.0
    %1304 = vmatprep.subr.mxu0 0.0
    %v1305 = vand.u32 %v1019, 4294901760
    %1306 = vmatpush1.msra.mxu0 %v1305
    %1307 = vmatprep.subr.mxu0 0.0
    %v1308 = vand.u32 %v1018, 4294901760
    %1309 = vmatpush1.msra.mxu0 %v1308
    %1310 = vmatprep.subr.mxu0 0.0
    %v1311 = vand.u32 %v1017, 4294901760
    %1312 = vmatpush1.msra.mxu0 %v1311
    %1313 = vmatprep.subr.mxu0 0.0
    %v1314 = vand.u32 %v1016, 4294901760
    %1315 = vmatpush1.msra.mxu0 %v1314
    %1316 = vmatprep.subr.mxu0 0.0
    %1317 = vmatpush2.msra.mxu0 0.0
    %1318 = vmatprep.subr.mxu0 0.0
    %1319 = vmatpush2.msra.mxu0 0.0
    %1320 = vmatprep.subr.mxu0 0.0
    %1321 = vmatpush2.msra.mxu0 0.0
    %1322 = vmatprep.subr.mxu0 0.0
    %1323 = vmatpush2.msra.mxu0 0.0
    %1324 = vmatprep.subr.mxu0 0.0
    %1325 = vmatpush2.msra.mxu0 0.0
    %1326 = vmatprep.subr.mxu0 0.0
    %1327 = vmatpush2.msra.mxu0 0.0
    %1328 = vmatprep.subr.mxu0 0.0
    %1329 = vmatpush2.msra.mxu0 0.0
    %1330 = vmatprep.subr.mxu0 0.0
    %1331 = vmatpush2.msra.mxu0 0.0
    %1332 = vmatprep.subr.mxu0 0.0
    %1333 = vmatpush2.msra.mxu0 0.0
    %1334 = vmatprep.subr.mxu0 0.0
    %1335 = vmatpush2.msra.mxu0 0.0
    %1336 = vmatprep.subr.mxu0 0.0
    %1337 = vmatpush2.msra.mxu0 0.0
    %1338 = vmatprep.subr.mxu0 0.0
    %1339 = vmatpush2.msra.mxu0 0.0
    %1340 = vmatprep.subr.mxu0 0.0
    %1341 = vmatpush2.msra.mxu0 0.0
    %1342 = vmatprep.subr.mxu0 0.0
    %1343 = vmatpush2.msra.mxu0 0.0
    %1344 = vmatprep.subr.mxu0 0.0
    %1345 = vmatpush2.msra.mxu0 0.0
    %1346 = vmatprep.subr.mxu0 0.0
    %1347 = vmatpush2.msra.mxu0 0.0
    %1348 = vmatprep.mubr.f32.mxu0 0.0
    %v1349 = vand.u32 %v1028, 4294901760
    %v1350 = vsub.f32 %v1028, %v1349
    %v1351 = vand.u32 %v1350, 4294901760
    %1352 = vmatmul.mubr.f32.gmra.mxu0 %v1351
    %v1353 = vpop.f32.mrf.mxu0
    %v1354 = vadd.f32 %v1277, %v1353
    %v1355 = vpop.f32.mrf.mxu0
    %1356 = vdwg.mxu0
    %1357 = vmatprep.subr.mxu0 0.0
    %1358 = vmatpush1.msra.mxu0 0.0
    %1359 = vmatprep.subr.mxu0 0.0
    %1360 = vmatpush1.msra.mxu0 0.0
    %1361 = vmatprep.subr.mxu0 0.0
    %1362 = vmatpush1.msra.mxu0 0.0
    %1363 = vmatprep.subr.mxu0 0.0
    %1364 = vmatpush1.msra.mxu0 0.0
    %1365 = vmatprep.subr.mxu0 0.0
    %1366 = vmatpush1.msra.mxu0 0.0
    %1367 = vmatprep.subr.mxu0 0.0
    %1368 = vmatpush1.msra.mxu0 0.0
    %1369 = vmatprep.subr.mxu0 0.0
    %1370 = vmatpush1.msra.mxu0 0.0
    %1371 = vmatprep.subr.mxu0 0.0
    %1372 = vmatpush1.msra.mxu0 0.0
    %1373 = vmatprep.subr.mxu0 0.0
    %1374 = vmatpush1.msra.mxu0 0.0
    %1375 = vmatprep.subr.mxu0 0.0
    %1376 = vmatpush1.msra.mxu0 0.0
    %1377 = vmatprep.subr.mxu0 0.0
    %1378 = vmatpush1.msra.mxu0 0.0
    %1379 = vmatprep.subr.mxu0 0.0
    %1380 = vmatpush1.msra.mxu0 0.0
    %1381 = vmatprep.subr.mxu0 0.0
    %v1382 = vand.u32 %v1019, 4294901760
    %v1383 = vsub.f32 %v1019, %v1382
    %v1384 = vand.u32 %v1383, 4294901760
    %1385 = vmatpush1.msra.mxu0 %v1384
    %1386 = vmatprep.subr.mxu0 0.0
    %v1387 = vand.u32 %v1018, 4294901760
    %v1388 = vsub.f32 %v1018, %v1387
    %v1389 = vand.u32 %v1388, 4294901760
    %1390 = vmatpush1.msra.mxu0 %v1389
    %1391 = vmatprep.subr.mxu0 0.0
    %v1392 = vand.u32 %v1017, 4294901760
    %v1393 = vsub.f32 %v1017, %v1392
    %v1394 = vand.u32 %v1393, 4294901760
    %1395 = vmatpush1.msra.mxu0 %v1394
    %1396 = vmatprep.subr.mxu0 0.0
    %v1397 = vand.u32 %v1016, 4294901760
    %v1398 = vsub.f32 %v1016, %v1397
    %v1399 = vand.u32 %v1398, 4294901760
    %1400 = vmatpush1.msra.mxu0 %v1399
    %1401 = vmatprep.subr.mxu0 0.0
    %1402 = vmatpush2.msra.mxu0 0.0
    %1403 = vmatprep.subr.mxu0 0.0
    %1404 = vmatpush2.msra.mxu0 0.0
    %1405 = vmatprep.subr.mxu0 0.0
    %1406 = vmatpush2.msra.mxu0 0.0
    %1407 = vmatprep.subr.mxu0 0.0
    %1408 = vmatpush2.msra.mxu0 0.0
    %1409 = vmatprep.subr.mxu0 0.0
    %1410 = vmatpush2.msra.mxu0 0.0
    %1411 = vmatprep.subr.mxu0 0.0
    %1412 = vmatpush2.msra.mxu0 0.0
    %1413 = vmatprep.subr.mxu0 0.0
    %1414 = vmatpush2.msra.mxu0 0.0
    %1415 = vmatprep.subr.mxu0 0.0
    %1416 = vmatpush2.msra.mxu0 0.0
    %1417 = vmatprep.subr.mxu0 0.0
    %1418 = vmatpush2.msra.mxu0 0.0
    %1419 = vmatprep.subr.mxu0 0.0
    %1420 = vmatpush2.msra.mxu0 0.0
    %1421 = vmatprep.subr.mxu0 0.0
    %1422 = vmatpush2.msra.mxu0 0.0
    %1423 = vmatprep.subr.mxu0 0.0
    %1424 = vmatpush2.msra.mxu0 0.0
    %1425 = vmatprep.subr.mxu0 0.0
    %1426 = vmatpush2.msra.mxu0 0.0
    %1427 = vmatprep.subr.mxu0 0.0
    %1428 = vmatpush2.msra.mxu0 0.0
    %1429 = vmatprep.subr.mxu0 0.0
    %1430 = vmatpush2.msra.mxu0 0.0
    %1431 = vmatprep.subr.mxu0 0.0
    %1432 = vmatpush2.msra.mxu0 0.0
    %1433 = vmatprep.mubr.f32.mxu0 0.0
    %v1434 = vand.u32 %v1028, 4294901760
    %1435 = vmatmul.mubr.f32.gmra.mxu0 %v1434
    %v1436 = vpop.f32.mrf.mxu0
    %v1437 = vadd.f32 %v1354, %v1436
    %v1438 = vpop.f32.mrf.mxu0
    %1439 = vdwg.mxu0
    %1440 = vmatprep.subr.mxu0 0.0
    %1441 = vmatpush1.msra.mxu0 0.0
    %1442 = vmatprep.subr.mxu0 0.0
    %1443 = vmatpush1.msra.mxu0 0.0
    %1444 = vmatprep.subr.mxu0 0.0
    %1445 = vmatpush1.msra.mxu0 0.0
    %1446 = vmatprep.subr.mxu0 0.0
    %1447 = vmatpush1.msra.mxu0 0.0
    %1448 = vmatprep.subr.mxu0 0.0
    %1449 = vmatpush1.msra.mxu0 0.0
    %1450 = vmatprep.subr.mxu0 0.0
    %1451 = vmatpush1.msra.mxu0 0.0
    %1452 = vmatprep.subr.mxu0 0.0
    %1453 = vmatpush1.msra.mxu0 0.0
    %1454 = vmatprep.subr.mxu0 0.0
    %1455 = vmatpush1.msra.mxu0 0.0
    %1456 = vmatprep.subr.mxu0 0.0
    %1457 = vmatpush1.msra.mxu0 0.0
    %1458 = vmatprep.subr.mxu0 0.0
    %1459 = vmatpush1.msra.mxu0 0.0
    %1460 = vmatprep.subr.mxu0 0.0
    %1461 = vmatpush1.msra.mxu0 0.0
    %1462 = vmatprep.subr.mxu0 0.0
    %1463 = vmatpush1.msra.mxu0 0.0
    %1464 = vmatprep.subr.mxu0 0.0
    %v1465 = vand.u32 %v1019, 4294901760
    %1466 = vmatpush1.msra.mxu0 %v1465
    %1467 = vmatprep.subr.mxu0 0.0
    %v1468 = vand.u32 %v1018, 4294901760
    %1469 = vmatpush1.msra.mxu0 %v1468
    %1470 = vmatprep.subr.mxu0 0.0
    %v1471 = vand.u32 %v1017, 4294901760
    %1472 = vmatpush1.msra.mxu0 %v1471
    %1473 = vmatprep.subr.mxu0 0.0
    %v1474 = vand.u32 %v1016, 4294901760
    %1475 = vmatpush1.msra.mxu0 %v1474
    %1476 = vmatprep.subr.mxu0 0.0
    %1477 = vmatpush2.msra.mxu0 0.0
    %1478 = vmatprep.subr.mxu0 0.0
    %1479 = vmatpush2.msra.mxu0 0.0
    %1480 = vmatprep.subr.mxu0 0.0
    %1481 = vmatpush2.msra.mxu0 0.0
    %1482 = vmatprep.subr.mxu0 0.0
    %1483 = vmatpush2.msra.mxu0 0.0
    %1484 = vmatprep.subr.mxu0 0.0
    %1485 = vmatpush2.msra.mxu0 0.0
    %1486 = vmatprep.subr.mxu0 0.0
    %1487 = vmatpush2.msra.mxu0 0.0
    %1488 = vmatprep.subr.mxu0 0.0
    %1489 = vmatpush2.msra.mxu0 0.0
    %1490 = vmatprep.subr.mxu0 0.0
    %1491 = vmatpush2.msra.mxu0 0.0
    %1492 = vmatprep.subr.mxu0 0.0
    %1493 = vmatpush2.msra.mxu0 0.0
    %1494 = vmatprep.subr.mxu0 0.0
    %1495 = vmatpush2.msra.mxu0 0.0
    %1496 = vmatprep.subr.mxu0 0.0
    %1497 = vmatpush2.msra.mxu0 0.0
    %1498 = vmatprep.subr.mxu0 0.0
    %1499 = vmatpush2.msra.mxu0 0.0
    %1500 = vmatprep.subr.mxu0 0.0
    %1501 = vmatpush2.msra.mxu0 0.0
    %1502 = vmatprep.subr.mxu0 0.0
    %1503 = vmatpush2.msra.mxu0 0.0
    %1504 = vmatprep.subr.mxu0 0.0
    %1505 = vmatpush2.msra.mxu0 0.0
    %1506 = vmatprep.subr.mxu0 0.0
    %1507 = vmatpush2.msra.mxu0 0.0
    %1508 = vmatprep.mubr.f32.mxu0 0.0
    %v1509 = vand.u32 %v1028, 4294901760
    %1510 = vmatmul.mubr.f32.gmra.mxu0 %v1509
    %v1511 = vpop.f32.mrf.mxu0
    %v1512 = vadd.f32 %v1437, %v1511
    %v1513 = vpop.f32.mrf.mxu0
    %1514 = vdwg.mxu0
    %vm1515 = vcmask 58368
    %1516 = vst.msk [vmem:[#allocation5] sm:$0x3] %vm1515, %v1512
    // Predicated region
    $region34: #{tpu_custom_call.1} parent=1 // pred_check
      _
    $region35: #{tpu_custom_call.1} parent=1 // pred_check_branch
      %1518 = sbr.rel (0) target = $region37
    $region36: #{tpu_custom_call.1} parent=1 // pred_region
      %s1520 = ssub.s32 32, 32
      %1521 = vsyncadd [#allocation4], %s1520
      %s1523 = sshll.u32 [#allocation5], 4
      %s1524 = int_to_ptr.vmem [resolvable:$true] %s1523
      %1526 = dma.vmem_to_hbm [thread:$0]  %s1524, 32, %s7, [#allocation4]
    $region37: #{tpu_custom_call.1} parent=1 // pred_fallthru
      _
    // Predicated region
    $region38: #{tpu_custom_call.1} parent=1 // pred_check
      _
    $region39: #{tpu_custom_call.1} parent=1 // pred_check_branch
      %1528 = sbr.rel (0) target = $region41
    $region40: #{tpu_custom_call.1} parent=1 // pred_region
      %1529 = dma.done [#allocation4], 32
    $region41: #{tpu_custom_call.1} parent=1 // pred_fallthru
      _
    %1530 = vsyncpa [#allocation3], 1
    %1531 = vsyncpa [#allocation4], 1

// kernel: tpu_custom_call.1
$region0: #{tpu_custom_call.1}
  #allocation0 [shape = 'u32[]', space=smem, size = 0x4, offset = 0x4, fixed_abs, tag = 'smem constant byte address 0x4 - core index']
  #allocation1 [shape = 'u32[144,128]{1,0:T(1,128)}', space=vmem, size = 0x12000, scoped, tag = 'internal scratch']
  %s0 = inlined_call_operand.vmem [shape: f32[2,16], index: 0, kind: input, shape index: {}]
  %s1 = inlined_call_operand.hbm [shape: f32[16,32], index: 1, kind: input, shape index: {}]
  %s2 = inlined_call_operand.vmem [shape: f32[1,32], index: 2, kind: input, shape index: {}]
  %s3 = inlined_call_operand.vmem [shape: f32[32,32], index: 3, kind: input, shape index: {}]
  %s4 = inlined_call_operand.vmem [shape: f32[1,32], index: 4, kind: input, shape index: {}]
  %s5 = inlined_call_operand.vmem [shape: f32[32,8], index: 5, kind: input, shape index: {}]
  %s6 = inlined_call_operand.vmem [shape: f32[1,8], index: 6, kind: input, shape index: {}]
  %s7 = inlined_call_operand.hbm [shape: f32[2,8], index: 7, kind: output, shape index: {}]
  %s8 = sld [smem:[#allocation0]]
  $region42: #{tpu_custom_call.1} parent=0
    _
  %s10 = ssub.s32 1, %s8
  %s11 = scalar_select 0, %s10, %s8
  $region1: #{tpu_custom_call.1} parent=0
    #allocation2 [shape = 'u8[8192]{0}', space=vmem, size = 0x2000, scoped, tag = 'input window, operand 1, single buffered']
    #allocation3 [shape = 's32[1]{0}', space=sflag, size = 0x4, scoped, tag = 'scoped memory for tpu_custom_call.1']
    #allocation4 [shape = 's32[1]{0}', space=sflag, size = 0x4, scoped, tag = 'scoped memory for tpu_custom_call.1']
    #allocation5 [shape = 'u8[1024]{0}', space=vmem, size = 0x400, scoped, tag = 'output window, operand 0, single buffered']
    %12 = vsyncpa [#allocation3], 0
    %13 = vsyncpa [#allocation4], 0
    // Predicated region
    $region2: #{tpu_custom_call.1} parent=1 // pred_check
      _
    $region3: #{tpu_custom_call.1} parent=1 // pred_check_branch
      %15 = sbr.rel (0) target = $region5
    $region4: #{tpu_custom_call.1} parent=1 // pred_region
      _
    $region5: #{tpu_custom_call.1} parent=1 // pred_fallthru
      _
    // Predicated region
    $region6: #{tpu_custom_call.1} parent=1 // pred_check
      _
    $region7: #{tpu_custom_call.1} parent=1 // pred_check_branch
      %17 = sbr.rel (0) target = $region9
    $region8: #{tpu_custom_call.1} parent=1 // pred_region
      %s19 = ssub.s32 256, 256
      %20 = vsyncadd [#allocation3], %s19
      %s21 = sshll.u32 [#allocation2], 4
      %s22 = int_to_ptr.vmem [resolvable:$true] %s21
      %27 = dma.hbm_to_vmem [thread:$0]  %s1, 256, %s22, [#allocation3], 128, 128, 8
    $region9: #{tpu_custom_call.1} parent=1 // pred_fallthru
      _
    // Predicated region
    $region10: #{tpu_custom_call.1} parent=1 // pred_check
      _
    $region11: #{tpu_custom_call.1} parent=1 // pred_check_branch
      %29 = sbr.rel (0) target = $region13
    $region12: #{tpu_custom_call.1} parent=1 // pred_region
      _
    $region13: #{tpu_custom_call.1} parent=1 // pred_fallthru
      _
    // Predicated region
    $region14: #{tpu_custom_call.1} parent=1 // pred_check
      _
    $region15: #{tpu_custom_call.1} parent=1 // pred_check_branch
      %31 = sbr.rel (0) target = $region17
    $region16: #{tpu_custom_call.1} parent=1 // pred_region
      _
    $region17: #{tpu_custom_call.1} parent=1 // pred_fallthru
      _
    // Predicated region
    $region18: #{tpu_custom_call.1} parent=1 // pred_check
      _
    $region19: #{tpu_custom_call.1} parent=1 // pred_check_branch
      %33 = sbr.rel (0) target = $region21
    $region20: #{tpu_custom_call.1} parent=1 // pred_region
      _
    $region21: #{tpu_custom_call.1} parent=1 // pred_fallthru
      _
    // Predicated region
    $region22: #{tpu_custom_call.1} parent=1 // pred_check
      _
    $region23: #{tpu_custom_call.1} parent=1 // pred_check_branch
      %35 = sbr.rel (0) target = $region25
    $region24: #{tpu_custom_call.1} parent=1 // pred_region
      _
    $region25: #{tpu_custom_call.1} parent=1 // pred_fallthru
      _
    // Predicated region
    $region26: #{tpu_custom_call.1} parent=1 // pred_check
      _
    $region27: #{tpu_custom_call.1} parent=1 // pred_check_branch
      %37 = sbr.rel (0) target = $region29
    $region28: #{tpu_custom_call.1} parent=1 // pred_region
      _
    $region29: #{tpu_custom_call.1} parent=1 // pred_fallthru
      _
    // Predicated region
    $region30: #{tpu_custom_call.1} parent=1 // pred_check
      _
    $region31: #{tpu_custom_call.1} parent=1 // pred_check_branch
      %39 = sbr.rel (0) target = $region33
    $region32: #{tpu_custom_call.1} parent=1 // pred_region
      %40 = dma.done [#allocation3], 256
    $region33: #{tpu_custom_call.1} parent=1 // pred_fallthru
      _
    %v41 = vld [vmem:[%s0] sm:$0x3]
    %v42 = vld [vmem:[#allocation2] sm:$0xff]
    %v43 = vld [vmem:[#allocation2 + $0x8] sm:$0xff]
    %v44 = vld [vmem:[%s2] sm:$0x1]
    %v46 = vlaneseq
    %v47 = vshrl.u32 %v46, 7
    %v48 = vsub.s32 0, %v47
    %v49 = vrot.slane %v44, %v48
    %vm51 = vcmask 130048
    %v53 = vsel %vm51, %v41, 0
    %55 = vmatprep.subr.mxu0 0.0
    %56 = vmatpush1.msra.mxu0 0.0
    %57 = vmatprep.subr.mxu0 0.0
    %58 = vmatpush1.msra.mxu0 0.0
    %59 = vmatprep.subr.mxu0 0.0
    %60 = vmatpush1.msra.mxu0 0.0
    %61 = vmatprep.subr.mxu0 0.0
    %62 = vmatpush1.msra.mxu0 0.0
    %63 = vmatprep.subr.mxu0 0.0
    %64 = vmatpush1.msra.mxu0 0.0
    %65 = vmatprep.subr.mxu0 0.0
    %66 = vmatpush1.msra.mxu0 0.0
    %67 = vmatprep.subr.mxu0 0.0
    %68 = vmatpush1.msra.mxu0 0.0
    %69 = vmatprep.subr.mxu0 0.0
    %70 = vmatpush1.msra.mxu0 0.0
    %71 = vmatprep.subr.mxu0 0.0
    %72 = vmatpush1.msra.mxu0 0.0
    %73 = vmatprep.subr.mxu0 0.0
    %74 = vmatpush1.msra.mxu0 0.0
    %75 = vmatprep.subr.mxu0 0.0
    %76 = vmatpush1.msra.mxu0 0.0
    %77 = vmatprep.subr.mxu0 0.0
    %78 = vmatpush1.msra.mxu0 0.0
    %79 = vmatprep.subr.mxu0 0.0
    %80 = vmatpush1.msra.mxu0 0.0
    %81 = vmatprep.subr.mxu0 0.0
    %82 = vmatpush1.msra.mxu0 0.0
    %83 = vmatprep.subr.mxu0 0.0
    %v84 = vand.u32 %v43, 4294901760
    %85 = vmatpush1.msra.mxu0 %v84
    %86 = vmatprep.subr.mxu0 0.0
    %v87 = vand.u32 %v42, 4294901760
    %88 = vmatpush1.msra.mxu0 %v87
    %89 = vmatprep.subr.mxu0 0.0
    %90 = vmatpush2.msra.mxu0 0.0
    %91 = vmatprep.subr.mxu0 0.0
    %92 = vmatpush2.msra.mxu0 0.0
    %93 = vmatprep.subr.mxu0 0.0
    %94 = vmatpush2.msra.mxu0 0.0
    %95 = vmatprep.subr.mxu0 0.0
    %96 = vmatpush2.msra.mxu0 0.0
    %97 = vmatprep.subr.mxu0 0.0
    %98 = vmatpush2.msra.mxu0 0.0
    %99 = vmatprep.subr.mxu0 0.0
    %100 = vmatpush2.msra.mxu0 0.0
    %101 = vmatprep.subr.mxu0 0.0
    %102 = vmatpush2.msra.mxu0 0.0
    %103 = vmatprep.subr.mxu0 0.0
    %104 = vmatpush2.msra.mxu0 0.0
    %105 = vmatprep.subr.mxu0 0.0
    %106 = vmatpush2.msra.mxu0 0.0
    %107 = vmatprep.subr.mxu0 0.0
    %108 = vmatpush2.msra.mxu0 0.0
    %109 = vmatprep.subr.mxu0 0.0
    %110 = vmatpush2.msra.mxu0 0.0
    %111 = vmatprep.subr.mxu0 0.0
    %112 = vmatpush2.msra.mxu0 0.0
    %113 = vmatprep.subr.mxu0 0.0
    %114 = vmatpush2.msra.mxu0 0.0
    %115 = vmatprep.subr.mxu0 0.0
    %116 = vmatpush2.msra.mxu0 0.0
    %117 = vmatprep.subr.mxu0 0.0
    %118 = vmatpush2.msra.mxu0 0.0
    %119 = vmatprep.subr.mxu0 0.0
    %120 = vmatpush2.msra.mxu0 0.0
    %121 = vmatprep.mubr.f32.mxu0 0.0
    %v122 = vand.u32 %v53, 4294901760
    %v123 = vsub.f32 %v53, %v122
    %v124 = vand.u32 %v123, 4294901760
    %v125 = vsub.f32 %v123, %v124
    %v126 = vand.u32 %v125, 4294901760
    %127 = vmatmul.mubr.f32.gmra.mxu0 %v126
    %v128 = vpop.f32.mrf.mxu0
    %v129 = vadd.f32 %v49, %v128
    %v130 = vpop.f32.mrf.mxu0
    %131 = vdwg.mxu0
    %132 = vmatprep.subr.mxu0 0.0
    %133 = vmatpush1.msra.mxu0 0.0
    %134 = vmatprep.subr.mxu0 0.0
    %135 = vmatpush1.msra.mxu0 0.0
    %136 = vmatprep.subr.mxu0 0.0
    %137 = vmatpush1.msra.mxu0 0.0
    %138 = vmatprep.subr.mxu0 0.0
    %139 = vmatpush1.msra.mxu0 0.0
    %140 = vmatprep.subr.mxu0 0.0
    %141 = vmatpush1.msra.mxu0 0.0
    %142 = vmatprep.subr.mxu0 0.0
    %143 = vmatpush1.msra.mxu0 0.0
    %144 = vmatprep.subr.mxu0 0.0
    %145 = vmatpush1.msra.mxu0 0.0
    %146 = vmatprep.subr.mxu0 0.0
    %147 = vmatpush1.msra.mxu0 0.0
    %148 = vmatprep.subr.mxu0 0.0
    %149 = vmatpush1.msra.mxu0 0.0
    %150 = vmatprep.subr.mxu0 0.0
    %151 = vmatpush1.msra.mxu0 0.0
    %152 = vmatprep.subr.mxu0 0.0
    %153 = vmatpush1.msra.mxu0 0.0
    %154 = vmatprep.subr.mxu0 0.0
    %155 = vmatpush1.msra.mxu0 0.0
    %156 = vmatprep.subr.mxu0 0.0
    %157 = vmatpush1.msra.mxu0 0.0
    %158 = vmatprep.subr.mxu0 0.0
    %159 = vmatpush1.msra.mxu0 0.0
    %160 = vmatprep.subr.mxu0 0.0
    %v161 = vand.u32 %v43, 4294901760
    %v162 = vsub.f32 %v43, %v161
    %v163 = vand.u32 %v162, 4294901760
    %v164 = vsub.f32 %v162, %v163
    %v165 = vand.u32 %v164, 4294901760
    %166 = vmatpush1.msra.mxu0 %v165
    %167 = vmatprep.subr.mxu0 0.0
    %v168 = vand.u32 %v42, 4294901760
    %v169 = vsub.f32 %v42, %v168
    %v170 = vand.u32 %v169, 4294901760
    %v171 = vsub.f32 %v169, %v170
    %v172 = vand.u32 %v171, 4294901760
    %173 = vmatpush1.msra.mxu0 %v172
    %174 = vmatprep.subr.mxu0 0.0
    %175 = vmatpush2.msra.mxu0 0.0
    %176 = vmatprep.subr.mxu0 0.0
    %177 = vmatpush2.msra.mxu0 0.0
    %178 = vmatprep.subr.mxu0 0.0
    %179 = vmatpush2.msra.mxu0 0.0
    %180 = vmatprep.subr.mxu0 0.0
    %181 = vmatpush2.msra.mxu0 0.0
    %182 = vmatprep.subr.mxu0 0.0
    %183 = vmatpush2.msra.mxu0 0.0
    %184 = vmatprep.subr.mxu0 0.0
    %185 = vmatpush2.msra.mxu0 0.0
    %186 = vmatprep.subr.mxu0 0.0
    %187 = vmatpush2.msra.mxu0 0.0
    %188 = vmatprep.subr.mxu0 0.0
    %189 = vmatpush2.msra.mxu0 0.0
    %190 = vmatprep.subr.mxu0 0.0
    %191 = vmatpush2.msra.mxu0 0.0
    %192 = vmatprep.subr.mxu0 0.0
    %193 = vmatpush2.msra.mxu0 0.0
    %194 = vmatprep.subr.mxu0 0.0
    %195 = vmatpush2.msra.mxu0 0.0
    %196 = vmatprep.subr.mxu0 0.0
    %197 = vmatpush2.msra.mxu0 0.0
    %198 = vmatprep.subr.mxu0 0.0
    %199 = vmatpush2.msra.mxu0 0.0
    %200 = vmatprep.subr.mxu0 0.0
    %201 = vmatpush2.msra.mxu0 0.0
    %202 = vmatprep.subr.mxu0 0.0
    %203 = vmatpush2.msra.mxu0 0.0
    %204 = vmatprep.subr.mxu0 0.0
    %205 = vmatpush2.msra.mxu0 0.0
    %206 = vmatprep.mubr.f32.mxu0 0.0
    %v207 = vand.u32 %v53, 4294901760
    %208 = vmatmul.mubr.f32.gmra.mxu0 %v207
    %v209 = vpop.f32.mrf.mxu0
    %v210 = vadd.f32 %v129, %v209
    %v211 = vpop.f32.mrf.mxu0
    %212 = vdwg.mxu0
    %213 = vmatprep.subr.mxu0 0.0
    %214 = vmatpush1.msra.mxu0 0.0
    %215 = vmatprep.subr.mxu0 0.0
    %216 = vmatpush1.msra.mxu0 0.0
    %217 = vmatprep.subr.mxu0 0.0
    %218 = vmatpush1.msra.mxu0 0.0
    %219 = vmatprep.subr.mxu0 0.0
    %220 = vmatpush1.msra.mxu0 0.0
    %221 = vmatprep.subr.mxu0 0.0
    %222 = vmatpush1.msra.mxu0 0.0
    %223 = vmatprep.subr.mxu0 0.0
    %224 = vmatpush1.msra.mxu0 0.0
    %225 = vmatprep.subr.mxu0 0.0
    %226 = vmatpush1.msra.mxu0 0.0
    %227 = vmatprep.subr.mxu0 0.0
    %228 = vmatpush1.msra.mxu0 0.0
    %229 = vmatprep.subr.mxu0 0.0
    %230 = vmatpush1.msra.mxu0 0.0
    %231 = vmatprep.subr.mxu0 0.0
    %232 = vmatpush1.msra.mxu0 0.0
    %233 = vmatprep.subr.mxu0 0.0
    %234 = vmatpush1.msra.mxu0 0.0
    %235 = vmatprep.subr.mxu0 0.0
    %236 = vmatpush1.msra.mxu0 0.0
    %237 = vmatprep.subr.mxu0 0.0
    %238 = vmatpush1.msra.mxu0 0.0
    %239 = vmatprep.subr.mxu0 0.0
    %240 = vmatpush1.msra.mxu0 0.0
    %241 = vmatprep.subr.mxu0 0.0
    %v242 = vand.u32 %v43, 4294901760
    %v243 = vsub.f32 %v43, %v242
    %244 = vmatpush1.msra.mxu0 %v243
    %245 = vmatprep.subr.mxu0 0.0
    %v246 = vand.u32 %v42, 4294901760
    %v247 = vsub.f32 %v42, %v246
    %248 = vmatpush1.msra.mxu0 %v247
    %249 = vmatprep.subr.mxu0 0.0
    %250 = vmatpush2.msra.mxu0 0.0
    %251 = vmatprep.subr.mxu0 0.0
    %252 = vmatpush2.msra.mxu0 0.0
    %253 = vmatprep.subr.mxu0 0.0
    %254 = vmatpush2.msra.mxu0 0.0
    %255 = vmatprep.subr.mxu0 0.0
    %256 = vmatpush2.msra.mxu0 0.0
    %257 = vmatprep.subr.mxu0 0.0
    %258 = vmatpush2.msra.mxu0 0.0
    %259 = vmatprep.subr.mxu0 0.0
    %260 = vmatpush2.msra.mxu0 0.0
    %261 = vmatprep.subr.mxu0 0.0
    %262 = vmatpush2.msra.mxu0 0.0
    %263 = vmatprep.subr.mxu0 0.0
    %264 = vmatpush2.msra.mxu0 0.0
    %265 = vmatprep.subr.mxu0 0.0
    %266 = vmatpush2.msra.mxu0 0.0
    %267 = vmatprep.subr.mxu0 0.0
    %268 = vmatpush2.msra.mxu0 0.0
    %269 = vmatprep.subr.mxu0 0.0
    %270 = vmatpush2.msra.mxu0 0.0
    %271 = vmatprep.subr.mxu0 0.0
    %272 = vmatpush2.msra.mxu0 0.0
    %273 = vmatprep.subr.mxu0 0.0
    %274 = vmatpush2.msra.mxu0 0.0
    %275 = vmatprep.subr.mxu0 0.0
    %276 = vmatpush2.msra.mxu0 0.0
    %277 = vmatprep.subr.mxu0 0.0
    %278 = vmatpush2.msra.mxu0 0.0
    %279 = vmatprep.subr.mxu0 0.0
    %280 = vmatpush2.msra.mxu0 0.0
    %281 = vmatprep.mubr.f32.mxu0 0.0
    %v282 = vand.u32 %v53, 4294901760
    %v283 = vsub.f32 %v53, %v282
    %284 = vmatmul.mubr.f32.gmra.mxu0 %v283
    %v285 = vpop.f32.mrf.mxu0
    %v286 = vadd.f32 %v210, %v285
    %v287 = vpop.f32.mrf.mxu0
    %288 = vdwg.mxu0
    %289 = vmatprep.subr.mxu0 0.0
    %290 = vmatpush1.msra.mxu0 0.0
    %291 = vmatprep.subr.mxu0 0.0
    %292 = vmatpush1.msra.mxu0 0.0
    %293 = vmatprep.subr.mxu0 0.0
    %294 = vmatpush1.msra.mxu0 0.0
    %295 = vmatprep.subr.mxu0 0.0
    %296 = vmatpush1.msra.mxu0 0.0
    %297 = vmatprep.subr.mxu0 0.0
    %298 = vmatpush1.msra.mxu0 0.0
    %299 = vmatprep.subr.mxu0 0.0
    %300 = vmatpush1.msra.mxu0 0.0
    %301 = vmatprep.subr.mxu0 0.0
    %302 = vmatpush1.msra.mxu0 0.0
    %303 = vmatprep.subr.mxu0 0.0
    %304 = vmatpush1.msra.mxu0 0.0
    %305 = vmatprep.subr.mxu0 0.0
    %306 = vmatpush1.msra.mxu0 0.0
    %307 = vmatprep.subr.mxu0 0.0
    %308 = vmatpush1.msra.mxu0 0.0
    %309 = vmatprep.subr.mxu0 0.0
    %310 = vmatpush1.msra.mxu0 0.0
    %311 = vmatprep.subr.mxu0 0.0
    %312 = vmatpush1.msra.mxu0 0.0
    %313 = vmatprep.subr.mxu0 0.0
    %314 = vmatpush1.msra.mxu0 0.0
    %315 = vmatprep.subr.mxu0 0.0
    %316 = vmatpush1.msra.mxu0 0.0
    %317 = vmatprep.subr.mxu0 0.0
    %v318 = vand.u32 %v43, 4294901760
    %319 = vmatpush1.msra.mxu0 %v318
    %320 = vmatprep.subr.mxu0 0.0
    %v321 = vand.u32 %v42, 4294901760
    %322 = vmatpush1.msra.mxu0 %v321
    %323 = vmatprep.subr.mxu0 0.0
    %324 = vmatpush2.msra.mxu0 0.0
    %325 = vmatprep.subr.mxu0 0.0
    %326 = vmatpush2.msra.mxu0 0.0
    %327 = vmatprep.subr.mxu0 0.0
    %328 = vmatpush2.msra.mxu0 0.0
    %329 = vmatprep.subr.mxu0 0.0
    %330 = vmatpush2.msra.mxu0 0.0
    %331 = vmatprep.subr.mxu0 0.0
    %332 = vmatpush2.msra.mxu0 0.0
    %333 = vmatprep.subr.mxu0 0.0
    %334 = vmatpush2.msra.mxu0 0.0
    %335 = vmatprep.subr.mxu0 0.0
    %336 = vmatpush2.msra.mxu0 0.0
    %337 = vmatprep.subr.mxu0 0.0
    %338 = vmatpush2.msra.mxu0 0.0
    %339 = vmatprep.subr.mxu0 0.0
    %340 = vmatpush2.msra.mxu0 0.0
    %341 = vmatprep.subr.mxu0 0.0
    %342 = vmatpush2.msra.mxu0 0.0
    %343 = vmatprep.subr.mxu0 0.0
    %344 = vmatpush2.msra.mxu0 0.0
    %345 = vmatprep.subr.mxu0 0.0
    %346 = vmatpush2.msra.mxu0 0.0
    %347 = vmatprep.subr.mxu0 0.0
    %348 = vmatpush2.msra.mxu0 0.0
    %349 = vmatprep.subr.mxu0 0.0
    %350 = vmatpush2.msra.mxu0 0.0
    %351 = vmatprep.subr.mxu0 0.0
    %352 = vmatpush2.msra.mxu0 0.0
    %353 = vmatprep.subr.mxu0 0.0
    %354 = vmatpush2.msra.mxu0 0.0
    %355 = vmatprep.mubr.f32.mxu0 0.0
    %v356 = vand.u32 %v53, 4294901760
    %v357 = vsub.f32 %v53, %v356
    %v358 = vand.u32 %v357, 4294901760
    %359 = vmatmul.mubr.f32.gmra.mxu0 %v358
    %v360 = vpop.f32.mrf.mxu0
    %v361 = vadd.f32 %v286, %v360
    %v362 = vpop.f32.mrf.mxu0
    %363 = vdwg.mxu0
    %364 = vmatprep.subr.mxu0 0.0
    %365 = vmatpush1.msra.mxu0 0.0
    %366 = vmatprep.subr.mxu0 0.0
    %367 = vmatpush1.msra.mxu0 0.0
    %368 = vmatprep.subr.mxu0 0.0
    %369 = vmatpush1.msra.mxu0 0.0
    %370 = vmatprep.subr.mxu0 0.0
    %371 = vmatpush1.msra.mxu0 0.0
    %372 = vmatprep.subr.mxu0 0.0
    %373 = vmatpush1.msra.mxu0 0.0
    %374 = vmatprep.subr.mxu0 0.0
    %375 = vmatpush1.msra.mxu0 0.0
    %376 = vmatprep.subr.mxu0 0.0
    %377 = vmatpush1.msra.mxu0 0.0
    %378 = vmatprep.subr.mxu0 0.0
    %379 = vmatpush1.msra.mxu0 0.0
    %380 = vmatprep.subr.mxu0 0.0
    %381 = vmatpush1.msra.mxu0 0.0
    %382 = vmatprep.subr.mxu0 0.0
    %383 = vmatpush1.msra.mxu0 0.0
    %384 = vmatprep.subr.mxu0 0.0
    %385 = vmatpush1.msra.mxu0 0.0
    %386 = vmatprep.subr.mxu0 0.0
    %387 = vmatpush1.msra.mxu0 0.0
    %388 = vmatprep.subr.mxu0 0.0
    %389 = vmatpush1.msra.mxu0 0.0
    %390 = vmatprep.subr.mxu0 0.0
    %391 = vmatpush1.msra.mxu0 0.0
    %392 = vmatprep.subr.mxu0 0.0
    %v393 = vand.u32 %v43, 4294901760
    %v394 = vsub.f32 %v43, %v393
    %v395 = vand.u32 %v394, 4294901760
    %396 = vmatpush1.msra.mxu0 %v395
    %397 = vmatprep.subr.mxu0 0.0
    %v398 = vand.u32 %v42, 4294901760
    %v399 = vsub.f32 %v42, %v398
    %v400 = vand.u32 %v399, 4294901760
    %401 = vmatpush1.msra.mxu0 %v400
    %402 = vmatprep.subr.mxu0 0.0
    %403 = vmatpush2.msra.mxu0 0.0
    %404 = vmatprep.subr.mxu0 0.0
    %405 = vmatpush2.msra.mxu0 0.0
    %406 = vmatprep.subr.mxu0 0.0
    %407 = vmatpush2.msra.mxu0 0.0
    %408 = vmatprep.subr.mxu0 0.0
    %409 = vmatpush2.msra.mxu0 0.0
    %410 = vmatprep.subr.mxu0 0.0
    %411 = vmatpush2.msra.mxu0 0.0
    %412 = vmatprep.subr.mxu0 0.0
    %413 = vmatpush2.msra.mxu0 0.0
    %414 = vmatprep.subr.mxu0 0.0
    %415 = vmatpush2.msra.mxu0 0.0
    %416 = vmatprep.subr.mxu0 0.0
    %417 = vmatpush2.msra.mxu0 0.0
    %418 = vmatprep.subr.mxu0 0.0
    %419 = vmatpush2.msra.mxu0 0.0
    %420 = vmatprep.subr.mxu0 0.0
    %421 = vmatpush2.msra.mxu0 0.0
    %422 = vmatprep.subr.mxu0 0.0
    %423 = vmatpush2.msra.mxu0 0.0
    %424 = vmatprep.subr.mxu0 0.0
    %425 = vmatpush2.msra.mxu0 0.0
    %426 = vmatprep.subr.mxu0 0.0
    %427 = vmatpush2.msra.mxu0 0.0
    %428 = vmatprep.subr.mxu0 0.0
    %429 = vmatpush2.msra.mxu0 0.0
    %430 = vmatprep.subr.mxu0 0.0
    %431 = vmatpush2.msra.mxu0 0.0
    %432 = vmatprep.subr.mxu0 0.0
    %433 = vmatpush2.msra.mxu0 0.0
    %434 = vmatprep.mubr.f32.mxu0 0.0
    %v435 = vand.u32 %v53, 4294901760
    %436 = vmatmul.mubr.f32.gmra.mxu0 %v435
    %v437 = vpop.f32.mrf.mxu0
    %v438 = vadd.f32 %v361, %v437
    %v439 = vpop.f32.mrf.mxu0
    %440 = vdwg.mxu0
    %441 = vmatprep.subr.mxu0 0.0
    %442 = vmatpush1.msra.mxu0 0.0
    %443 = vmatprep.subr.mxu0 0.0
    %444 = vmatpush1.msra.mxu0 0.0
    %445 = vmatprep.subr.mxu0 0.0
    %446 = vmatpush1.msra.mxu0 0.0
    %447 = vmatprep.subr.mxu0 0.0
    %448 = vmatpush1.msra.mxu0 0.0
    %449 = vmatprep.subr.mxu0 0.0
    %450 = vmatpush1.msra.mxu0 0.0
    %451 = vmatprep.subr.mxu0 0.0
    %452 = vmatpush1.msra.mxu0 0.0
    %453 = vmatprep.subr.mxu0 0.0
    %454 = vmatpush1.msra.mxu0 0.0
    %455 = vmatprep.subr.mxu0 0.0
    %456 = vmatpush1.msra.mxu0 0.0
    %457 = vmatprep.subr.mxu0 0.0
    %458 = vmatpush1.msra.mxu0 0.0
    %459 = vmatprep.subr.mxu0 0.0
    %460 = vmatpush1.msra.mxu0 0.0
    %461 = vmatprep.subr.mxu0 0.0
    %462 = vmatpush1.msra.mxu0 0.0
    %463 = vmatprep.subr.mxu0 0.0
    %464 = vmatpush1.msra.mxu0 0.0
    %465 = vmatprep.subr.mxu0 0.0
    %466 = vmatpush1.msra.mxu0 0.0
    %467 = vmatprep.subr.mxu0 0.0
    %468 = vmatpush1.msra.mxu0 0.0
    %469 = vmatprep.subr.mxu0 0.0
    %v470 = vand.u32 %v43, 4294901760
    %471 = vmatpush1.msra.mxu0 %v470
    %472 = vmatprep.subr.mxu0 0.0
    %v473 = vand.u32 %v42, 4294901760
    %474 = vmatpush1.msra.mxu0 %v473
    %475 = vmatprep.subr.mxu0 0.0
    %476 = vmatpush2.msra.mxu0 0.0
    %477 = vmatprep.subr.mxu0 0.0
    %478 = vmatpush2.msra.mxu0 0.0
    %479 = vmatprep.subr.mxu0 0.0
    %480 = vmatpush2.msra.mxu0 0.0
    %481 = vmatprep.subr.mxu0 0.0
    %482 = vmatpush2.msra.mxu0 0.0
    %483 = vmatprep.subr.mxu0 0.0
    %484 = vmatpush2.msra.mxu0 0.0
    %485 = vmatprep.subr.mxu0 0.0
    %486 = vmatpush2.msra.mxu0 0.0
    %487 = vmatprep.subr.mxu0 0.0
    %488 = vmatpush2.msra.mxu0 0.0
    %489 = vmatprep.subr.mxu0 0.0
    %490 = vmatpush2.msra.mxu0 0.0
    %491 = vmatprep.subr.mxu0 0.0
    %492 = vmatpush2.msra.mxu0 0.0
    %493 = vmatprep.subr.mxu0 0.0
    %494 = vmatpush2.msra.mxu0 0.0
    %495 = vmatprep.subr.mxu0 0.0
    %496 = vmatpush2.msra.mxu0 0.0
    %497 = vmatprep.subr.mxu0 0.0
    %498 = vmatpush2.msra.mxu0 0.0
    %499 = vmatprep.subr.mxu0 0.0
    %500 = vmatpush2.msra.mxu0 0.0
    %501 = vmatprep.subr.mxu0 0.0
    %502 = vmatpush2.msra.mxu0 0.0
    %503 = vmatprep.subr.mxu0 0.0
    %504 = vmatpush2.msra.mxu0 0.0
    %505 = vmatprep.subr.mxu0 0.0
    %506 = vmatpush2.msra.mxu0 0.0
    %507 = vmatprep.mubr.f32.mxu0 0.0
    %v508 = vand.u32 %v53, 4294901760
    %509 = vmatmul.mubr.f32.gmra.mxu0 %v508
    %v510 = vpop.f32.mrf.mxu0
    %v511 = vadd.f32 %v438, %v510
    %v512 = vpop.f32.mrf.mxu0
    %513 = vdwg.mxu0
    %v514 = vmax.f32 %v511, 0.0
    %v515 = vld [vmem:[%s3] sm:$0xff]
    %v516 = vld [vmem:[%s3 + $0x8] sm:$0xff]
    %v517 = vld [vmem:[%s3 + $0x10] sm:$0xff]
    %v518 = vld [vmem:[%s3 + $0x18] sm:$0xff]
    %v519 = vld [vmem:[%s4] sm:$0x1]
    %v521 = vlaneseq
    %v522 = vshrl.u32 %v521, 7
    %v523 = vsub.s32 0, %v522
    %v524 = vrot.slane %v519, %v523
    %vm526 = vcmask 261120
    %v528 = vsel %vm526, %v514, 0
    %530 = vmatprep.subr.mxu0 0.0
    %531 = vmatpush1.msra.mxu0 0.0
    %532 = vmatprep.subr.mxu0 0.0
    %533 = vmatpush1.msra.mxu0 0.0
    %534 = vmatprep.subr.mxu0 0.0
    %535 = vmatpush1.msra.mxu0 0.0
    %536 = vmatprep.subr.mxu0 0.0
    %537 = vmatpush1.msra.mxu0 0.0
    %538 = vmatprep.subr.mxu0 0.0
    %539 = vmatpush1.msra.mxu0 0.0
    %540 = vmatprep.subr.mxu0 0.0
    %541 = vmatpush1.msra.mxu0 0.0
    %542 = vmatprep.subr.mxu0 0.0
    %543 = vmatpush1.msra.mxu0 0.0
    %544 = vmatprep.subr.mxu0 0.0
    %545 = vmatpush1.msra.mxu0 0.0
    %546 = vmatprep.subr.mxu0 0.0
    %547 = vmatpush1.msra.mxu0 0.0
    %548 = vmatprep.subr.mxu0 0.0
    %549 = vmatpush1.msra.mxu0 0.0
    %550 = vmatprep.subr.mxu0 0.0
    %551 = vmatpush1.msra.mxu0 0.0
    %552 = vmatprep.subr.mxu0 0.0
    %553 = vmatpush1.msra.mxu0 0.0
    %554 = vmatprep.subr.mxu0 0.0
    %v555 = vand.u32 %v518, 4294901760
    %556 = vmatpush1.msra.mxu0 %v555
    %557 = vmatprep.subr.mxu0 0.0
    %v558 = vand.u32 %v517, 4294901760
    %559 = vmatpush1.msra.mxu0 %v558
    %560 = vmatprep.subr.mxu0 0.0
    %v561 = vand.u32 %v516, 4294901760
    %562 = vmatpush1.msra.mxu0 %v561
    %563 = vmatprep.subr.mxu0 0.0
    %v564 = vand.u32 %v515, 4294901760
    %565 = vmatpush1.msra.mxu0 %v564
    %566 = vmatprep.subr.mxu0 0.0
    %567 = vmatpush2.msra.mxu0 0.0
    %568 = vmatprep.subr.mxu0 0.0
    %569 = vmatpush2.msra.mxu0 0.0
    %570 = vmatprep.subr.mxu0 0.0
    %571 = vmatpush2.msra.mxu0 0.0
    %572 = vmatprep.subr.mxu0 0.0
    %573 = vmatpush2.msra.mxu0 0.0
    %574 = vmatprep.subr.mxu0 0.0
    %575 = vmatpush2.msra.mxu0 0.0
    %576 = vmatprep.subr.mxu0 0.0
    %577 = vmatpush2.msra.mxu0 0.0
    %578 = vmatprep.subr.mxu0 0.0
    %579 = vmatpush2.msra.mxu0 0.0
    %580 = vmatprep.subr.mxu0 0.0
    %581 = vmatpush2.msra.mxu0 0.0
    %582 = vmatprep.subr.mxu0 0.0
    %583 = vmatpush2.msra.mxu0 0.0
    %584 = vmatprep.subr.mxu0 0.0
    %585 = vmatpush2.msra.mxu0 0.0
    %586 = vmatprep.subr.mxu0 0.0
    %587 = vmatpush2.msra.mxu0 0.0
    %588 = vmatprep.subr.mxu0 0.0
    %589 = vmatpush2.msra.mxu0 0.0
    %590 = vmatprep.subr.mxu0 0.0
    %591 = vmatpush2.msra.mxu0 0.0
    %592 = vmatprep.subr.mxu0 0.0
    %593 = vmatpush2.msra.mxu0 0.0
    %594 = vmatprep.subr.mxu0 0.0
    %595 = vmatpush2.msra.mxu0 0.0
    %596 = vmatprep.subr.mxu0 0.0
    %597 = vmatpush2.msra.mxu0 0.0
    %598 = vmatprep.mubr.f32.mxu0 0.0
    %v599 = vand.u32 %v528, 4294901760
    %v600 = vsub.f32 %v528, %v599
    %v601 = vand.u32 %v600, 4294901760
    %v602 = vsub.f32 %v600, %v601
    %v603 = vand.u32 %v602, 4294901760
    %604 = vmatmul.mubr.f32.gmra.mxu0 %v603
    %v605 = vpop.f32.mrf.mxu0
    %v606 = vadd.f32 %v524, %v605
    %v607 = vpop.f32.mrf.mxu0
    %608 = vdwg.mxu0
    %609 = vmatprep.subr.mxu0 0.0
    %610 = vmatpush1.msra.mxu0 0.0
    %611 = vmatprep.subr.mxu0 0.0
    %612 = vmatpush1.msra.mxu0 0.0
    %613 = vmatprep.subr.mxu0 0.0
    %614 = vmatpush1.msra.mxu0 0.0
    %615 = vmatprep.subr.mxu0 0.0
    %616 = vmatpush1.msra.mxu0 0.0
    %617 = vmatprep.subr.mxu0 0.0
    %618 = vmatpush1.msra.mxu0 0.0
    %619 = vmatprep.subr.mxu0 0.0
    %620 = vmatpush1.msra.mxu0 0.0
    %621 = vmatprep.subr.mxu0 0.0
    %622 = vmatpush1.msra.mxu0 0.0
    %623 = vmatprep.subr.mxu0 0.0
    %624 = vmatpush1.msra.mxu0 0.0
    %625 = vmatprep.subr.mxu0 0.0
    %626 = vmatpush1.msra.mxu0 0.0
    %627 = vmatprep.subr.mxu0 0.0
    %628 = vmatpush1.msra.mxu0 0.0
    %629 = vmatprep.subr.mxu0 0.0
    %630 = vmatpush1.msra.mxu0 0.0
    %631 = vmatprep.subr.mxu0 0.0
    %632 = vmatpush1.msra.mxu0 0.0
    %633 = vmatprep.subr.mxu0 0.0
    %v634 = vand.u32 %v518, 4294901760
    %v635 = vsub.f32 %v518, %v634
    %v636 = vand.u32 %v635, 4294901760
    %v637 = vsub.f32 %v635, %v636
    %v638 = vand.u32 %v637, 4294901760
    %639 = vmatpush1.msra.mxu0 %v638
    %640 = vmatprep.subr.mxu0 0.0
    %v641 = vand.u32 %v517, 4294901760
    %v642 = vsub.f32 %v517, %v641
    %v643 = vand.u32 %v642, 4294901760
    %v644 = vsub.f32 %v642, %v643
    %v645 = vand.u32 %v644, 4294901760
    %646 = vmatpush1.msra.mxu0 %v645
    %647 = vmatprep.subr.mxu0 0.0
    %v648 = vand.u32 %v516, 4294901760
    %v649 = vsub.f32 %v516, %v648
    %v650 = vand.u32 %v649, 4294901760
    %v651 = vsub.f32 %v649, %v650
    %v652 = vand.u32 %v651, 4294901760
    %653 = vmatpush1.msra.mxu0 %v652
    %654 = vmatprep.subr.mxu0 0.0
    %v655 = vand.u32 %v515, 4294901760
    %v656 = vsub.f32 %v515, %v655
    %v657 = vand.u32 %v656, 4294901760
    %v658 = vsub.f32 %v656, %v657
    %v659 = vand.u32 %v658, 4294901760
    %660 = vmatpush1.msra.mxu0 %v659
    %661 = vmatprep.subr.mxu0 0.0
    %662 = vmatpush2.msra.mxu0 0.0
    %663 = vmatprep.subr.mxu0 0.0
    %664 = vmatpush2.msra.mxu0 0.0
    %665 = vmatprep.subr.mxu0 0.0
    %666 = vmatpush2.msra.mxu0 0.0
    %667 = vmatprep.subr.mxu0 0.0
    %668 = vmatpush2.msra.mxu0 0.0
    %669 = vmatprep.subr.mxu0 0.0
    %670 = vmatpush2.msra.mxu0 0.0
    %671 = vmatprep.subr.mxu0 0.0
    %672 = vmatpush2.msra.mxu0 0.0
    %673 = vmatprep.subr.mxu0 0.0
    %674 = vmatpush2.msra.mxu0 0.0
    %675 = vmatprep.subr.mxu0 0.0
    %676 = vmatpush2.msra.mxu0 0.0
    %677 = vmatprep.subr.mxu0 0.0
    %678 = vmatpush2.msra.mxu0 0.0
    %679 = vmatprep.subr.mxu0 0.0
    %680 = vmatpush2.msra.mxu0 0.0
    %681 = vmatprep.subr.mxu0 0.0
    %682 = vmatpush2.msra.mxu0 0.0
    %683 = vmatprep.subr.mxu0 0.0
    %684 = vmatpush2.msra.mxu0 0.0
    %685 = vmatprep.subr.mxu0 0.0
    %686 = vmatpush2.msra.mxu0 0.0
    %687 = vmatprep.subr.mxu0 0.0
    %688 = vmatpush2.msra.mxu0 0.0
    %689 = vmatprep.subr.mxu0 0.0
    %690 = vmatpush2.msra.mxu0 0.0
    %691 = vmatprep.subr.mxu0 0.0
    %692 = vmatpush2.msra.mxu0 0.0
    %693 = vmatprep.mubr.f32.mxu0 0.0
    %v694 = vand.u32 %v528, 4294901760
    %695 = vmatmul.mubr.f32.gmra.mxu0 %v694
    %v696 = vpop.f32.mrf.mxu0
    %v697 = vadd.f32 %v606, %v696
    %v698 = vpop.f32.mrf.mxu0
    %699 = vdwg.mxu0
    %700 = vmatprep.subr.mxu0 0.0
    %701 = vmatpush1.msra.mxu0 0.0
    %702 = vmatprep.subr.mxu0 0.0
    %703 = vmatpush1.msra.mxu0 0.0
    %704 = vmatprep.subr.mxu0 0.0
    %705 = vmatpush1.msra.mxu0 0.0
    %706 = vmatprep.subr.mxu0 0.0
    %707 = vmatpush1.msra.mxu0 0.0
    %708 = vmatprep.subr.mxu0 0.0
    %709 = vmatpush1.msra.mxu0 0.0
    %710 = vmatprep.subr.mxu0 0.0
    %711 = vmatpush1.msra.mxu0 0.0
    %712 = vmatprep.subr.mxu0 0.0
    %713 = vmatpush1.msra.mxu0 0.0
    %714 = vmatprep.subr.mxu0 0.0
    %715 = vmatpush1.msra.mxu0 0.0
    %716 = vmatprep.subr.mxu0 0.0
    %717 = vmatpush1.msra.mxu0 0.0
    %718 = vmatprep.subr.mxu0 0.0
    %719 = vmatpush1.msra.mxu0 0.0
    %720 = vmatprep.subr.mxu0 0.0
    %721 = vmatpush1.msra.mxu0 0.0
    %722 = vmatprep.subr.mxu0 0.0
    %723 = vmatpush1.msra.mxu0 0.0
    %724 = vmatprep.subr.mxu0 0.0
    %v725 = vand.u32 %v518, 4294901760
    %v726 = vsub.f32 %v518, %v725
    %727 = vmatpush1.msra.mxu0 %v726
    %728 = vmatprep.subr.mxu0 0.0
    %v729 = vand.u32 %v517, 4294901760
    %v730 = vsub.f32 %v517, %v729
    %731 = vmatpush1.msra.mxu0 %v730
    %732 = vmatprep.subr.mxu0 0.0
    %v733 = vand.u32 %v516, 4294901760
    %v734 = vsub.f32 %v516, %v733
    %735 = vmatpush1.msra.mxu0 %v734
    %736 = vmatprep.subr.mxu0 0.0
    %v737 = vand.u32 %v515, 4294901760
    %v738 = vsub.f32 %v515, %v737
    %739 = vmatpush1.msra.mxu0 %v738
    %740 = vmatprep.subr.mxu0 0.0
    %741 = vmatpush2.msra.mxu0 0.0
    %742 = vmatprep.subr.mxu0 0.0
    %743 = vmatpush2.msra.mxu0 0.0
    %744 = vmatprep.subr.mxu0 0.0
    %745 = vmatpush2.msra.mxu0 0.0
    %746 = vmatprep.subr.mxu0 0.0
    %747 = vmatpush2.msra.mxu0 0.0
    %748 = vmatprep.subr.mxu0 0.0
    %749 = vmatpush2.msra.mxu0 0.0
    %750 = vmatprep.subr.mxu0 0.0
    %751 = vmatpush2.msra.mxu0 0.0
    %752 = vmatprep.subr.mxu0 0.0
    %753 = vmatpush2.msra.mxu0 0.0
    %754 = vmatprep.subr.mxu0 0.0
    %755 = vmatpush2.msra.mxu0 0.0
    %756 = vmatprep.subr.mxu0 0.0
    %757 = vmatpush2.msra.mxu0 0.0
    %758 = vmatprep.subr.mxu0 0.0
    %759 = vmatpush2.msra.mxu0 0.0
    %760 = vmatprep.subr.mxu0 0.0
    %761 = vmatpush2.msra.mxu0 0.0
    %762 = vmatprep.subr.mxu0 0.0
    %763 = vmatpush2.msra.mxu0 0.0
    %764 = vmatprep.subr.mxu0 0.0
    %765 = vmatpush2.msra.mxu0 0.0
    %766 = vmatprep.subr.mxu0 0.0
    %767 = vmatpush2.msra.mxu0 0.0
    %768 = vmatprep.subr.mxu0 0.0
    %769 = vmatpush2.msra.mxu0 0.0
    %770 = vmatprep.subr.mxu0 0.0
    %771 = vmatpush2.msra.mxu0 0.0
    %772 = vmatprep.mubr.f32.mxu0 0.0
    %v773 = vand.u32 %v528, 4294901760
    %v774 = vsub.f32 %v528, %v773
    %775 = vmatmul.mubr.f32.gmra.mxu0 %v774
    %v776 = vpop.f32.mrf.mxu0
    %v777 = vadd.f32 %v697, %v776
    %v778 = vpop.f32.mrf.mxu0
    %779 = vdwg.mxu0
    %780 = vmatprep.subr.mxu0 0.0
    %781 = vmatpush1.msra.mxu0 0.0
    %782 = vmatprep.subr.mxu0 0.0
    %783 = vmatpush1.msra.mxu0 0.0
    %784 = vmatprep.subr.mxu0 0.0
    %785 = vmatpush1.msra.mxu0 0.0
    %786 = vmatprep.subr.mxu0 0.0
    %787 = vmatpush1.msra.mxu0 0.0
    %788 = vmatprep.subr.mxu0 0.0
    %789 = vmatpush1.msra.mxu0 0.0
    %790 = vmatprep.subr.mxu0 0.0
    %791 = vmatpush1.msra.mxu0 0.0
    %792 = vmatprep.subr.mxu0 0.0
    %793 = vmatpush1.msra.mxu0 0.0
    %794 = vmatprep.subr.mxu0 0.0
    %795 = vmatpush1.msra.mxu0 0.0
    %796 = vmatprep.subr.mxu0 0.0
    %797 = vmatpush1.msra.mxu0 0.0
    %798 = vmatprep.subr.mxu0 0.0
    %799 = vmatpush1.msra.mxu0 0.0
    %800 = vmatprep.subr.mxu0 0.0
    %801 = vmatpush1.msra.mxu0 0.0
    %802 = vmatprep.subr.mxu0 0.0
    %803 = vmatpush1.msra.mxu0 0.0
    %804 = vmatprep.subr.mxu0 0.0
    %v805 = vand.u32 %v518, 4294901760
    %806 = vmatpush1.msra.mxu0 %v805
    %807 = vmatprep.subr.mxu0 0.0
    %v808 = vand.u32 %v517, 4294901760
    %809 = vmatpush1.msra.mxu0 %v808
    %810 = vmatprep.subr.mxu0 0.0
    %v811 = vand.u32 %v516, 4294901760
    %812 = vmatpush1.msra.mxu0 %v811
    %813 = vmatprep.subr.mxu0 0.0
    %v814 = vand.u32 %v515, 4294901760
    %815 = vmatpush1.msra.mxu0 %v814
    %816 = vmatprep.subr.mxu0 0.0
    %817 = vmatpush2.msra.mxu0 0.0
    %818 = vmatprep.subr.mxu0 0.0
    %819 = vmatpush2.msra.mxu0 0.0
    %820 = vmatprep.subr.mxu0 0.0
    %821 = vmatpush2.msra.mxu0 0.0
    %822 = vmatprep.subr.mxu0 0.0
    %823 = vmatpush2.msra.mxu0 0.0
    %824 = vmatprep.subr.mxu0 0.0
    %825 = vmatpush2.msra.mxu0 0.0
    %826 = vmatprep.subr.mxu0 0.0
    %827 = vmatpush2.msra.mxu0 0.0
    %828 = vmatprep.subr.mxu0 0.0
    %829 = vmatpush2.msra.mxu0 0.0
    %830 = vmatprep.subr.mxu0 0.0
    %831 = vmatpush2.msra.mxu0 0.0
    %832 = vmatprep.subr.mxu0 0.0
    %833 = vmatpush2.msra.mxu0 0.0
    %834 = vmatprep.subr.mxu0 0.0
    %835 = vmatpush2.msra.mxu0 0.0
    %836 = vmatprep.subr.mxu0 0.0
    %837 = vmatpush2.msra.mxu0 0.0
    %838 = vmatprep.subr.mxu0 0.0
    %839 = vmatpush2.msra.mxu0 0.0
    %840 = vmatprep.subr.mxu0 0.0
    %841 = vmatpush2.msra.mxu0 0.0
    %842 = vmatprep.subr.mxu0 0.0
    %843 = vmatpush2.msra.mxu0 0.0
    %844 = vmatprep.subr.mxu0 0.0
    %845 = vmatpush2.msra.mxu0 0.0
    %846 = vmatprep.subr.mxu0 0.0
    %847 = vmatpush2.msra.mxu0 0.0
    %848 = vmatprep.mubr.f32.mxu0 0.0
    %v849 = vand.u32 %v528, 4294901760
    %v850 = vsub.f32 %v528, %v849
    %v851 = vand.u32 %v850, 4294901760
    %852 = vmatmul.mubr.f32.gmra.mxu0 %v851
    %v853 = vpop.f32.mrf.mxu0
    %v854 = vadd.f32 %v777, %v853
    %v855 = vpop.f32.mrf.mxu0
    %856 = vdwg.mxu0
    %857 = vmatprep.subr.mxu0 0.0
    %858 = vmatpush1.msra.mxu0 0.0
    %859 = vmatprep.subr.mxu0 0.0
    %860 = vmatpush1.msra.mxu0 0.0
    %861 = vmatprep.subr.mxu0 0.0
    %862 = vmatpush1.msra.mxu0 0.0
    %863 = vmatprep.subr.mxu0 0.0
    %864 = vmatpush1.msra.mxu0 0.0
    %865 = vmatprep.subr.mxu0 0.0
    %866 = vmatpush1.msra.mxu0 0.0
    %867 = vmatprep.subr.mxu0 0.0
    %868 = vmatpush1.msra.mxu0 0.0
    %869 = vmatprep.subr.mxu0 0.0
    %870 = vmatpush1.msra.mxu0 0.0
    %871 = vmatprep.subr.mxu0 0.0
    %872 = vmatpush1.msra.mxu0 0.0
    %873 = vmatprep.subr.mxu0 0.0
    %874 = vmatpush1.msra.mxu0 0.0
    %875 = vmatprep.subr.mxu0 0.0
    %876 = vmatpush1.msra.mxu0 0.0
    %877 = vmatprep.subr.mxu0 0.0
    %878 = vmatpush1.msra.mxu0 0.0
    %879 = vmatprep.subr.mxu0 0.0
    %880 = vmatpush1.msra.mxu0 0.0
    %881 = vmatprep.subr.mxu0 0.0
    %v882 = vand.u32 %v518, 4294901760
    %v883 = vsub.f32 %v518, %v882
    %v884 = vand.u32 %v883, 4294901760
    %885 = vmatpush1.msra.mxu0 %v884
    %886 = vmatprep.subr.mxu0 0.0
    %v887 = vand.u32 %v517, 4294901760
    %v888 = vsub.f32 %v517, %v887
    %v889 = vand.u32 %v888, 4294901760
    %890 = vmatpush1.msra.mxu0 %v889
    %891 = vmatprep.subr.mxu0 0.0
    %v892 = vand.u32 %v516, 4294901760
    %v893 = vsub.f32 %v516, %v892
    %v894 = vand.u32 %v893, 4294901760
    %895 = vmatpush1.msra.mxu0 %v894
    %896 = vmatprep.subr.mxu0 0.0
    %v897 = vand.u32 %v515, 4294901760
    %v898 = vsub.f32 %v515, %v897
    %v899 = vand.u32 %v898, 4294901760
    %900 = vmatpush1.msra.mxu0 %v899
    %901 = vmatprep.subr.mxu0 0.0
    %902 = vmatpush2.msra.mxu0 0.0
    %903 = vmatprep.subr.mxu0 0.0
    %904 = vmatpush2.msra.mxu0 0.0
    %905 = vmatprep.subr.mxu0 0.0
    %906 = vmatpush2.msra.mxu0 0.0
    %907 = vmatprep.subr.mxu0 0.0
    %908 = vmatpush2.msra.mxu0 0.0
    %909 = vmatprep.subr.mxu0 0.0
    %910 = vmatpush2.msra.mxu0 0.0
    %911 = vmatprep.subr.mxu0 0.0
    %912 = vmatpush2.msra.mxu0 0.0
    %913 = vmatprep.subr.mxu0 0.0
    %914 = vmatpush2.msra.mxu0 0.0
    %915 = vmatprep.subr.mxu0 0.0
    %916 = vmatpush2.msra.mxu0 0.0
    %917 = vmatprep.subr.mxu0 0.0
    %918 = vmatpush2.msra.mxu0 0.0
    %919 = vmatprep.subr.mxu0 0.0
    %920 = vmatpush2.msra.mxu0 0.0
    %921 = vmatprep.subr.mxu0 0.0
    %922 = vmatpush2.msra.mxu0 0.0
    %923 = vmatprep.subr.mxu0 0.0
    %924 = vmatpush2.msra.mxu0 0.0
    %925 = vmatprep.subr.mxu0 0.0
    %926 = vmatpush2.msra.mxu0 0.0
    %927 = vmatprep.subr.mxu0 0.0
    %928 = vmatpush2.msra.mxu0 0.0
    %929 = vmatprep.subr.mxu0 0.0
    %930 = vmatpush2.msra.mxu0 0.0
    %931 = vmatprep.subr.mxu0 0.0
    %932 = vmatpush2.msra.mxu0 0.0
    %933 = vmatprep.mubr.f32.mxu0 0.0
    %v934 = vand.u32 %v528, 4294901760
    %935 = vmatmul.mubr.f32.gmra.mxu0 %v934
    %v936 = vpop.f32.mrf.mxu0
    %v937 = vadd.f32 %v854, %v936
    %v938 = vpop.f32.mrf.mxu0
    %939 = vdwg.mxu0
    %940 = vmatprep.subr.mxu0 0.0
    %941 = vmatpush1.msra.mxu0 0.0
    %942 = vmatprep.subr.mxu0 0.0
    %943 = vmatpush1.msra.mxu0 0.0
    %944 = vmatprep.subr.mxu0 0.0
    %945 = vmatpush1.msra.mxu0 0.0
    %946 = vmatprep.subr.mxu0 0.0
    %947 = vmatpush1.msra.mxu0 0.0
    %948 = vmatprep.subr.mxu0 0.0
    %949 = vmatpush1.msra.mxu0 0.0
    %950 = vmatprep.subr.mxu0 0.0
    %951 = vmatpush1.msra.mxu0 0.0
    %952 = vmatprep.subr.mxu0 0.0
    %953 = vmatpush1.msra.mxu0 0.0
    %954 = vmatprep.subr.mxu0 0.0
    %955 = vmatpush1.msra.mxu0 0.0
    %956 = vmatprep.subr.mxu0 0.0
    %957 = vmatpush1.msra.mxu0 0.0
    %958 = vmatprep.subr.mxu0 0.0
    %959 = vmatpush1.msra.mxu0 0.0
    %960 = vmatprep.subr.mxu0 0.0
    %961 = vmatpush1.msra.mxu0 0.0
    %962 = vmatprep.subr.mxu0 0.0
    %963 = vmatpush1.msra.mxu0 0.0
    %964 = vmatprep.subr.mxu0 0.0
    %v965 = vand.u32 %v518, 4294901760
    %966 = vmatpush1.msra.mxu0 %v965
    %967 = vmatprep.subr.mxu0 0.0
    %v968 = vand.u32 %v517, 4294901760
    %969 = vmatpush1.msra.mxu0 %v968
    %970 = vmatprep.subr.mxu0 0.0
    %v971 = vand.u32 %v516, 4294901760
    %972 = vmatpush1.msra.mxu0 %v971
    %973 = vmatprep.subr.mxu0 0.0
    %v974 = vand.u32 %v515, 4294901760
    %975 = vmatpush1.msra.mxu0 %v974
    %976 = vmatprep.subr.mxu0 0.0
    %977 = vmatpush2.msra.mxu0 0.0
    %978 = vmatprep.subr.mxu0 0.0
    %979 = vmatpush2.msra.mxu0 0.0
    %980 = vmatprep.subr.mxu0 0.0
    %981 = vmatpush2.msra.mxu0 0.0
    %982 = vmatprep.subr.mxu0 0.0
    %983 = vmatpush2.msra.mxu0 0.0
    %984 = vmatprep.subr.mxu0 0.0
    %985 = vmatpush2.msra.mxu0 0.0
    %986 = vmatprep.subr.mxu0 0.0
    %987 = vmatpush2.msra.mxu0 0.0
    %988 = vmatprep.subr.mxu0 0.0
    %989 = vmatpush2.msra.mxu0 0.0
    %990 = vmatprep.subr.mxu0 0.0
    %991 = vmatpush2.msra.mxu0 0.0
    %992 = vmatprep.subr.mxu0 0.0
    %993 = vmatpush2.msra.mxu0 0.0
    %994 = vmatprep.subr.mxu0 0.0
    %995 = vmatpush2.msra.mxu0 0.0
    %996 = vmatprep.subr.mxu0 0.0
    %997 = vmatpush2.msra.mxu0 0.0
    %998 = vmatprep.subr.mxu0 0.0
    %999 = vmatpush2.msra.mxu0 0.0
    %1000 = vmatprep.subr.mxu0 0.0
    %1001 = vmatpush2.msra.mxu0 0.0
    %1002 = vmatprep.subr.mxu0 0.0
    %1003 = vmatpush2.msra.mxu0 0.0
    %1004 = vmatprep.subr.mxu0 0.0
    %1005 = vmatpush2.msra.mxu0 0.0
    %1006 = vmatprep.subr.mxu0 0.0
    %1007 = vmatpush2.msra.mxu0 0.0
    %1008 = vmatprep.mubr.f32.mxu0 0.0
    %v1009 = vand.u32 %v528, 4294901760
    %1010 = vmatmul.mubr.f32.gmra.mxu0 %v1009
    %v1011 = vpop.f32.mrf.mxu0
    %v1012 = vadd.f32 %v937, %v1011
    %v1013 = vpop.f32.mrf.mxu0
    %1014 = vdwg.mxu0
    %v1015 = vmax.f32 %v1012, 0.0
    %v1016 = vld [vmem:[%s5] sm:$0xff]
    %v1017 = vld [vmem:[%s5 + $0x8] sm:$0xff]
    %v1018 = vld [vmem:[%s5 + $0x10] sm:$0xff]
    %v1019 = vld [vmem:[%s5 + $0x18] sm:$0xff]
    %v1020 = vld [vmem:[%s6] sm:$0x1]
    %v1022 = vlaneseq
    %v1023 = vshrl.u32 %v1022, 7
    %v1024 = vsub.s32 0, %v1023
    %v1025 = vrot.slane %v1020, %v1024
    %v1028 = vsel %vm526, %v1015, 0
    %1030 = vmatprep.subr.mxu0 0.0
    %1031 = vmatpush1.msra.mxu0 0.0
    %1032 = vmatprep.subr.mxu0 0.0
    %1033 = vmatpush1.msra.mxu0 0.0
    %1034 = vmatprep.subr.mxu0 0.0
    %1035 = vmatpush1.msra.mxu0 0.0
    %1036 = vmatprep.subr.mxu0 0.0
    %1037 = vmatpush1.msra.mxu0 0.0
    %1038 = vmatprep.subr.mxu0 0.0
    %1039 = vmatpush1.msra.mxu0 0.0
    %1040 = vmatprep.subr.mxu0 0.0
    %1041 = vmatpush1.msra.mxu0 0.0
    %1042 = vmatprep.subr.mxu0 0.0
    %1043 = vmatpush1.msra.mxu0 0.0
    %1044 = vmatprep.subr.mxu0 0.0
    %1045 = vmatpush1.msra.mxu0 0.0
    %1046 = vmatprep.subr.mxu0 0.0
    %1047 = vmatpush1.msra.mxu0 0.0
    %1048 = vmatprep.subr.mxu0 0.0
    %1049 = vmatpush1.msra.mxu0 0.0
    %1050 = vmatprep.subr.mxu0 0.0
    %1051 = vmatpush1.msra.mxu0 0.0
    %1052 = vmatprep.subr.mxu0 0.0
    %1053 = vmatpush1.msra.mxu0 0.0
    %1054 = vmatprep.subr.mxu0 0.0
    %v1055 = vand.u32 %v1019, 4294901760
    %1056 = vmatpush1.msra.mxu0 %v1055
    %1057 = vmatprep.subr.mxu0 0.0
    %v1058 = vand.u32 %v1018, 4294901760
    %1059 = vmatpush1.msra.mxu0 %v1058
    %1060 = vmatprep.subr.mxu0 0.0
    %v1061 = vand.u32 %v1017, 4294901760
    %1062 = vmatpush1.msra.mxu0 %v1061
    %1063 = vmatprep.subr.mxu0 0.0
    %v1064 = vand.u32 %v1016, 4294901760
    %1065 = vmatpush1.msra.mxu0 %v1064
    %1066 = vmatprep.subr.mxu0 0.0
    %1067 = vmatpush2.msra.mxu0 0.0
    %1068 = vmatprep.subr.mxu0 0.0
    %1069 = vmatpush2.msra.mxu0 0.0
    %1070 = vmatprep.subr.mxu0 0.0
    %1071 = vmatpush2.msra.mxu0 0.0
    %1072 = vmatprep.subr.mxu0 0.0
    %1073 = vmatpush2.msra.mxu0 0.0
    %1074 = vmatprep.subr.mxu0 0.0
    %1075 = vmatpush2.msra.mxu0 0.0
    %1076 = vmatprep.subr.mxu0 0.0
    %1077 = vmatpush2.msra.mxu0 0.0
    %1078 = vmatprep.subr.mxu0 0.0
    %1079 = vmatpush2.msra.mxu0 0.0
    %1080 = vmatprep.subr.mxu0 0.0
    %1081 = vmatpush2.msra.mxu0 0.0
    %1082 = vmatprep.subr.mxu0 0.0
    %1083 = vmatpush2.msra.mxu0 0.0
    %1084 = vmatprep.subr.mxu0 0.0
    %1085 = vmatpush2.msra.mxu0 0.0
    %1086 = vmatprep.subr.mxu0 0.0
    %1087 = vmatpush2.msra.mxu0 0.0
    %1088 = vmatprep.subr.mxu0 0.0
    %1089 = vmatpush2.msra.mxu0 0.0
    %1090 = vmatprep.subr.mxu0 0.0
    %1091 = vmatpush2.msra.mxu0 0.0
    %1092 = vmatprep.subr.mxu0 0.0
    %1093 = vmatpush2.msra.mxu0 0.0
    %1094 = vmatprep.subr.mxu0 0.0
    %1095 = vmatpush2.msra.mxu0 0.0
    %1096 = vmatprep.subr.mxu0 0.0
    %1097 = vmatpush2.msra.mxu0 0.0
    %1098 = vmatprep.mubr.f32.mxu0 0.0
    %v1099 = vand.u32 %v1028, 4294901760
    %v1100 = vsub.f32 %v1028, %v1099
    %v1101 = vand.u32 %v1100, 4294901760
    %v1102 = vsub.f32 %v1100, %v1101
    %v1103 = vand.u32 %v1102, 4294901760
    %1104 = vmatmul.mubr.f32.gmra.mxu0 %v1103
    %v1105 = vpop.f32.mrf.mxu0
    %v1106 = vadd.f32 %v1025, %v1105
    %v1107 = vpop.f32.mrf.mxu0
    %1108 = vdwg.mxu0
    %1109 = vmatprep.subr.mxu0 0.0
    %1110 = vmatpush1.msra.mxu0 0.0
    %1111 = vmatprep.subr.mxu0 0.0
    %1112 = vmatpush1.msra.mxu0 0.0
    %1113 = vmatprep.subr.mxu0 0.0
    %1114 = vmatpush1.msra.mxu0 0.0
    %1115 = vmatprep.subr.mxu0 0.0
    %1116 = vmatpush1.msra.mxu0 0.0
    %1117 = vmatprep.subr.mxu0 0.0
    %1118 = vmatpush1.msra.mxu0 0.0
    %1119 = vmatprep.subr.mxu0 0.0
    %1120 = vmatpush1.msra.mxu0 0.0
    %1121 = vmatprep.subr.mxu0 0.0
    %1122 = vmatpush1.msra.mxu0 0.0
    %1123 = vmatprep.subr.mxu0 0.0
    %1124 = vmatpush1.msra.mxu0 0.0
    %1125 = vmatprep.subr.mxu0 0.0
    %1126 = vmatpush1.msra.mxu0 0.0
    %1127 = vmatprep.subr.mxu0 0.0
    %1128 = vmatpush1.msra.mxu0 0.0
    %1129 = vmatprep.subr.mxu0 0.0
    %1130 = vmatpush1.msra.mxu0 0.0
    %1131 = vmatprep.subr.mxu0 0.0
    %1132 = vmatpush1.msra.mxu0 0.0
    %1133 = vmatprep.subr.mxu0 0.0
    %v1134 = vand.u32 %v1019, 4294901760
    %v1135 = vsub.f32 %v1019, %v1134
    %v1136 = vand.u32 %v1135, 4294901760
    %v1137 = vsub.f32 %v1135, %v1136
    %v1138 = vand.u32 %v1137, 4294901760
    %1139 = vmatpush1.msra.mxu0 %v1138
    %1140 = vmatprep.subr.mxu0 0.0
    %v1141 = vand.u32 %v1018, 4294901760
    %v1142 = vsub.f32 %v1018, %v1141
    %v1143 = vand.u32 %v1142, 4294901760
    %v1144 = vsub.f32 %v1142, %v1143
    %v1145 = vand.u32 %v1144, 4294901760
    %1146 = vmatpush1.msra.mxu0 %v1145
    %1147 = vmatprep.subr.mxu0 0.0
    %v1148 = vand.u32 %v1017, 4294901760
    %v1149 = vsub.f32 %v1017, %v1148
    %v1150 = vand.u32 %v1149, 4294901760
    %v1151 = vsub.f32 %v1149, %v1150
    %v1152 = vand.u32 %v1151, 4294901760
    %1153 = vmatpush1.msra.mxu0 %v1152
    %1154 = vmatprep.subr.mxu0 0.0
    %v1155 = vand.u32 %v1016, 4294901760
    %v1156 = vsub.f32 %v1016, %v1155
    %v1157 = vand.u32 %v1156, 4294901760
    %v1158 = vsub.f32 %v1156, %v1157
    %v1159 = vand.u32 %v1158, 4294901760
    %1160 = vmatpush1.msra.mxu0 %v1159
    %1161 = vmatprep.subr.mxu0 0.0
    %1162 = vmatpush2.msra.mxu0 0.0
    %1163 = vmatprep.subr.mxu0 0.0
    %1164 = vmatpush2.msra.mxu0 0.0
    %1165 = vmatprep.subr.mxu0 0.0
    %1166 = vmatpush2.msra.mxu0 0.0
    %1167 = vmatprep.subr.mxu0 0.0
    %1168 = vmatpush2.msra.mxu0 0.0
    %1169 = vmatprep.subr.mxu0 0.0
    %1170 = vmatpush2.msra.mxu0 0.0
    %1171 = vmatprep.subr.mxu0 0.0
    %1172 = vmatpush2.msra.mxu0 0.0
    %1173 = vmatprep.subr.mxu0 0.0
    %1174 = vmatpush2.msra.mxu0 0.0
    %1175 = vmatprep.subr.mxu0 0.0
    %1176 = vmatpush2.msra.mxu0 0.0
    %1177 = vmatprep.subr.mxu0 0.0
    %1178 = vmatpush2.msra.mxu0 0.0
    %1179 = vmatprep.subr.mxu0 0.0
    %1180 = vmatpush2.msra.mxu0 0.0
    %1181 = vmatprep.subr.mxu0 0.0
    %1182 = vmatpush2.msra.mxu0 0.0
    %1183 = vmatprep.subr.mxu0 0.0
    %1184 = vmatpush2.msra.mxu0 0.0
    %1185 = vmatprep.subr.mxu0 0.0
    %1186 = vmatpush2.msra.mxu0 0.0
    %1187 = vmatprep.subr.mxu0 0.0
    %1188 = vmatpush2.msra.mxu0 0.0
    %1189 = vmatprep.subr.mxu0 0.0
    %1190 = vmatpush2.msra.mxu0 0.0
    %1191 = vmatprep.subr.mxu0 0.0
    %1192 = vmatpush2.msra.mxu0 0.0
    %1193 = vmatprep.mubr.f32.mxu0 0.0
    %v1194 = vand.u32 %v1028, 4294901760
    %1195 = vmatmul.mubr.f32.gmra.mxu0 %v1194
    %v1196 = vpop.f32.mrf.mxu0
    %v1197 = vadd.f32 %v1106, %v1196
    %v1198 = vpop.f32.mrf.mxu0
    %1199 = vdwg.mxu0
    %1200 = vmatprep.subr.mxu0 0.0
    %1201 = vmatpush1.msra.mxu0 0.0
    %1202 = vmatprep.subr.mxu0 0.0
    %1203 = vmatpush1.msra.mxu0 0.0
    %1204 = vmatprep.subr.mxu0 0.0
    %1205 = vmatpush1.msra.mxu0 0.0
    %1206 = vmatprep.subr.mxu0 0.0
    %1207 = vmatpush1.msra.mxu0 0.0
    %1208 = vmatprep.subr.mxu0 0.0
    %1209 = vmatpush1.msra.mxu0 0.0
    %1210 = vmatprep.subr.mxu0 0.0
    %1211 = vmatpush1.msra.mxu0 0.0
    %1212 = vmatprep.subr.mxu0 0.0
    %1213 = vmatpush1.msra.mxu0 0.0
    %1214 = vmatprep.subr.mxu0 0.0
    %1215 = vmatpush1.msra.mxu0 0.0
    %1216 = vmatprep.subr.mxu0 0.0
    %1217 = vmatpush1.msra.mxu0 0.0
    %1218 = vmatprep.subr.mxu0 0.0
    %1219 = vmatpush1.msra.mxu0 0.0
    %1220 = vmatprep.subr.mxu0 0.0
    %1221 = vmatpush1.msra.mxu0 0.0
    %1222 = vmatprep.subr.mxu0 0.0
    %1223 = vmatpush1.msra.mxu0 0.0
    %1224 = vmatprep.subr.mxu0 0.0
    %v1225 = vand.u32 %v1019, 4294901760
    %v1226 = vsub.f32 %v1019, %v1225
    %1227 = vmatpush1.msra.mxu0 %v1226
    %1228 = vmatprep.subr.mxu0 0.0
    %v1229 = vand.u32 %v1018, 4294901760
    %v1230 = vsub.f32 %v1018, %v1229
    %1231 = vmatpush1.msra.mxu0 %v1230
    %1232 = vmatprep.subr.mxu0 0.0
    %v1233 = vand.u32 %v1017, 4294901760
    %v1234 = vsub.f32 %v1017, %v1233
    %1235 = vmatpush1.msra.mxu0 %v1234
    %1236 = vmatprep.subr.mxu0 0.0
    %v1237 = vand.u32 %v1016, 4294901760
    %v1238 = vsub.f32 %v1016, %v1237
    %1239 = vmatpush1.msra.mxu0 %v1238
    %1240 = vmatprep.subr.mxu0 0.0
    %1241 = vmatpush2.msra.mxu0 0.0
    %1242 = vmatprep.subr.mxu0 0.0
    %1243 = vmatpush2.msra.mxu0 0.0
    %1244 = vmatprep.subr.mxu0 0.0
    %1245 = vmatpush2.msra.mxu0 0.0
    %1246 = vmatprep.subr.mxu0 0.0
    %1247 = vmatpush2.msra.mxu0 0.0
    %1248 = vmatprep.subr.mxu0 0.0
    %1249 = vmatpush2.msra.mxu0 0.0
    %1250 = vmatprep.subr.mxu0 0.0
    %1251 = vmatpush2.msra.mxu0 0.0
    %1252 = vmatprep.subr.mxu0 0.0
    %1253 = vmatpush2.msra.mxu0 0.0
    %1254 = vmatprep.subr.mxu0 0.0
    %1255 = vmatpush2.msra.mxu0 0.0
    %1256 = vmatprep.subr.mxu0 0.0
    %1257 = vmatpush2.msra.mxu0 0.0
    %1258 = vmatprep.subr.mxu0 0.0
    %1259 = vmatpush2.msra.mxu0 0.0
    %1260 = vmatprep.subr.mxu0 0.0
    %1261 = vmatpush2.msra.mxu0 0.0
    %1262 = vmatprep.subr.mxu0 0.0
    %1263 = vmatpush2.msra.mxu0 0.0
    %1264 = vmatprep.subr.mxu0 0.0
    %1265 = vmatpush2.msra.mxu0 0.0
    %1266 = vmatprep.subr.mxu0 0.0
    %1267 = vmatpush2.msra.mxu0 0.0
    %1268 = vmatprep.subr.mxu0 0.0
    %1269 = vmatpush2.msra.mxu0 0.0
    %1270 = vmatprep.subr.mxu0 0.0
    %1271 = vmatpush2.msra.mxu0 0.0
    %1272 = vmatprep.mubr.f32.mxu0 0.0
    %v1273 = vand.u32 %v1028, 4294901760
    %v1274 = vsub.f32 %v1028, %v1273
    %1275 = vmatmul.mubr.f32.gmra.mxu0 %v1274
    %v1276 = vpop.f32.mrf.mxu0
    %v1277 = vadd.f32 %v1197, %v1276
    %v1278 = vpop.f32.mrf.mxu0
    %1279 = vdwg.mxu0
    %1280 = vmatprep.subr.mxu0 0.0
    %1281 = vmatpush1.msra.mxu0 0.0
    %1282 = vmatprep.subr.mxu0 0.0
    %1283 = vmatpush1.msra.mxu0 0.0
    %1284 = vmatprep.subr.mxu0 0.0
    %1285 = vmatpush1.msra.mxu0 0.0
    %1286 = vmatprep.subr.mxu0 0.0
    %1287 = vmatpush1.msra.mxu0 0.0
    %1288 = vmatprep.subr.mxu0 0.0
    %1289 = vmatpush1.msra.mxu0 0.0
    %1290 = vmatprep.subr.mxu0 0.0
    %1291 = vmatpush1.msra.mxu0 0.0
    %1292 = vmatprep.subr.mxu0 0.0
    %1293 = vmatpush1.msra.mxu0 0.0
    %1294 = vmatprep.subr.mxu0 0.0
    %1295 = vmatpush1.msra.mxu0 0.0
    %1296 = vmatprep.subr.mxu0 0.0
    %1297 = vmatpush1.msra.mxu0 0.0
    %1298 = vmatprep.subr.mxu0 0.0
    %1299 = vmatpush1.msra.mxu0 0.0
    %1300 = vmatprep.subr.mxu0 0.0
    %1301 = vmatpush1.msra.mxu0 0.0
    %1302 = vmatprep.subr.mxu0 0.0
    %1303 = vmatpush1.msra.mxu0 0.0
    %1304 = vmatprep.subr.mxu0 0.0
    %v1305 = vand.u32 %v1019, 4294901760
    %1306 = vmatpush1.msra.mxu0 %v1305
    %1307 = vmatprep.subr.mxu0 0.0
    %v1308 = vand.u32 %v1018, 4294901760
    %1309 = vmatpush1.msra.mxu0 %v1308
    %1310 = vmatprep.subr.mxu0 0.0
    %v1311 = vand.u32 %v1017, 4294901760
    %1312 = vmatpush1.msra.mxu0 %v1311
    %1313 = vmatprep.subr.mxu0 0.0
    %v1314 = vand.u32 %v1016, 4294901760
    %1315 = vmatpush1.msra.mxu0 %v1314
    %1316 = vmatprep.subr.mxu0 0.0
    %1317 = vmatpush2.msra.mxu0 0.0
    %1318 = vmatprep.subr.mxu0 0.0
    %1319 = vmatpush2.msra.mxu0 0.0
    %1320 = vmatprep.subr.mxu0 0.0
    %1321 = vmatpush2.msra.mxu0 0.0
    %1322 = vmatprep.subr.mxu0 0.0
    %1323 = vmatpush2.msra.mxu0 0.0
    %1324 = vmatprep.subr.mxu0 0.0
    %1325 = vmatpush2.msra.mxu0 0.0
    %1326 = vmatprep.subr.mxu0 0.0
    %1327 = vmatpush2.msra.mxu0 0.0
    %1328 = vmatprep.subr.mxu0 0.0
    %1329 = vmatpush2.msra.mxu0 0.0
    %1330 = vmatprep.subr.mxu0 0.0
    %1331 = vmatpush2.msra.mxu0 0.0
    %1332 = vmatprep.subr.mxu0 0.0
    %1333 = vmatpush2.msra.mxu0 0.0
    %1334 = vmatprep.subr.mxu0 0.0
    %1335 = vmatpush2.msra.mxu0 0.0
    %1336 = vmatprep.subr.mxu0 0.0
    %1337 = vmatpush2.msra.mxu0 0.0
    %1338 = vmatprep.subr.mxu0 0.0
    %1339 = vmatpush2.msra.mxu0 0.0
    %1340 = vmatprep.subr.mxu0 0.0
    %1341 = vmatpush2.msra.mxu0 0.0
    %1342 = vmatprep.subr.mxu0 0.0
    %1343 = vmatpush2.msra.mxu0 0.0
    %1344 = vmatprep.subr.mxu0 0.0
    %1345 = vmatpush2.msra.mxu0 0.0
    %1346 = vmatprep.subr.mxu0 0.0
    %1347 = vmatpush2.msra.mxu0 0.0
    %1348 = vmatprep.mubr.f32.mxu0 0.0
    %v1349 = vand.u32 %v1028, 4294901760
    %v1350 = vsub.f32 %v1028, %v1349
    %v1351 = vand.u32 %v1350, 4294901760
    %1352 = vmatmul.mubr.f32.gmra.mxu0 %v1351
    %v1353 = vpop.f32.mrf.mxu0
    %v1354 = vadd.f32 %v1277, %v1353
    %v1355 = vpop.f32.mrf.mxu0
    %1356 = vdwg.mxu0
    %1357 = vmatprep.subr.mxu0 0.0
    %1358 = vmatpush1.msra.mxu0 0.0
    %1359 = vmatprep.subr.mxu0 0.0
    %1360 = vmatpush1.msra.mxu0 0.0
    %1361 = vmatprep.subr.mxu0 0.0
    %1362 = vmatpush1.msra.mxu0 0.0
    %1363 = vmatprep.subr.mxu0 0.0
    %1364 = vmatpush1.msra.mxu0 0.0
    %1365 = vmatprep.subr.mxu0 0.0
    %1366 = vmatpush1.msra.mxu0 0.0
    %1367 = vmatprep.subr.mxu0 0.0
    %1368 = vmatpush1.msra.mxu0 0.0
    %1369 = vmatprep.subr.mxu0 0.0
    %1370 = vmatpush1.msra.mxu0 0.0
    %1371 = vmatprep.subr.mxu0 0.0
    %1372 = vmatpush1.msra.mxu0 0.0
    %1373 = vmatprep.subr.mxu0 0.0
    %1374 = vmatpush1.msra.mxu0 0.0
    %1375 = vmatprep.subr.mxu0 0.0
    %1376 = vmatpush1.msra.mxu0 0.0
    %1377 = vmatprep.subr.mxu0 0.0
    %1378 = vmatpush1.msra.mxu0 0.0
    %1379 = vmatprep.subr.mxu0 0.0
    %1380 = vmatpush1.msra.mxu0 0.0
    %1381 = vmatprep.subr.mxu0 0.0
    %v1382 = vand.u32 %v1019, 4294901760
    %v1383 = vsub.f32 %v1019, %v1382
    %v1384 = vand.u32 %v1383, 4294901760
    %1385 = vmatpush1.msra.mxu0 %v1384
    %1386 = vmatprep.subr.mxu0 0.0
    %v1387 = vand.u32 %v1018, 4294901760
    %v1388 = vsub.f32 %v1018, %v1387
    %v1389 = vand.u32 %v1388, 4294901760
    %1390 = vmatpush1.msra.mxu0 %v1389
    %1391 = vmatprep.subr.mxu0 0.0
    %v1392 = vand.u32 %v1017, 4294901760
    %v1393 = vsub.f32 %v1017, %v1392
    %v1394 = vand.u32 %v1393, 4294901760
    %1395 = vmatpush1.msra.mxu0 %v1394
    %1396 = vmatprep.subr.mxu0 0.0
    %v1397 = vand.u32 %v1016, 4294901760
    %v1398 = vsub.f32 %v1016, %v1397
    %v1399 = vand.u32 %v1398, 4294901760
    %1400 = vmatpush1.msra.mxu0 %v1399
    %1401 = vmatprep.subr.mxu0 0.0
    %1402 = vmatpush2.msra.mxu0 0.0
    %1403 = vmatprep.subr.mxu0 0.0
    %1404 = vmatpush2.msra.mxu0 0.0
    %1405 = vmatprep.subr.mxu0 0.0
    %1406 = vmatpush2.msra.mxu0 0.0
    %1407 = vmatprep.subr.mxu0 0.0
    %1408 = vmatpush2.msra.mxu0 0.0
    %1409 = vmatprep.subr.mxu0 0.0
    %1410 = vmatpush2.msra.mxu0 0.0
    %1411 = vmatprep.subr.mxu0 0.0
    %1412 = vmatpush2.msra.mxu0 0.0
    %1413 = vmatprep.subr.mxu0 0.0
    %1414 = vmatpush2.msra.mxu0 0.0
    %1415 = vmatprep.subr.mxu0 0.0
    %1416 = vmatpush2.msra.mxu0 0.0
    %1417 = vmatprep.subr.mxu0 0.0
    %1418 = vmatpush2.msra.mxu0 0.0
    %1419 = vmatprep.subr.mxu0 0.0
    %1420 = vmatpush2.msra.mxu0 0.0
    %1421 = vmatprep.subr.mxu0 0.0
    %1422 = vmatpush2.msra.mxu0 0.0
    %1423 = vmatprep.subr.mxu0 0.0
    %1424 = vmatpush2.msra.mxu0 0.0
    %1425 = vmatprep.subr.mxu0 0.0
    %1426 = vmatpush2.msra.mxu0 0.0
    %1427 = vmatprep.subr.mxu0 0.0
    %1428 = vmatpush2.msra.mxu0 0.0
    %1429 = vmatprep.subr.mxu0 0.0
    %1430 = vmatpush2.msra.mxu0 0.0
    %1431 = vmatprep.subr.mxu0 0.0
    %1432 = vmatpush2.msra.mxu0 0.0
    %1433 = vmatprep.mubr.f32.mxu0 0.0
    %v1434 = vand.u32 %v1028, 4294901760
    %1435 = vmatmul.mubr.f32.gmra.mxu0 %v1434
    %v1436 = vpop.f32.mrf.mxu0
    %v1437 = vadd.f32 %v1354, %v1436
    %v1438 = vpop.f32.mrf.mxu0
    %1439 = vdwg.mxu0
    %1440 = vmatprep.subr.mxu0 0.0
    %1441 = vmatpush1.msra.mxu0 0.0
    %1442 = vmatprep.subr.mxu0 0.0
    %1443 = vmatpush1.msra.mxu0 0.0
    %1444 = vmatprep.subr.mxu0 0.0
    %1445 = vmatpush1.msra.mxu0 0.0
    %1446 = vmatprep.subr.mxu0 0.0
    %1447 = vmatpush1.msra.mxu0 0.0
    %1448 = vmatprep.subr.mxu0 0.0
    %1449 = vmatpush1.msra.mxu0 0.0
    %1450 = vmatprep.subr.mxu0 0.0
    %1451 = vmatpush1.msra.mxu0 0.0
    %1452 = vmatprep.subr.mxu0 0.0
    %1453 = vmatpush1.msra.mxu0 0.0
    %1454 = vmatprep.subr.mxu0 0.0
    %1455 = vmatpush1.msra.mxu0 0.0
    %1456 = vmatprep.subr.mxu0 0.0
    %1457 = vmatpush1.msra.mxu0 0.0
    %1458 = vmatprep.subr.mxu0 0.0
    %1459 = vmatpush1.msra.mxu0 0.0
    %1460 = vmatprep.subr.mxu0 0.0
    %1461 = vmatpush1.msra.mxu0 0.0
    %1462 = vmatprep.subr.mxu0 0.0
    %1463 = vmatpush1.msra.mxu0 0.0
    %1464 = vmatprep.subr.mxu0 0.0
    %v1465 = vand.u32 %v1019, 4294901760
    %1466 = vmatpush1.msra.mxu0 %v1465
    %1467 = vmatprep.subr.mxu0 0.0
    %v1468 = vand.u32 %v1018, 4294901760
    %1469 = vmatpush1.msra.mxu0 %v1468
    %1470 = vmatprep.subr.mxu0 0.0
    %v1471 = vand.u32 %v1017, 4294901760
    %1472 = vmatpush1.msra.mxu0 %v1471
    %1473 = vmatprep.subr.mxu0 0.0
    %v1474 = vand.u32 %v1016, 4294901760
    %1475 = vmatpush1.msra.mxu0 %v1474
    %1476 = vmatprep.subr.mxu0 0.0
    %1477 = vmatpush2.msra.mxu0 0.0
    %1478 = vmatprep.subr.mxu0 0.0
    %1479 = vmatpush2.msra.mxu0 0.0
    %1480 = vmatprep.subr.mxu0 0.0
    %1481 = vmatpush2.msra.mxu0 0.0
    %1482 = vmatprep.subr.mxu0 0.0
    %1483 = vmatpush2.msra.mxu0 0.0
    %1484 = vmatprep.subr.mxu0 0.0
    %1485 = vmatpush2.msra.mxu0 0.0
    %1486 = vmatprep.subr.mxu0 0.0
    %1487 = vmatpush2.msra.mxu0 0.0
    %1488 = vmatprep.subr.mxu0 0.0
    %1489 = vmatpush2.msra.mxu0 0.0
    %1490 = vmatprep.subr.mxu0 0.0
    %1491 = vmatpush2.msra.mxu0 0.0
    %1492 = vmatprep.subr.mxu0 0.0
    %1493 = vmatpush2.msra.mxu0 0.0
    %1494 = vmatprep.subr.mxu0 0.0
    %1495 = vmatpush2.msra.mxu0 0.0
    %1496 = vmatprep.subr.mxu0 0.0
    %1497 = vmatpush2.msra.mxu0 0.0
    %1498 = vmatprep.subr.mxu0 0.0
    %1499 = vmatpush2.msra.mxu0 0.0
    %1500 = vmatprep.subr.mxu0 0.0
    %1501 = vmatpush2.msra.mxu0 0.0
    %1502 = vmatprep.subr.mxu0 0.0
    %1503 = vmatpush2.msra.mxu0 0.0
    %1504 = vmatprep.subr.mxu0 0.0
    %1505 = vmatpush2.msra.mxu0 0.0
    %1506 = vmatprep.subr.mxu0 0.0
    %1507 = vmatpush2.msra.mxu0 0.0
    %1508 = vmatprep.mubr.f32.mxu0 0.0
    %v1509 = vand.u32 %v1028, 4294901760
    %1510 = vmatmul.mubr.f32.gmra.mxu0 %v1509
    %v1511 = vpop.f32.mrf.mxu0
    %v1512 = vadd.f32 %v1437, %v1511
    %v1513 = vpop.f32.mrf.mxu0
    %1514 = vdwg.mxu0
    %vm1515 = vcmask 58368
    %1516 = vst.msk [vmem:[#allocation5] sm:$0x3] %vm1515, %v1512
    // Predicated region
    $region34: #{tpu_custom_call.1} parent=1 // pred_check
      _
    $region35: #{tpu_custom_call.1} parent=1 // pred_check_branch
      %1518 = sbr.rel (0) target = $region37
    $region36: #{tpu_custom_call.1} parent=1 // pred_region
      %s1520 = ssub.s32 32, 32
      %1521 = vsyncadd [#allocation4], %s1520
      %s1523 = sshll.u32 [#allocation5], 4
      %s1524 = int_to_ptr.vmem [resolvable:$true] %s1523
      %1526 = dma.vmem_to_hbm [thread:$0]  %s1524, 32, %s7, [#allocation4]
    $region37: #{tpu_custom_call.1} parent=1 // pred_fallthru
      _
    // Predicated region
    $region38: #{tpu_custom_call.1} parent=1 // pred_check
      _
    $region39: #{tpu_custom_call.1} parent=1 // pred_check_branch
      %1528 = sbr.rel (0) target = $region41
    $region40: #{tpu_custom_call.1} parent=1 // pred_region
      %1529 = dma.done [#allocation4], 32
    $region41: #{tpu_custom_call.1} parent=1 // pred_fallthru
      _
    %1530 = vsyncpa [#allocation3], 1
    %1531 = vsyncpa [#allocation4], 1

</llo_original>
